<compile_context>
chip_gen: v5e
topology: v5e:2x2
jax: 0.10.0
libtpu: 0.0.40
codegen_flags: <defaults>
</compile_context>

<pallas_src>
import numpy as np
import jax
import jax.numpy as jnp
from jax.experimental import pallas as pl
from jax.experimental.pallas import tpu as pltpu

N_QUBITS = 4
N_QUBITS_AMP = 2
N_LAYERS = 10
INPUT_DIM = 2048
OUTPUT_DIM = 4          # == n_qubits
_MIN_TILE = 16          # bf16 sublane packing -> batch tiles multiples of 16


# ---------------------------------------------------------------------------
# Quantum-circuit folding (numpy, parameter-only; independent of the input).
# ---------------------------------------------------------------------------
def _rx(t):
    c, s = np.cos(t / 2), np.sin(t / 2)
    return np.array([[c, -1j * s], [-1j * s, c]], dtype=np.complex128)


def _ry(t):
    c, s = np.cos(t / 2), np.sin(t / 2)
    return np.array([[c, -s], [s, c]], dtype=np.complex128)


def _rz(t):
    return np.array([[np.exp(-1j * t / 2), 0], [0, np.exp(1j * t / 2)]],
                    dtype=np.complex128)


def _rot(phi, theta, omega):
    # qml.Rot(phi, theta, omega) = RZ(omega) RY(theta) RZ(phi)
    return _rz(omega) @ _ry(theta) @ _rz(phi)


def _kron_all(mats):
    out = np.array([[1.0 + 0j]])
    for m in mats:            # wire 0 ends up most-significant (PennyLane order)
        out = np.kron(out, m)
    return out


def _cnot_full(control, target, n):
    dim = 2 ** n
    U = np.zeros((dim, dim), dtype=np.complex128)
    for s in range(dim):
        if (s >> (n - 1 - control)) & 1:
            t = s ^ (1 << (n - 1 - target))
        else:
            t = s
        U[t, s] = 1.0
    return U


def basic_entangler_unitary(weights):  # weights: (L, 4)
    n = N_QUBITS
    U = np.eye(2 ** n, dtype=np.complex128)
    for l in range(weights.shape[0]):
        U = _kron_all([_rx(weights[l, i]) for i in range(n)]) @ U
        for i in range(n):                      # ring of CNOTs
            U = _cnot_full(i, (i + 1) % n, n) @ U
    return U


def strongly_entangling_unitary(weights):  # weights: (L, 2, 3)
    n = N_QUBITS_AMP
    U = np.eye(2 ** n, dtype=np.complex128)
    ranges = [(l % (n - 1)) + 1 for l in range(weights.shape[0])]  # all 1
    for l in range(weights.shape[0]):
        U = _kron_all([_rot(*weights[l, i]) for i in range(n)]) @ U
        for i in range(n):
            U = _cnot_full(i, (i + ranges[l]) % n, n) @ U
    return U


def build_structural_constants(U, V):
    """Fold circuit unitaries + embedding phases + <Z> readout into real matrices."""
    # RX product-state bit masks (wire 0 = MSB) and global phase (-i)^popcount.
    mask0 = np.zeros((4, 16), np.float32)
    mask1 = np.zeros((4, 16), np.float32)
    phr = np.zeros(16)
    phi = np.zeros(16)
    for idx in range(16):
        k = bin(idx).count("1") % 4
        phr[idx] = [1.0, 0.0, -1.0, 0.0][k]   # Re[(-i)^k]
        phi[idx] = [0.0, -1.0, 0.0, 1.0][k]   # Im[(-i)^k]
        for w in range(4):
            if (idx >> (3 - w)) & 1:
                mask1[w, idx] = 1.0
            else:
                mask0[w, idx] = 1.0
    # Complex matmul against U^T folded into ONE real (16,32) matmul:
    #   amp_r = m*phr, amp_i = m*phi,  psi' = psi @ U^T
    #   [pr | pi] = m @ [diag(phr)UrT - diag(phi)UiT | diag(phr)UiT + diag(phi)UrT]
    UrT, UiT = U.T.real, U.T.imag
    uq = np.concatenate([np.diag(phr) @ UrT - np.diag(phi) @ UiT,
                         np.diag(phr) @ UiT + np.diag(phi) @ UrT], axis=1)
    # Amplitude-embedded state is real:  [qr | qi] = a @ [VrT | ViT]   -> (4, 8)
    ua = np.concatenate([V.T.real, V.T.imag], axis=1)
    # <Z_w> readout tables
    zs4 = np.zeros((16, 4), np.float32)
    for idx in range(16):
        for w in range(4):
            zs4[idx, w] = 1.0 - 2.0 * ((idx >> (3 - w)) & 1)
    zs2 = np.zeros((4, 2), np.float32)
    for idx in range(4):
        for w in range(2):
            zs2[idx, w] = 1.0 - 2.0 * ((idx >> (1 - w)) & 1)
    f = lambda a: jnp.asarray(a, jnp.float32)
    return f(mask0), f(mask1), f(uq), f(zs4), f(ua), f(zs2)


# ---------------------------------------------------------------------------
# Pallas kernel: entire forward pass for one batch tile.
# ---------------------------------------------------------------------------
def hybrid_kernel(x_ref, w1_ref, b1_ref, w2_ref, b2_ref, w3_ref, b3_ref,
                  mask0_ref, mask1_ref, uq_ref, zs4_ref, ua_ref, zs2_ref,
                  w4_ref, b4_ref, w5_ref, b5_ref, out_ref):
    f32 = jnp.float32

    # ---- pre_net: 2048 -> 512 -> 32 -> 4, ReLU after each (Dropout p=0 == identity).
    # x / w1 / w2 are bf16 so the big matmuls take the MXU's native path; all
    # accumulation is f32 and everything from the rotation angles onward is f32.
    x = x_ref[...]                                                     # (B,2048) bf16
    h = jnp.dot(x, w1_ref[...], preferred_element_type=f32) + b1_ref[...]
    h = jnp.maximum(h, 0.0)
    h = jnp.dot(h.astype(jnp.bfloat16), w2_ref[...],
                preferred_element_type=f32) + b2_ref[...]
    h = jnp.maximum(h, 0.0)
    q = jnp.dot(h, w3_ref[...], preferred_element_type=f32) + b3_ref[...]
    q = jnp.maximum(q, 0.0)                                            # (B,4) angles

    # ---- qlayer: AngleEmbedding(RX) product state, then the folded
    # BasicEntanglerLayers unitary as ONE real (16,32) matmul -> [Re | Im].
    c = jnp.cos(0.5 * q)
    s = jnp.sin(0.5 * q)
    m = c[:, 0:1] * mask0_ref[0:1, :] + s[:, 0:1] * mask1_ref[0:1, :]  # (B,16)
    for w in range(1, N_QUBITS):
        m = m * (c[:, w:w + 1] * mask0_ref[w:w + 1, :]
                 + s[:, w:w + 1] * mask1_ref[w:w + 1, :])
    p = jnp.dot(m, uq_ref[...], preferred_element_type=f32)           # (B,32)
    probs = p[:, :16] * p[:, :16] + p[:, 16:] * p[:, 16:]             # |amp|^2, (B,16)
    e4 = jnp.dot(probs, zs4_ref[...], preferred_element_type=f32)     # (B,4) <Z_i>

    # ---- q_layer_ampl: AmplitudeEmbedding(normalize=True) + folded
    # StronglyEntanglingLayers unitary as ONE real (4,8) matmul.
    nrm = jnp.sqrt(jnp.sum(e4 * e4, axis=-1, keepdims=True))
    # TODO(synk): PennyLane raises on a zero-norm amplitude vector; eps-guard instead.
    a = e4 / jnp.maximum(nrm, 1e-12)                                   # (B,4)
    qq = jnp.dot(a, ua_ref[...], preferred_element_type=f32)          # (B,8)
    probs2 = qq[:, :4] * qq[:, :4] + qq[:, 4:] * qq[:, 4:]            # (B,4)
    e2 = jnp.dot(probs2, zs2_ref[...], preferred_element_type=f32)    # (B,2) <Z_i>

    # ---- post_net: Linear(2,16)+ReLU -> Linear(16,1)+Sigmoid -> outer sigmoid
    h2 = jnp.dot(e2, w4_ref[...], preferred_element_type=f32) + b4_ref[...]
    h2 = jnp.maximum(h2, 0.0)                                          # (B,16)
    z = jnp.sum(h2 * w5_ref[...], axis=-1, keepdims=True) + b5_ref[...]  # (B,1)
    y = 1.0 / (1.0 + jnp.exp(-z))
    out_ref[...] = 1.0 / (1.0 + jnp.exp(-y))      # torch.sigmoid(post_net(..))


# ---------------------------------------------------------------------------
# Wrapper: tile the batch; every parameter is a whole-array, single-buffered
# VMEM block (constant index map -> DMA'd once).
# ---------------------------------------------------------------------------
def _round_up(n, m):
    return ((n + m - 1) // m) * m


def _vmem_limit_bytes(block_b):
    # bf16 x tile (double-buffered) + single-buffered resident params + f32
    # activations + compiler headroom.  Stays far below v7x's 64 MiB VMEM.
    x_tile = 2 * block_b * INPUT_DIM * 2
    weights = INPUT_DIM * 512 * 2 + 512 * 32 * 2 + (1 << 20)
    acts = 4 * block_b * 512 * 4
    return min(x_tile + weights + acts + (8 << 20), 48 << 20)


def hybrid_forward(x, params, *, block_b=256):
    B = x.shape[0]
    block_b = _round_up(block_b, _MIN_TILE)
    # Effective tile: large enough to feed the MXU (default 256), multiple of 16
    # sublanes (bf16 packing), never wider than the padded batch; small batches
    # are split into two tiles so both v7x TensorCores get work.
    bb = min(block_b, _round_up(B, _MIN_TILE))
    if bb >= B and B >= 2 * _MIN_TILE:
        bb = _round_up(pl.cdiv(B, 2), _MIN_TILE)
    n_tiles = pl.cdiv(B, bb)
    b_pad = n_tiles * bb

    x = x.astype(jnp.bfloat16)
    if b_pad != B:
        x = jnp.pad(x, ((0, b_pad - B), (0, 0)))

    def const_spec(arr):
        nd = arr.ndim
        # Constant index map -> fetched once; single-buffered (no point paying
        # 2x VMEM for a block that never changes across grid steps).
        return pl.BlockSpec(arr.shape, lambda i, nd=nd: (0,) * nd,
                            pipeline_mode=pl.Buffered(1))

    in_specs = [pl.BlockSpec((bb, INPUT_DIM), lambda i: (i, 0))]
    in_specs += [const_spec(p) for p in params]

    out = pl.pallas_call(
        hybrid_kernel,
        out_shape=jax.ShapeDtypeStruct((b_pad, 1), jnp.float32),
        grid=(n_tiles,),
        in_specs=in_specs,
        out_specs=pl.BlockSpec((bb, 1), lambda i: (i, 0)),
        compiler_params=pltpu.CompilerParams(
            dimension_semantics=("parallel",),
            vmem_limit_bytes=_vmem_limit_bytes(bb)),
    )(x, *params)
    return out[:B]


# ---------------------------------------------------------------------------
# Deterministic parameter construction (Xavier-normal weights, as in the module).
# ---------------------------------------------------------------------------
def init_params(key):
    keys = jax.random.split(key, 12)

    def xavier(k, fan_in, fan_out, dtype=jnp.float32):
        std = float(np.sqrt(2.0 / (fan_in + fan_out)))
        return (std * jax.random.normal(k, (fan_in, fan_out))).astype(dtype)

    def bias(k, fan_in, fan_out):
        bound = 1.0 / float(np.sqrt(fan_in))
        return jax.random.uniform(k, (1, fan_out), minval=-bound,
                                  maxval=bound).astype(jnp.float32)

    # Big pre_net layers stored in bf16 (MXU-native); angles / post_net stay f32.
    w1 = xavier(keys[0], INPUT_DIM, 512, jnp.bfloat16); b1 = bias(keys[1], INPUT_DIM, 512)
    w2 = xavier(keys[2], 512, 32, jnp.bfloat16);        b2 = bias(keys[3], 512, 32)
    w3 = xavier(keys[4], 32, OUTPUT_DIM);               b3 = bias(keys[5], 32, OUTPUT_DIM)
    w4 = xavier(keys[6], 2, 16);                        b4 = bias(keys[7], 2, 16)
    w5 = xavier(keys[8], 16, 1).reshape(1, 16)          # stored as a row
    b5 = bias(keys[9], 16, 1)

    # Quantum circuit weights (TorchLayer default init: U(0, 2*pi)), folded into
    # fixed unitaries (they only depend on the trainable circuit weights).
    wq = np.asarray(jax.random.uniform(keys[10], (N_LAYERS, N_QUBITS),
                                       minval=0.0, maxval=2 * np.pi), dtype=np.float64)
    wa = np.asarray(jax.random.uniform(keys[11], (N_LAYERS, N_QUBITS_AMP, 3),
                                       minval=0.0, maxval=2 * np.pi), dtype=np.float64)
    U = basic_entangler_unitary(wq)        # 16 x 16 complex
    V = strongly_entangling_unitary(wa)    # 4  x 4  complex
    mask0, mask1, uq, zs4, ua, zs2 = build_structural_constants(U, V)

    return (w1, b1, w2, b2, w3, b3,
            mask0, mask1, uq, zs4, ua, zs2,
            w4, b4, w5, b5)


if __name__ == "__main__":
    key = jax.random.PRNGKey(0)
    pkey, xkey = jax.random.split(key)
    params = init_params(pkey)

    B = 32
    x = jax.random.normal(xkey, (B, INPUT_DIM), dtype=jnp.float32)

    out = hybrid_forward(x, params)          # default block_b=256 -> 2 tiles of 16
    out = jax.block_until_ready(out)

    assert out.shape == (B, 1)
    assert bool(jnp.all(jnp.isfinite(out)))
    assert bool(jnp.all((out > 0.0) & (out < 1.0)))  # sigmoid(sigmoid(.)) range
    print("KERNEL_OK")
</pallas_src>

<mosaic_0001>
module attributes {stable_mosaic.version = 11 : i64} {
  func.func @hybrid_kernel(%arg0: i32, %arg1: memref<16x2048xbf16, #tpu.memory_space<vmem>>, %arg2: memref<2048x512xbf16, #tpu.memory_space<vmem>>, %arg3: memref<1x512xf32, #tpu.memory_space<vmem>>, %arg4: memref<512x32xbf16, #tpu.memory_space<vmem>>, %arg5: memref<1x32xf32, #tpu.memory_space<vmem>>, %arg6: memref<32x4xf32, #tpu.memory_space<vmem>>, %arg7: memref<1x4xf32, #tpu.memory_space<vmem>>, %arg8: memref<4x16xf32, #tpu.memory_space<vmem>>, %arg9: memref<4x16xf32, #tpu.memory_space<vmem>>, %arg10: memref<16x32xf32, #tpu.memory_space<vmem>>, %arg11: memref<16x4xf32, #tpu.memory_space<vmem>>, %arg12: memref<4x8xf32, #tpu.memory_space<vmem>>, %arg13: memref<4x2xf32, #tpu.memory_space<vmem>>, %arg14: memref<2x16xf32, #tpu.memory_space<vmem>>, %arg15: memref<1x16xf32, #tpu.memory_space<vmem>>, %arg16: memref<1x16xf32, #tpu.memory_space<vmem>>, %arg17: memref<1x1xf32, #tpu.memory_space<vmem>>, %arg18: memref<16x1xf32, #tpu.memory_space<vmem>>) attributes {dimension_semantics = [#tpu.dimension_semantics<parallel>], iteration_bounds = array<i64: 2>, scalar_prefetch = 0 : i64, scratch_operands = 0 : i64, tpu.core_type = #tpu.core_type<tc>, window_params = [{transform_indices = @transform_0, window_bounds = array<i64: 16, 2048>}, {pipeline_mode = #tpu.pipeline_mode<synchronous>, transform_indices = @transform_1, window_bounds = array<i64: 2048, 512>}, {pipeline_mode = #tpu.pipeline_mode<synchronous>, transform_indices = @transform_2, window_bounds = array<i64: 1, 512>}, {pipeline_mode = #tpu.pipeline_mode<synchronous>, transform_indices = @transform_3, window_bounds = array<i64: 512, 32>}, {pipeline_mode = #tpu.pipeline_mode<synchronous>, transform_indices = @transform_4, window_bounds = array<i64: 1, 32>}, {pipeline_mode = #tpu.pipeline_mode<synchronous>, transform_indices = @transform_5, window_bounds = array<i64: 32, 4>}, {pipeline_mode = #tpu.pipeline_mode<synchronous>, transform_indices = @transform_6, window_bounds = array<i64: 1, 4>}, {pipeline_mode = #tpu.pipeline_mode<synchronous>, transform_indices = @transform_7, window_bounds = array<i64: 4, 16>}, {pipeline_mode = #tpu.pipeline_mode<synchronous>, transform_indices = @transform_8, window_bounds = array<i64: 4, 16>}, {pipeline_mode = #tpu.pipeline_mode<synchronous>, transform_indices = @transform_9, window_bounds = array<i64: 16, 32>}, {pipeline_mode = #tpu.pipeline_mode<synchronous>, transform_indices = @transform_10, window_bounds = array<i64: 16, 4>}, {pipeline_mode = #tpu.pipeline_mode<synchronous>, transform_indices = @transform_11, window_bounds = array<i64: 4, 8>}, {pipeline_mode = #tpu.pipeline_mode<synchronous>, transform_indices = @transform_12, window_bounds = array<i64: 4, 2>}, {pipeline_mode = #tpu.pipeline_mode<synchronous>, transform_indices = @transform_13, window_bounds = array<i64: 2, 16>}, {pipeline_mode = #tpu.pipeline_mode<synchronous>, transform_indices = @transform_14, window_bounds = array<i64: 1, 16>}, {pipeline_mode = #tpu.pipeline_mode<synchronous>, transform_indices = @transform_15, window_bounds = array<i64: 1, 16>}, {pipeline_mode = #tpu.pipeline_mode<synchronous>, transform_indices = @transform_16, window_bounds = array<i64: 1, 1>}, {transform_indices = @transform_17, window_bounds = array<i64: 16, 1>}]} {
    %c0 = arith.constant 0 : index
    %c0_0 = arith.constant 0 : index
    %0 = vector.load %arg1[%c0, %c0_0] : memref<16x2048xbf16, #tpu.memory_space<vmem>>, vector<16x2048xbf16>
    %c0_1 = arith.constant 0 : index
    %c0_2 = arith.constant 0 : index
    %1 = vector.load %arg2[%c0_1, %c0_2] : memref<2048x512xbf16, #tpu.memory_space<vmem>>, vector<2048x512xbf16>
    %cst = arith.constant dense<0.000000e+00> : vector<16x512xf32>
    %2 = tpu.matmul %0, %1, %cst {dimension_numbers = #tpu.dot_dimension_numbers<[1], [0], [0], [1], [0, 0, 1, 1], [], []>} : vector<16x2048xbf16>, vector<2048x512xbf16>, vector<16x512xf32> -> vector<16x512xf32>
    %c0_3 = arith.constant 0 : index
    %c0_4 = arith.constant 0 : index
    %3 = vector.load %arg3[%c0_3, %c0_4] : memref<1x512xf32, #tpu.memory_space<vmem>>, vector<1x512xf32>
    %4 = vector.broadcast %3 : vector<1x512xf32> to vector<16x512xf32>
    %5 = arith.addf %2, %4 : vector<16x512xf32>
    %cst_5 = arith.constant 0.000000e+00 : f32
    %6 = vector.broadcast %cst_5 : f32 to vector<16x512xf32>
    %7 = arith.maximumf %5, %6 : vector<16x512xf32>
    %8 = arith.truncf %7 : vector<16x512xf32> to vector<16x512xbf16>
    %c0_6 = arith.constant 0 : index
    %c0_7 = arith.constant 0 : index
    %9 = vector.load %arg4[%c0_6, %c0_7] : memref<512x32xbf16, #tpu.memory_space<vmem>>, vector<512x32xbf16>
    %cst_8 = arith.constant dense<0.000000e+00> : vector<16x32xf32>
    %10 = tpu.matmul %8, %9, %cst_8 {dimension_numbers = #tpu.dot_dimension_numbers<[1], [0], [0], [1], [0, 0, 1, 1], [], []>} : vector<16x512xbf16>, vector<512x32xbf16>, vector<16x32xf32> -> vector<16x32xf32>
    %c0_9 = arith.constant 0 : index
    %c0_10 = arith.constant 0 : index
    %11 = vector.load %arg5[%c0_9, %c0_10] : memref<1x32xf32, #tpu.memory_space<vmem>>, vector<1x32xf32>
    %12 = vector.broadcast %11 : vector<1x32xf32> to vector<16x32xf32>
    %13 = arith.addf %10, %12 : vector<16x32xf32>
    %cst_11 = arith.constant 0.000000e+00 : f32
    %14 = vector.broadcast %cst_11 : f32 to vector<16x32xf32>
    %15 = arith.maximumf %13, %14 : vector<16x32xf32>
    %c0_12 = arith.constant 0 : index
    %c0_13 = arith.constant 0 : index
    %16 = vector.load %arg6[%c0_12, %c0_13] : memref<32x4xf32, #tpu.memory_space<vmem>>, vector<32x4xf32>
    %cst_14 = arith.constant dense<0.000000e+00> : vector<16x4xf32>
    %17 = tpu.matmul %15, %16, %cst_14 {dimension_numbers = #tpu.dot_dimension_numbers<[1], [0], [0], [1], [0, 0, 1, 1], [], []>} : vector<16x32xf32>, vector<32x4xf32>, vector<16x4xf32> -> vector<16x4xf32>
    %c0_15 = arith.constant 0 : index
    %c0_16 = arith.constant 0 : index
    %18 = vector.load %arg7[%c0_15, %c0_16] : memref<1x4xf32, #tpu.memory_space<vmem>>, vector<1x4xf32>
    %19 = vector.broadcast %18 : vector<1x4xf32> to vector<16x4xf32>
    %20 = arith.addf %17, %19 : vector<16x4xf32>
    %cst_17 = arith.constant 0.000000e+00 : f32
    %21 = vector.broadcast %cst_17 : f32 to vector<16x4xf32>
    %22 = arith.maximumf %20, %21 : vector<16x4xf32>
    %cst_18 = arith.constant 5.000000e-01 : f32
    %23 = vector.broadcast %cst_18 : f32 to vector<16x4xf32>
    %24 = arith.mulf %23, %22 : vector<16x4xf32>
    %25 = math.cos %24 : vector<16x4xf32>
    %cst_19 = arith.constant 5.000000e-01 : f32
    %26 = vector.broadcast %cst_19 : f32 to vector<16x4xf32>
    %27 = arith.mulf %26, %22 : vector<16x4xf32>
    %28 = math.sin %27 : vector<16x4xf32>
    %29 = vector.extract_strided_slice %25 {offsets = [0, 0], sizes = [16, 1], strides = [1, 1]} : vector<16x4xf32> to vector<16x1xf32>
    %c0_20 = arith.constant 0 : index
    %c0_21 = arith.constant 0 : index
    %30 = vector.load %arg8[%c0_20, %c0_21] : memref<4x16xf32, #tpu.memory_space<vmem>>, vector<1x16xf32>
    %31 = vector.broadcast %29 : vector<16x1xf32> to vector<16x16xf32>
    %32 = vector.broadcast %30 : vector<1x16xf32> to vector<16x16xf32>
    %33 = arith.mulf %31, %32 : vector<16x16xf32>
    %34 = vector.extract_strided_slice %28 {offsets = [0, 0], sizes = [16, 1], strides = [1, 1]} : vector<16x4xf32> to vector<16x1xf32>
    %c0_22 = arith.constant 0 : index
    %c0_23 = arith.constant 0 : index
    %35 = vector.load %arg9[%c0_22, %c0_23] : memref<4x16xf32, #tpu.memory_space<vmem>>, vector<1x16xf32>
    %36 = vector.broadcast %34 : vector<16x1xf32> to vector<16x16xf32>
    %37 = vector.broadcast %35 : vector<1x16xf32> to vector<16x16xf32>
    %38 = arith.mulf %36, %37 : vector<16x16xf32>
    %39 = arith.addf %33, %38 : vector<16x16xf32>
    %40 = vector.extract_strided_slice %25 {offsets = [0, 1], sizes = [16, 1], strides = [1, 1]} : vector<16x4xf32> to vector<16x1xf32>
    %c1 = arith.constant 1 : index
    %c0_24 = arith.constant 0 : index
    %41 = vector.load %arg8[%c1, %c0_24] : memref<4x16xf32, #tpu.memory_space<vmem>>, vector<1x16xf32>
    %42 = vector.broadcast %40 : vector<16x1xf32> to vector<16x16xf32>
    %43 = vector.broadcast %41 : vector<1x16xf32> to vector<16x16xf32>
    %44 = arith.mulf %42, %43 : vector<16x16xf32>
    %45 = vector.extract_strided_slice %28 {offsets = [0, 1], sizes = [16, 1], strides = [1, 1]} : vector<16x4xf32> to vector<16x1xf32>
    %c1_25 = arith.constant 1 : index
    %c0_26 = arith.constant 0 : index
    %46 = vector.load %arg9[%c1_25, %c0_26] : memref<4x16xf32, #tpu.memory_space<vmem>>, vector<1x16xf32>
    %47 = vector.broadcast %45 : vector<16x1xf32> to vector<16x16xf32>
    %48 = vector.broadcast %46 : vector<1x16xf32> to vector<16x16xf32>
    %49 = arith.mulf %47, %48 : vector<16x16xf32>
    %50 = arith.addf %44, %49 : vector<16x16xf32>
    %51 = arith.mulf %39, %50 : vector<16x16xf32>
    %52 = vector.extract_strided_slice %25 {offsets = [0, 2], sizes = [16, 1], strides = [1, 1]} : vector<16x4xf32> to vector<16x1xf32>
    %c2 = arith.constant 2 : index
    %c0_27 = arith.constant 0 : index
    %53 = vector.load %arg8[%c2, %c0_27] : memref<4x16xf32, #tpu.memory_space<vmem>>, vector<1x16xf32>
    %54 = vector.broadcast %52 : vector<16x1xf32> to vector<16x16xf32>
    %55 = vector.broadcast %53 : vector<1x16xf32> to vector<16x16xf32>
    %56 = arith.mulf %54, %55 : vector<16x16xf32>
    %57 = vector.extract_strided_slice %28 {offsets = [0, 2], sizes = [16, 1], strides = [1, 1]} : vector<16x4xf32> to vector<16x1xf32>
    %c2_28 = arith.constant 2 : index
    %c0_29 = arith.constant 0 : index
    %58 = vector.load %arg9[%c2_28, %c0_29] : memref<4x16xf32, #tpu.memory_space<vmem>>, vector<1x16xf32>
    %59 = vector.broadcast %57 : vector<16x1xf32> to vector<16x16xf32>
    %60 = vector.broadcast %58 : vector<1x16xf32> to vector<16x16xf32>
    %61 = arith.mulf %59, %60 : vector<16x16xf32>
    %62 = arith.addf %56, %61 : vector<16x16xf32>
    %63 = arith.mulf %51, %62 : vector<16x16xf32>
    %64 = vector.extract_strided_slice %25 {offsets = [0, 3], sizes = [16, 1], strides = [1, 1]} : vector<16x4xf32> to vector<16x1xf32>
    %c3 = arith.constant 3 : index
    %c0_30 = arith.constant 0 : index
    %65 = vector.load %arg8[%c3, %c0_30] : memref<4x16xf32, #tpu.memory_space<vmem>>, vector<1x16xf32>
    %66 = vector.broadcast %64 : vector<16x1xf32> to vector<16x16xf32>
    %67 = vector.broadcast %65 : vector<1x16xf32> to vector<16x16xf32>
    %68 = arith.mulf %66, %67 : vector<16x16xf32>
    %69 = vector.extract_strided_slice %28 {offsets = [0, 3], sizes = [16, 1], strides = [1, 1]} : vector<16x4xf32> to vector<16x1xf32>
    %c3_31 = arith.constant 3 : index
    %c0_32 = arith.constant 0 : index
    %70 = vector.load %arg9[%c3_31, %c0_32] : memref<4x16xf32, #tpu.memory_space<vmem>>, vector<1x16xf32>
    %71 = vector.broadcast %69 : vector<16x1xf32> to vector<16x16xf32>
    %72 = vector.broadcast %70 : vector<1x16xf32> to vector<16x16xf32>
    %73 = arith.mulf %71, %72 : vector<16x16xf32>
    %74 = arith.addf %68, %73 : vector<16x16xf32>
    %75 = arith.mulf %63, %74 : vector<16x16xf32>
    %c0_33 = arith.constant 0 : index
    %c0_34 = arith.constant 0 : index
    %76 = vector.load %arg10[%c0_33, %c0_34] : memref<16x32xf32, #tpu.memory_space<vmem>>, vector<16x32xf32>
    %cst_35 = arith.constant dense<0.000000e+00> : vector<16x32xf32>
    %77 = tpu.matmul %75, %76, %cst_35 {dimension_numbers = #tpu.dot_dimension_numbers<[1], [0], [0], [1], [0, 0, 1, 1], [], []>} : vector<16x16xf32>, vector<16x32xf32>, vector<16x32xf32> -> vector<16x32xf32>
    %78 = vector.extract_strided_slice %77 {offsets = [0, 0], sizes = [16, 16], strides = [1, 1]} : vector<16x32xf32> to vector<16x16xf32>
    %79 = vector.extract_strided_slice %77 {offsets = [0, 0], sizes = [16, 16], strides = [1, 1]} : vector<16x32xf32> to vector<16x16xf32>
    %80 = arith.mulf %78, %79 : vector<16x16xf32>
    %81 = vector.extract_strided_slice %77 {offsets = [0, 16], sizes = [16, 16], strides = [1, 1]} : vector<16x32xf32> to vector<16x16xf32>
    %82 = vector.extract_strided_slice %77 {offsets = [0, 16], sizes = [16, 16], strides = [1, 1]} : vector<16x32xf32> to vector<16x16xf32>
    %83 = arith.mulf %81, %82 : vector<16x16xf32>
    %84 = arith.addf %80, %83 : vector<16x16xf32>
    %c0_36 = arith.constant 0 : index
    %c0_37 = arith.constant 0 : index
    %85 = vector.load %arg11[%c0_36, %c0_37] : memref<16x4xf32, #tpu.memory_space<vmem>>, vector<16x4xf32>
    %cst_38 = arith.constant dense<0.000000e+00> : vector<16x4xf32>
    %86 = tpu.matmul %84, %85, %cst_38 {dimension_numbers = #tpu.dot_dimension_numbers<[1], [0], [0], [1], [0, 0, 1, 1], [], []>} : vector<16x16xf32>, vector<16x4xf32>, vector<16x4xf32> -> vector<16x4xf32>
    %87 = arith.mulf %86, %86 : vector<16x4xf32>
    %cst_39 = arith.constant dense<0.000000e+00> : vector<16xf32>
    %88 = vector.multi_reduction <add>, %87, %cst_39 [1] : vector<16x4xf32> to vector<16xf32>
    %89 = vector.shape_cast %88 : vector<16xf32> to vector<16x1xf32>
    %90 = math.sqrt %89 : vector<16x1xf32>
    %cst_40 = arith.constant 9.99999996E-13 : f32
    %91 = vector.broadcast %cst_40 : f32 to vector<16x1xf32>
    %92 = arith.maximumf %90, %91 : vector<16x1xf32>
    %93 = vector.broadcast %92 : vector<16x1xf32> to vector<16x4xf32>
    %94 = arith.divf %86, %93 : vector<16x4xf32>
    %c0_41 = arith.constant 0 : index
    %c0_42 = arith.constant 0 : index
    %95 = vector.load %arg12[%c0_41, %c0_42] : memref<4x8xf32, #tpu.memory_space<vmem>>, vector<4x8xf32>
    %cst_43 = arith.constant dense<0.000000e+00> : vector<16x8xf32>
    %96 = tpu.matmul %94, %95, %cst_43 {dimension_numbers = #tpu.dot_dimension_numbers<[1], [0], [0], [1], [0, 0, 1, 1], [], []>} : vector<16x4xf32>, vector<4x8xf32>, vector<16x8xf32> -> vector<16x8xf32>
    %97 = vector.extract_strided_slice %96 {offsets = [0, 0], sizes = [16, 4], strides = [1, 1]} : vector<16x8xf32> to vector<16x4xf32>
    %98 = vector.extract_strided_slice %96 {offsets = [0, 0], sizes = [16, 4], strides = [1, 1]} : vector<16x8xf32> to vector<16x4xf32>
    %99 = arith.mulf %97, %98 : vector<16x4xf32>
    %100 = vector.extract_strided_slice %96 {offsets = [0, 4], sizes = [16, 4], strides = [1, 1]} : vector<16x8xf32> to vector<16x4xf32>
    %101 = vector.extract_strided_slice %96 {offsets = [0, 4], sizes = [16, 4], strides = [1, 1]} : vector<16x8xf32> to vector<16x4xf32>
    %102 = arith.mulf %100, %101 : vector<16x4xf32>
    %103 = arith.addf %99, %102 : vector<16x4xf32>
    %c0_44 = arith.constant 0 : index
    %c0_45 = arith.constant 0 : index
    %104 = vector.load %arg13[%c0_44, %c0_45] : memref<4x2xf32, #tpu.memory_space<vmem>>, vector<4x2xf32>
    %cst_46 = arith.constant dense<0.000000e+00> : vector<16x2xf32>
    %105 = tpu.matmul %103, %104, %cst_46 {dimension_numbers = #tpu.dot_dimension_numbers<[1], [0], [0], [1], [0, 0, 1, 1], [], []>} : vector<16x4xf32>, vector<4x2xf32>, vector<16x2xf32> -> vector<16x2xf32>
    %c0_47 = arith.constant 0 : index
    %c0_48 = arith.constant 0 : index
    %106 = vector.load %arg14[%c0_47, %c0_48] : memref<2x16xf32, #tpu.memory_space<vmem>>, vector<2x16xf32>
    %cst_49 = arith.constant dense<0.000000e+00> : vector<16x16xf32>
    %107 = tpu.matmul %105, %106, %cst_49 {dimension_numbers = #tpu.dot_dimension_numbers<[1], [0], [0], [1], [0, 0, 1, 1], [], []>} : vector<16x2xf32>, vector<2x16xf32>, vector<16x16xf32> -> vector<16x16xf32>
    %c0_50 = arith.constant 0 : index
    %c0_51 = arith.constant 0 : index
    %108 = vector.load %arg15[%c0_50, %c0_51] : memref<1x16xf32, #tpu.memory_space<vmem>>, vector<1x16xf32>
    %109 = vector.broadcast %108 : vector<1x16xf32> to vector<16x16xf32>
    %110 = arith.addf %107, %109 : vector<16x16xf32>
    %cst_52 = arith.constant 0.000000e+00 : f32
    %111 = vector.broadcast %cst_52 : f32 to vector<16x16xf32>
    %112 = arith.maximumf %110, %111 : vector<16x16xf32>
    %c0_53 = arith.constant 0 : index
    %c0_54 = arith.constant 0 : index
    %113 = vector.load %arg16[%c0_53, %c0_54] : memref<1x16xf32, #tpu.memory_space<vmem>>, vector<1x16xf32>
    %114 = vector.broadcast %113 : vector<1x16xf32> to vector<16x16xf32>
    %115 = arith.mulf %112, %114 : vector<16x16xf32>
    %cst_55 = arith.constant dense<0.000000e+00> : vector<16xf32>
    %116 = vector.multi_reduction <add>, %115, %cst_55 [1] : vector<16x16xf32> to vector<16xf32>
    %117 = vector.shape_cast %116 : vector<16xf32> to vector<16x1xf32>
    %c0_56 = arith.constant 0 : index
    %c0_57 = arith.constant 0 : index
    %118 = vector.load %arg17[%c0_56, %c0_57] : memref<1x1xf32, #tpu.memory_space<vmem>>, vector<1x1xf32>
    %119 = vector.broadcast %118 : vector<1x1xf32> to vector<16x1xf32>
    %120 = arith.addf %117, %119 : vector<16x1xf32>
    %cst_58 = arith.constant 0.000000e+00 : f32
    %121 = vector.broadcast %cst_58 : f32 to vector<16x1xf32>
    %122 = arith.subf %121, %120 : vector<16x1xf32>
    %123 = math.exp %122 : vector<16x1xf32>
    %cst_59 = arith.constant 1.000000e+00 : f32
    %124 = vector.broadcast %cst_59 : f32 to vector<16x1xf32>
    %125 = arith.addf %124, %123 : vector<16x1xf32>
    %cst_60 = arith.constant 1.000000e+00 : f32
    %126 = vector.broadcast %cst_60 : f32 to vector<16x1xf32>
    %127 = arith.divf %126, %125 : vector<16x1xf32>
    %cst_61 = arith.constant 0.000000e+00 : f32
    %128 = vector.broadcast %cst_61 : f32 to vector<16x1xf32>
    %129 = arith.subf %128, %127 : vector<16x1xf32>
    %130 = math.exp %129 : vector<16x1xf32>
    %cst_62 = arith.constant 1.000000e+00 : f32
    %131 = vector.broadcast %cst_62 : f32 to vector<16x1xf32>
    %132 = arith.addf %131, %130 : vector<16x1xf32>
    %cst_63 = arith.constant 1.000000e+00 : f32
    %133 = vector.broadcast %cst_63 : f32 to vector<16x1xf32>
    %134 = arith.divf %133, %132 : vector<16x1xf32>
    %c0_64 = arith.constant 0 : index
    %c0_65 = arith.constant 0 : index
    %135 = vector.load %arg18[%c0_64, %c0_65] : memref<16x1xf32, #tpu.memory_space<vmem>>, vector<16x1xf32>
    tpu.vector_store %arg18[%c0_64, %c0_65], %134 {strides = array<i32>} : memref<16x1xf32, #tpu.memory_space<vmem>>, vector<16x1xf32>,
    return
  }
  func.func @transform_0(%arg0: i32) -> (i32, i32) {
    %c0_i32 = arith.constant 0 : i32
    %c0_i32_0 = arith.constant 0 : i32
    return %arg0, %c0_i32 : i32, i32
  }
  func.func @transform_1(%arg0: i32) -> (i32, i32) {
    %c0_i32 = arith.constant 0 : i32
    %c0_i32_0 = arith.constant 0 : i32
    %c0_i32_1 = arith.constant 0 : i32
    return %c0_i32, %c0_i32_0 : i32, i32
  }
  func.func @transform_2(%arg0: i32) -> (i32, i32) {
    %c0_i32 = arith.constant 0 : i32
    %c0_i32_0 = arith.constant 0 : i32
    %c0_i32_1 = arith.constant 0 : i32
    return %c0_i32, %c0_i32_0 : i32, i32
  }
  func.func @transform_3(%arg0: i32) -> (i32, i32) {
    %c0_i32 = arith.constant 0 : i32
    %c0_i32_0 = arith.constant 0 : i32
    %c0_i32_1 = arith.constant 0 : i32
    return %c0_i32, %c0_i32_0 : i32, i32
  }
  func.func @transform_4(%arg0: i32) -> (i32, i32) {
    %c0_i32 = arith.constant 0 : i32
    %c0_i32_0 = arith.constant 0 : i32
    %c0_i32_1 = arith.constant 0 : i32
    return %c0_i32, %c0_i32_0 : i32, i32
  }
  func.func @transform_5(%arg0: i32) -> (i32, i32) {
    %c0_i32 = arith.constant 0 : i32
    %c0_i32_0 = arith.constant 0 : i32
    %c0_i32_1 = arith.constant 0 : i32
    return %c0_i32, %c0_i32_0 : i32, i32
  }
  func.func @transform_6(%arg0: i32) -> (i32, i32) {
    %c0_i32 = arith.constant 0 : i32
    %c0_i32_0 = arith.constant 0 : i32
    %c0_i32_1 = arith.constant 0 : i32
    return %c0_i32, %c0_i32_0 : i32, i32
  }
  func.func @transform_7(%arg0: i32) -> (i32, i32) {
    %c0_i32 = arith.constant 0 : i32
    %c0_i32_0 = arith.constant 0 : i32
    %c0_i32_1 = arith.constant 0 : i32
    return %c0_i32, %c0_i32_0 : i32, i32
  }
  func.func @transform_8(%arg0: i32) -> (i32, i32) {
    %c0_i32 = arith.constant 0 : i32
    %c0_i32_0 = arith.constant 0 : i32
    %c0_i32_1 = arith.constant 0 : i32
    return %c0_i32, %c0_i32_0 : i32, i32
  }
  func.func @transform_9(%arg0: i32) -> (i32, i32) {
    %c0_i32 = arith.constant 0 : i32
    %c0_i32_0 = arith.constant 0 : i32
    %c0_i32_1 = arith.constant 0 : i32
    return %c0_i32, %c0_i32_0 : i32, i32
  }
  func.func @transform_10(%arg0: i32) -> (i32, i32) {
    %c0_i32 = arith.constant 0 : i32
    %c0_i32_0 = arith.constant 0 : i32
    %c0_i32_1 = arith.constant 0 : i32
    return %c0_i32, %c0_i32_0 : i32, i32
  }
  func.func @transform_11(%arg0: i32) -> (i32, i32) {
    %c0_i32 = arith.constant 0 : i32
    %c0_i32_0 = arith.constant 0 : i32
    %c0_i32_1 = arith.constant 0 : i32
    return %c0_i32, %c0_i32_0 : i32, i32
  }
  func.func @transform_12(%arg0: i32) -> (i32, i32) {
    %c0_i32 = arith.constant 0 : i32
    %c0_i32_0 = arith.constant 0 : i32
    %c0_i32_1 = arith.constant 0 : i32
    return %c0_i32, %c0_i32_0 : i32, i32
  }
  func.func @transform_13(%arg0: i32) -> (i32, i32) {
    %c0_i32 = arith.constant 0 : i32
    %c0_i32_0 = arith.constant 0 : i32
    %c0_i32_1 = arith.constant 0 : i32
    return %c0_i32, %c0_i32_0 : i32, i32
  }
  func.func @transform_14(%arg0: i32) -> (i32, i32) {
    %c0_i32 = arith.constant 0 : i32
    %c0_i32_0 = arith.constant 0 : i32
    %c0_i32_1 = arith.constant 0 : i32
    return %c0_i32, %c0_i32_0 : i32, i32
  }
  func.func @transform_15(%arg0: i32) -> (i32, i32) {
    %c0_i32 = arith.constant 0 : i32
    %c0_i32_0 = arith.constant 0 : i32
    %c0_i32_1 = arith.constant 0 : i32
    return %c0_i32, %c0_i32_0 : i32, i32
  }
  func.func @transform_16(%arg0: i32) -> (i32, i32) {
    %c0_i32 = arith.constant 0 : i32
    %c0_i32_0 = arith.constant 0 : i32
    %c0_i32_1 = arith.constant 0 : i32
    return %c0_i32, %c0_i32_0 : i32, i32
  }
  func.func @transform_17(%arg0: i32) -> (i32, i32) {
    %c0_i32 = arith.constant 0 : i32
    %c0_i32_0 = arith.constant 0 : i32
    return %arg0, %c0_i32 : i32, i32
  }
}

</mosaic_0001>

<llo_original>
// kernel: tpu_custom_call.1
$region0: #{tpu_custom_call.1}
  #allocation0 [shape = 'u32[]', space=smem, size = 0x4, offset = 0x4, fixed_abs, tag = 'smem constant byte address 0x4 - core index']
  #allocation1 [shape = 'u32[72,128]{1,0:T(1,128)}', space=vmem, size = 0x9000, scoped, tag = 'internal scratch']
  #allocation2 [shape = 'f32[1,1]{1,0:T(1,128)S(1)}', space=vmem, size = 0x200, scoped, tag = 'scoped memory for tpu_custom_call.1']
  %s0 = inlined_call_operand.hbm [shape: bf16[32,2048], index: 0, kind: input, shape index: {}]
  %s1 = inlined_call_operand.hbm [shape: bf16[2048,512], index: 1, kind: input, shape index: {}]
  %s2 = inlined_call_operand.hbm [shape: f32[1,512], index: 2, kind: input, shape index: {}]
  %s3 = inlined_call_operand.vmem [shape: bf16[512,32], index: 3, kind: input, shape index: {}]
  %s4 = inlined_call_operand.hbm [shape: f32[1,32], index: 4, kind: input, shape index: {}]
  %s5 = inlined_call_operand.vmem [shape: f32[32,4], index: 5, kind: input, shape index: {}]
  %s6 = inlined_call_operand.hbm [shape: f32[1,4], index: 6, kind: input, shape index: {}]
  %s7 = inlined_call_operand.hbm [shape: f32[4,16], index: 7, kind: input, shape index: {}]
  %s8 = inlined_call_operand.hbm [shape: f32[4,16], index: 8, kind: input, shape index: {}]
  %s9 = inlined_call_operand.hbm [shape: f32[16,32], index: 9, kind: input, shape index: {}]
  %s10 = inlined_call_operand.vmem [shape: f32[16,4], index: 10, kind: input, shape index: {}]
  %s11 = inlined_call_operand.hbm [shape: f32[4,8], index: 11, kind: input, shape index: {}]
  %s12 = inlined_call_operand.vmem [shape: f32[4,2], index: 12, kind: input, shape index: {}]
  %s13 = inlined_call_operand.hbm [shape: f32[2,16], index: 13, kind: input, shape index: {}]
  %s14 = inlined_call_operand.hbm [shape: f32[1,16], index: 14, kind: input, shape index: {}]
  %s15 = inlined_call_operand.hbm [shape: f32[1,16], index: 15, kind: input, shape index: {}]
  %s16 = inlined_call_operand.<no memory space> [shape: f32[1,1], index: 16, kind: input, shape index: {}]
  %s17 = inlined_call_operand.vmem [shape: f32[32,1], index: 17, kind: output, shape index: {}]
  %s18 = sld [smem:[#allocation0]]
  $region149: #{tpu_custom_call.1} parent=0
    _
  %s20 = ssub.s32 1, %s18
  %s21 = scalar_select 0, %s20, %s18
  %v22 = vstv %s16
  %23 = vst [vmem:[#allocation2] sm:$0x1] %v22
  $region1: #{tpu_custom_call.1} parent=0
    #allocation3 [shape = 'u8[131072]{0}', space=vmem, size = 0x20000, scoped, tag = 'input window, operand 0']
    #allocation4 [shape = 's32[2]{0}', space=sflag, size = 0x8, scoped, tag = 'scoped memory for tpu_custom_call.1']
    #allocation5 [shape = 'u8[2097152]{0}', space=vmem, size = 0x200000, scoped, tag = 'input window, operand 1, single buffered']
    #allocation6 [shape = 's32[1]{0}', space=sflag, size = 0x4, scoped, tag = 'scoped memory for tpu_custom_call.1']
    #allocation7 [shape = 'u8[2048]{0}', space=vmem, size = 0x800, scoped, tag = 'input window, operand 2, single buffered']
    #allocation8 [shape = 'u8[512]{0}', space=vmem, size = 0x400, scoped, tag = 'input window, operand 4, single buffered']
    #allocation9 [shape = 's32[1]{0}', space=sflag, size = 0x4, scoped, tag = 'scoped memory for tpu_custom_call.1']
    #allocation10 [shape = 'u8[512]{0}', space=vmem, size = 0x400, scoped, tag = 'input window, operand 6, single buffered']
    #allocation11 [shape = 'u8[2048]{0}', space=vmem, size = 0x800, scoped, tag = 'input window, operand 7, single buffered']
    #allocation12 [shape = 's32[1]{0}', space=sflag, size = 0x4, scoped, tag = 'scoped memory for tpu_custom_call.1']
    #allocation13 [shape = 'u8[2048]{0}', space=vmem, size = 0x800, scoped, tag = 'input window, operand 8, single buffered']
    #allocation14 [shape = 'u8[8192]{0}', space=vmem, size = 0x2000, scoped, tag = 'input window, operand 9, single buffered']
    #allocation15 [shape = 's32[1]{0}', space=sflag, size = 0x4, scoped, tag = 'scoped memory for tpu_custom_call.1']
    #allocation16 [shape = 'u8[2048]{0}', space=vmem, size = 0x800, scoped, tag = 'input window, operand 11, single buffered']
    #allocation17 [shape = 'u8[1024]{0}', space=vmem, size = 0x400, scoped, tag = 'input window, operand 13, single buffered']
    #allocation18 [shape = 's32[1]{0}', space=sflag, size = 0x4, scoped, tag = 'scoped memory for tpu_custom_call.1']
    #allocation19 [shape = 'u8[512]{0}', space=vmem, size = 0x400, scoped, tag = 'input window, operand 14, single buffered']
    #allocation20 [shape = 'u8[512]{0}', space=vmem, size = 0x400, scoped, tag = 'input window, operand 15, single buffered']
    #allocation21 [shape = 's32[1]{0}', space=sflag, size = 0x4, scoped, tag = 'scoped memory for tpu_custom_call.1']
    %24 = vsyncpa [#allocation4], 0
    %s25 = scalar_lea.sflag [#allocation4], 1
    %26 = vsyncpa %s25, 0
    %27 = vsyncpa [#allocation6], 0
    %28 = vsyncpa [#allocation9], 0
    %29 = vsyncpa [#allocation12], 0
    %30 = vsyncpa [#allocation15], 0
    %31 = vsyncpa [#allocation18], 0
    %32 = vsyncpa [#allocation21], 0
    loop: start=0, step=1, limit=4
    $region2: #{tpu_custom_call.1} parent=1 // loop_pre_header
      _
    $region3: #{tpu_custom_call.1} parent=1 // loop_header
      %s34 = sphi 0, %s38
      %p35 = scmp.ge.s32.totalorder %s34, 4
      %s44 = sphi 0, %s46
      %s47 = sphi 0, %s44
      %s48 = sphi 0, %s47
      %s64 = sphi 0, %s48
      %s68 = sphi 0, %s68
      %s70 = sphi 0, %s68
      %s71 = sphi 0, %s70
      %s85 = sphi 0, %s71
      %s89 = sphi 0, %s89
      %s91 = sphi 0, %s89
      %s92 = sphi 0, %s91
      %s106 = sphi 0, %s92
      %s110 = sphi 0, %s110
      %s112 = sphi 0, %s110
      %s113 = sphi 0, %s112
      %s127 = sphi 0, %s113
      %s131 = sphi 0, %s131
      %s133 = sphi 0, %s131
      %s134 = sphi 0, %s133
      %s148 = sphi 0, %s134
      %s152 = sphi 0, %s152
      %s154 = sphi 0, %s152
      %s155 = sphi 0, %s154
      %s169 = sphi 0, %s155
      %s173 = sphi 0, %s173
      %s175 = sphi 0, %s173
      %s176 = sphi 0, %s175
      %s190 = sphi 0, %s176
      %s194 = sphi 0, %s194
      %s196 = sphi 0, %s194
      %s197 = sphi 0, %s196
      %s211 = sphi 0, %s197
      %s215 = sphi 0, %s215
      %s217 = sphi 0, %s215
      %s218 = sphi 0, %s217
      %s232 = sphi 0, %s218
      %s236 = sphi 0, %s236
      %s238 = sphi 0, %s236
      %s239 = sphi 0, %s238
      %s253 = sphi 0, %s239
      %s257 = sphi 0, %s257
      %s259 = sphi 0, %s257
      %s260 = sphi 0, %s259
      %s274 = sphi 0, %s260
      %s278 = sphi 0, %s278
      %s280 = sphi 0, %s278
      %s281 = sphi 0, %s280
      %s295 = sphi 0, %s281
      %s299 = sphi 0, %s299
      %s301 = sphi 0, %s299
      %s302 = sphi 0, %s301
      %s316 = sphi 0, %s302
      %s320 = sphi 0, %s320
      %s322 = sphi 0, %s320
      %s323 = sphi 0, %s322
      %s337 = sphi 0, %s323
      %s341 = sphi 0, %s341
      %s343 = sphi 0, %s341
      %s344 = sphi 0, %s343
      %s358 = sphi 0, %s344
      %s362 = sphi 0, %s362
      %s364 = sphi 0, %s362
      %s365 = sphi 0, %s364
      %s379 = sphi 0, %s365
      %s383 = sphi 0, %s383
      %s385 = sphi 0, %s383
      %s386 = sphi 0, %s385
      %s400 = sphi 0, %s386
      %s406 = sphi 0, %s408
      %s409 = sphi 0, %s406
      %s410 = sphi 0, %s409
      %s426 = sphi 0, %s410
    $region4: #{tpu_custom_call.1} parent=1 // loop_header_branch
      %37 = sbr.rel (%p35) target = $region8
    $region5: #{tpu_custom_call.1} parent=1 // loop_body
      %s39 = ssub.s32 %s34, 1
      %s40 = ssub.s32 %s34, 2
      %s41 = sadd.s32 %s34, 1
      %s42 = ssub.s32 %s34, %s41
      %p43 = scmp.eq.s32.totalorder %s42, 0
      %s45 = sadd.s32 %s44, 1
      %s46 = scalar_select %p43, %s44, %s45
      %p49 = pneg %p43
      %p50 = scmp.eq.s32.totalorder %s34, 1
      %p51 = por %p49, %p50
      %p52 = scmp.ne.s32.totalorder %s44, %s47
      %p53 = scmp.eq.s32.totalorder %s34, 0
      %p54 = por %p52, %p53
      %p55 = scmp.ne.s32.totalorder %s44, %s47
      %p56 = scmp.eq.s32.totalorder %s39, 1
      %p57 = por %p55, %p56
      %p58 = scmp.ne.s32.totalorder %s47, %s48
      %p59 = scmp.eq.s32.totalorder %s39, 0
      %p60 = por %p58, %p59
      %p61 = scmp.ne.s32.totalorder %s47, %s48
      %p62 = scmp.eq.s32.totalorder %s40, 1
      %p63 = por %p61, %p62
      %p65 = scmp.ne.s32.totalorder %s48, %s64
      %p66 = scmp.eq.s32.totalorder %s40, 0
      %p67 = por %p65, %p66
      %s69 = sadd.s32 %s68, 1
      %p72 = scmp.eq.s32.totalorder %s34, 1
      %p73 = scmp.ne.s32.totalorder %s68, %s70
      %p74 = scmp.eq.s32.totalorder %s34, 0
      %p75 = por %p73, %p74
      %p76 = scmp.ne.s32.totalorder %s68, %s70
      %p77 = scmp.eq.s32.totalorder %s39, 1
      %p78 = por %p76, %p77
      %p79 = scmp.ne.s32.totalorder %s70, %s71
      %p80 = scmp.eq.s32.totalorder %s39, 0
      %p81 = por %p79, %p80
      %p82 = scmp.ne.s32.totalorder %s70, %s71
      %p83 = scmp.eq.s32.totalorder %s40, 1
      %p84 = por %p82, %p83
      %p86 = scmp.ne.s32.totalorder %s71, %s85
      %p87 = scmp.eq.s32.totalorder %s40, 0
      %p88 = por %p86, %p87
      %s90 = sadd.s32 %s89, 1
      %p93 = scmp.eq.s32.totalorder %s34, 1
      %p94 = scmp.ne.s32.totalorder %s89, %s91
      %p95 = scmp.eq.s32.totalorder %s34, 0
      %p96 = por %p94, %p95
      %p97 = scmp.ne.s32.totalorder %s89, %s91
      %p98 = scmp.eq.s32.totalorder %s39, 1
      %p99 = por %p97, %p98
      %p100 = scmp.ne.s32.totalorder %s91, %s92
      %p101 = scmp.eq.s32.totalorder %s39, 0
      %p102 = por %p100, %p101
      %p103 = scmp.ne.s32.totalorder %s91, %s92
      %p104 = scmp.eq.s32.totalorder %s40, 1
      %p105 = por %p103, %p104
      %p107 = scmp.ne.s32.totalorder %s92, %s106
      %p108 = scmp.eq.s32.totalorder %s40, 0
      %p109 = por %p107, %p108
      %s111 = sadd.s32 %s110, 1
      %p114 = scmp.eq.s32.totalorder %s34, 1
      %p115 = scmp.ne.s32.totalorder %s110, %s112
      %p116 = scmp.eq.s32.totalorder %s34, 0
      %p117 = por %p115, %p116
      %p118 = scmp.ne.s32.totalorder %s110, %s112
      %p119 = scmp.eq.s32.totalorder %s39, 1
      %p120 = por %p118, %p119
      %p121 = scmp.ne.s32.totalorder %s112, %s113
      %p122 = scmp.eq.s32.totalorder %s39, 0
      %p123 = por %p121, %p122
      %p124 = scmp.ne.s32.totalorder %s112, %s113
      %p125 = scmp.eq.s32.totalorder %s40, 1
      %p126 = por %p124, %p125
      %p128 = scmp.ne.s32.totalorder %s113, %s127
      %p129 = scmp.eq.s32.totalorder %s40, 0
      %p130 = por %p128, %p129
      %s132 = sadd.s32 %s131, 1
      %p135 = scmp.eq.s32.totalorder %s34, 1
      %p136 = scmp.ne.s32.totalorder %s131, %s133
      %p137 = scmp.eq.s32.totalorder %s34, 0
      %p138 = por %p136, %p137
      %p139 = scmp.ne.s32.totalorder %s131, %s133
      %p140 = scmp.eq.s32.totalorder %s39, 1
      %p141 = por %p139, %p140
      %p142 = scmp.ne.s32.totalorder %s133, %s134
      %p143 = scmp.eq.s32.totalorder %s39, 0
      %p144 = por %p142, %p143
      %p145 = scmp.ne.s32.totalorder %s133, %s134
      %p146 = scmp.eq.s32.totalorder %s40, 1
      %p147 = por %p145, %p146
      %p149 = scmp.ne.s32.totalorder %s134, %s148
      %p150 = scmp.eq.s32.totalorder %s40, 0
      %p151 = por %p149, %p150
      %s153 = sadd.s32 %s152, 1
      %p156 = scmp.eq.s32.totalorder %s34, 1
      %p157 = scmp.ne.s32.totalorder %s152, %s154
      %p158 = scmp.eq.s32.totalorder %s34, 0
      %p159 = por %p157, %p158
      %p160 = scmp.ne.s32.totalorder %s152, %s154
      %p161 = scmp.eq.s32.totalorder %s39, 1
      %p162 = por %p160, %p161
      %p163 = scmp.ne.s32.totalorder %s154, %s155
      %p164 = scmp.eq.s32.totalorder %s39, 0
      %p165 = por %p163, %p164
      %p166 = scmp.ne.s32.totalorder %s154, %s155
      %p167 = scmp.eq.s32.totalorder %s40, 1
      %p168 = por %p166, %p167
      %p170 = scmp.ne.s32.totalorder %s155, %s169
      %p171 = scmp.eq.s32.totalorder %s40, 0
      %p172 = por %p170, %p171
      %s174 = sadd.s32 %s173, 1
      %p177 = scmp.eq.s32.totalorder %s34, 1
      %p178 = scmp.ne.s32.totalorder %s173, %s175
      %p179 = scmp.eq.s32.totalorder %s34, 0
      %p180 = por %p178, %p179
      %p181 = scmp.ne.s32.totalorder %s173, %s175
      %p182 = scmp.eq.s32.totalorder %s39, 1
      %p183 = por %p181, %p182
      %p184 = scmp.ne.s32.totalorder %s175, %s176
      %p185 = scmp.eq.s32.totalorder %s39, 0
      %p186 = por %p184, %p185
      %p187 = scmp.ne.s32.totalorder %s175, %s176
      %p188 = scmp.eq.s32.totalorder %s40, 1
      %p189 = por %p187, %p188
      %p191 = scmp.ne.s32.totalorder %s176, %s190
      %p192 = scmp.eq.s32.totalorder %s40, 0
      %p193 = por %p191, %p192
      %s195 = sadd.s32 %s194, 1
      %p198 = scmp.eq.s32.totalorder %s34, 1
      %p199 = scmp.ne.s32.totalorder %s194, %s196
      %p200 = scmp.eq.s32.totalorder %s34, 0
      %p201 = por %p199, %p200
      %p202 = scmp.ne.s32.totalorder %s194, %s196
      %p203 = scmp.eq.s32.totalorder %s39, 1
      %p204 = por %p202, %p203
      %p205 = scmp.ne.s32.totalorder %s196, %s197
      %p206 = scmp.eq.s32.totalorder %s39, 0
      %p207 = por %p205, %p206
      %p208 = scmp.ne.s32.totalorder %s196, %s197
      %p209 = scmp.eq.s32.totalorder %s40, 1
      %p210 = por %p208, %p209
      %p212 = scmp.ne.s32.totalorder %s197, %s211
      %p213 = scmp.eq.s32.totalorder %s40, 0
      %p214 = por %p212, %p213
      %s216 = sadd.s32 %s215, 1
      %p219 = scmp.eq.s32.totalorder %s34, 1
      %p220 = scmp.ne.s32.totalorder %s215, %s217
      %p221 = scmp.eq.s32.totalorder %s34, 0
      %p222 = por %p220, %p221
      %p223 = scmp.ne.s32.totalorder %s215, %s217
      %p224 = scmp.eq.s32.totalorder %s39, 1
      %p225 = por %p223, %p224
      %p226 = scmp.ne.s32.totalorder %s217, %s218
      %p227 = scmp.eq.s32.totalorder %s39, 0
      %p228 = por %p226, %p227
      %p229 = scmp.ne.s32.totalorder %s217, %s218
      %p230 = scmp.eq.s32.totalorder %s40, 1
      %p231 = por %p229, %p230
      %p233 = scmp.ne.s32.totalorder %s218, %s232
      %p234 = scmp.eq.s32.totalorder %s40, 0
      %p235 = por %p233, %p234
      %s237 = sadd.s32 %s236, 1
      %p240 = scmp.eq.s32.totalorder %s34, 1
      %p241 = scmp.ne.s32.totalorder %s236, %s238
      %p242 = scmp.eq.s32.totalorder %s34, 0
      %p243 = por %p241, %p242
      %p244 = scmp.ne.s32.totalorder %s236, %s238
      %p245 = scmp.eq.s32.totalorder %s39, 1
      %p246 = por %p244, %p245
      %p247 = scmp.ne.s32.totalorder %s238, %s239
      %p248 = scmp.eq.s32.totalorder %s39, 0
      %p249 = por %p247, %p248
      %p250 = scmp.ne.s32.totalorder %s238, %s239
      %p251 = scmp.eq.s32.totalorder %s40, 1
      %p252 = por %p250, %p251
      %p254 = scmp.ne.s32.totalorder %s239, %s253
      %p255 = scmp.eq.s32.totalorder %s40, 0
      %p256 = por %p254, %p255
      %s258 = sadd.s32 %s257, 1
      %p261 = scmp.eq.s32.totalorder %s34, 1
      %p262 = scmp.ne.s32.totalorder %s257, %s259
      %p263 = scmp.eq.s32.totalorder %s34, 0
      %p264 = por %p262, %p263
      %p265 = scmp.ne.s32.totalorder %s257, %s259
      %p266 = scmp.eq.s32.totalorder %s39, 1
      %p267 = por %p265, %p266
      %p268 = scmp.ne.s32.totalorder %s259, %s260
      %p269 = scmp.eq.s32.totalorder %s39, 0
      %p270 = por %p268, %p269
      %p271 = scmp.ne.s32.totalorder %s259, %s260
      %p272 = scmp.eq.s32.totalorder %s40, 1
      %p273 = por %p271, %p272
      %p275 = scmp.ne.s32.totalorder %s260, %s274
      %p276 = scmp.eq.s32.totalorder %s40, 0
      %p277 = por %p275, %p276
      %s279 = sadd.s32 %s278, 1
      %p282 = scmp.eq.s32.totalorder %s34, 1
      %p283 = scmp.ne.s32.totalorder %s278, %s280
      %p284 = scmp.eq.s32.totalorder %s34, 0
      %p285 = por %p283, %p284
      %p286 = scmp.ne.s32.totalorder %s278, %s280
      %p287 = scmp.eq.s32.totalorder %s39, 1
      %p288 = por %p286, %p287
      %p289 = scmp.ne.s32.totalorder %s280, %s281
      %p290 = scmp.eq.s32.totalorder %s39, 0
      %p291 = por %p289, %p290
      %p292 = scmp.ne.s32.totalorder %s280, %s281
      %p293 = scmp.eq.s32.totalorder %s40, 1
      %p294 = por %p292, %p293
      %p296 = scmp.ne.s32.totalorder %s281, %s295
      %p297 = scmp.eq.s32.totalorder %s40, 0
      %p298 = por %p296, %p297
      %s300 = sadd.s32 %s299, 1
      %p303 = scmp.eq.s32.totalorder %s34, 1
      %p304 = scmp.ne.s32.totalorder %s299, %s301
      %p305 = scmp.eq.s32.totalorder %s34, 0
      %p306 = por %p304, %p305
      %p307 = scmp.ne.s32.totalorder %s299, %s301
      %p308 = scmp.eq.s32.totalorder %s39, 1
      %p309 = por %p307, %p308
      %p310 = scmp.ne.s32.totalorder %s301, %s302
      %p311 = scmp.eq.s32.totalorder %s39, 0
      %p312 = por %p310, %p311
      %p313 = scmp.ne.s32.totalorder %s301, %s302
      %p314 = scmp.eq.s32.totalorder %s40, 1
      %p315 = por %p313, %p314
      %p317 = scmp.ne.s32.totalorder %s302, %s316
      %p318 = scmp.eq.s32.totalorder %s40, 0
      %p319 = por %p317, %p318
      %s321 = sadd.s32 %s320, 1
      %p324 = scmp.eq.s32.totalorder %s34, 1
      %p325 = scmp.ne.s32.totalorder %s320, %s322
      %p326 = scmp.eq.s32.totalorder %s34, 0
      %p327 = por %p325, %p326
      %p328 = scmp.ne.s32.totalorder %s320, %s322
      %p329 = scmp.eq.s32.totalorder %s39, 1
      %p330 = por %p328, %p329
      %p331 = scmp.ne.s32.totalorder %s322, %s323
      %p332 = scmp.eq.s32.totalorder %s39, 0
      %p333 = por %p331, %p332
      %p334 = scmp.ne.s32.totalorder %s322, %s323
      %p335 = scmp.eq.s32.totalorder %s40, 1
      %p336 = por %p334, %p335
      %p338 = scmp.ne.s32.totalorder %s323, %s337
      %p339 = scmp.eq.s32.totalorder %s40, 0
      %p340 = por %p338, %p339
      %s342 = sadd.s32 %s341, 1
      %p345 = scmp.eq.s32.totalorder %s34, 1
      %p346 = scmp.ne.s32.totalorder %s341, %s343
      %p347 = scmp.eq.s32.totalorder %s34, 0
      %p348 = por %p346, %p347
      %p349 = scmp.ne.s32.totalorder %s341, %s343
      %p350 = scmp.eq.s32.totalorder %s39, 1
      %p351 = por %p349, %p350
      %p352 = scmp.ne.s32.totalorder %s343, %s344
      %p353 = scmp.eq.s32.totalorder %s39, 0
      %p354 = por %p352, %p353
      %p355 = scmp.ne.s32.totalorder %s343, %s344
      %p356 = scmp.eq.s32.totalorder %s40, 1
      %p357 = por %p355, %p356
      %p359 = scmp.ne.s32.totalorder %s344, %s358
      %p360 = scmp.eq.s32.totalorder %s40, 0
      %p361 = por %p359, %p360
      %s363 = sadd.s32 %s362, 1
      %p366 = scmp.eq.s32.totalorder %s34, 1
      %p367 = scmp.ne.s32.totalorder %s362, %s364
      %p368 = scmp.eq.s32.totalorder %s34, 0
      %p369 = por %p367, %p368
      %p370 = scmp.ne.s32.totalorder %s362, %s364
      %p371 = scmp.eq.s32.totalorder %s39, 1
      %p372 = por %p370, %p371
      %p373 = scmp.ne.s32.totalorder %s364, %s365
      %p374 = scmp.eq.s32.totalorder %s39, 0
      %p375 = por %p373, %p374
      %p376 = scmp.ne.s32.totalorder %s364, %s365
      %p377 = scmp.eq.s32.totalorder %s40, 1
      %p378 = por %p376, %p377
      %p380 = scmp.ne.s32.totalorder %s365, %s379
      %p381 = scmp.eq.s32.totalorder %s40, 0
      %p382 = por %p380, %p381
      %s384 = sadd.s32 %s383, 1
      %p387 = scmp.eq.s32.totalorder %s34, 1
      %p388 = scmp.ne.s32.totalorder %s383, %s385
      %p389 = scmp.eq.s32.totalorder %s34, 0
      %p390 = por %p388, %p389
      %p391 = scmp.ne.s32.totalorder %s383, %s385
      %p392 = scmp.eq.s32.totalorder %s39, 1
      %p393 = por %p391, %p392
      %p394 = scmp.ne.s32.totalorder %s385, %s386
      %p395 = scmp.eq.s32.totalorder %s39, 0
      %p396 = por %p394, %p395
      %p397 = scmp.ne.s32.totalorder %s385, %s386
      %p398 = scmp.eq.s32.totalorder %s40, 1
      %p399 = por %p397, %p398
      %p401 = scmp.ne.s32.totalorder %s386, %s400
      %p402 = scmp.eq.s32.totalorder %s40, 0
      %p403 = por %p401, %p402
      %s404 = ssub.s32 %s34, %s41
      %p405 = scmp.eq.s32.totalorder %s404, 0
      %s407 = sadd.s32 %s406, 1
      %s408 = scalar_select %p405, %s406, %s407
      %p411 = pneg %p405
      %p412 = scmp.eq.s32.totalorder %s34, 1
      %p413 = por %p411, %p412
      %p414 = scmp.ne.s32.totalorder %s406, %s409
      %p415 = scmp.eq.s32.totalorder %s34, 0
      %p416 = por %p414, %p415
      %p417 = scmp.ne.s32.totalorder %s406, %s409
      %p418 = scmp.eq.s32.totalorder %s39, 1
      %p419 = por %p417, %p418
      %p420 = scmp.ne.s32.totalorder %s409, %s410
      %p421 = scmp.eq.s32.totalorder %s39, 0
      %p422 = por %p420, %p421
      %p423 = scmp.ne.s32.totalorder %s409, %s410
      %p424 = scmp.eq.s32.totalorder %s40, 1
      %p425 = por %p423, %p424
      %p427 = scmp.ne.s32.totalorder %s410, %s426
      %p428 = scmp.eq.s32.totalorder %s40, 0
      %p429 = por %p427, %p428
      %p430 = scmp.le.s32.totalorder 1, %s34
      %p431 = scmp.lt.s32.totalorder %s34, 3
      %p432 = pnand %p430, %p431
      %p433 = pneg %p432
      // Predicated region
      $region9: #{tpu_custom_call.1} parent=5 // pred_check
        _
      $region10: #{tpu_custom_call.1} parent=5 // pred_check_branch
        %435 = sbr.rel (%p432) target = $region12
      $region11: #{tpu_custom_call.1} parent=5 // pred_region
        %s436 = ssub.s32 %s34, 1
        // Predicated region
        $region13: #{tpu_custom_call.1} parent=11 // pred_check
          %p437 = pneg %p81
        $region14: #{tpu_custom_call.1} parent=11 // pred_check_branch
          %439 = sbr.rel (%p437) target = $region16
        $region15: #{tpu_custom_call.1} parent=11 // pred_region
          %441 = vsyncadd [#allocation6], 0
          %s442 = sshll.u32 %s1, 4
          %s443 = int_to_ptr.hbm [resolvable:$true] %s442
          %s444 = sshll.u32 [#allocation5], 4
          %s445 = int_to_ptr.vmem [resolvable:$true] %s444
          %450 = dma.hbm_to_vmem [thread:$0]  %s443, 65536, %s445, [#allocation6], 256, 256, 16
        $region16: #{tpu_custom_call.1} parent=11 // pred_fallthru
          _
        // Predicated region
        $region17: #{tpu_custom_call.1} parent=11 // pred_check
          %p451 = pneg %p102
        $region18: #{tpu_custom_call.1} parent=11 // pred_check_branch
          %453 = sbr.rel (%p451) target = $region20
        $region19: #{tpu_custom_call.1} parent=11 // pred_region
          %455 = vsyncadd [#allocation6], 0
          %s457 = sshll.u32 %s2, 4
          %s458 = int_to_ptr.hbm [resolvable:$true] %s457
          %s459 = sshll.u32 [#allocation7], 4
          %s460 = int_to_ptr.vmem [resolvable:$true] %s459
          %462 = dma.hbm_to_vmem [thread:$0]  %s458, 64, %s460, [#allocation6]
        $region20: #{tpu_custom_call.1} parent=11 // pred_fallthru
          _
        // Predicated region
        $region21: #{tpu_custom_call.1} parent=11 // pred_check
          %p463 = pneg %p123
        $region22: #{tpu_custom_call.1} parent=11 // pred_check_branch
          %465 = sbr.rel (%p463) target = $region24
        $region23: #{tpu_custom_call.1} parent=11 // pred_region
          _
        $region24: #{tpu_custom_call.1} parent=11 // pred_fallthru
          _
        // Predicated region
        $region25: #{tpu_custom_call.1} parent=11 // pred_check
          %p466 = pneg %p144
        $region26: #{tpu_custom_call.1} parent=11 // pred_check_branch
          %468 = sbr.rel (%p466) target = $region28
        $region27: #{tpu_custom_call.1} parent=11 // pred_region
          %470 = vsyncadd [#allocation9], 0
          %s472 = sshll.u32 %s4, 4
          %s473 = int_to_ptr.hbm [resolvable:$true] %s472
          %s474 = sshll.u32 [#allocation8], 4
          %s475 = int_to_ptr.vmem [resolvable:$true] %s474
          %477 = dma.hbm_to_vmem [thread:$0]  %s473, 16, %s475, [#allocation9]
        $region28: #{tpu_custom_call.1} parent=11 // pred_fallthru
          _
        // Predicated region
        $region29: #{tpu_custom_call.1} parent=11 // pred_check
          %p478 = pneg %p165
        $region30: #{tpu_custom_call.1} parent=11 // pred_check_branch
          %480 = sbr.rel (%p478) target = $region32
        $region31: #{tpu_custom_call.1} parent=11 // pred_region
          _
        $region32: #{tpu_custom_call.1} parent=11 // pred_fallthru
          _
        // Predicated region
        $region33: #{tpu_custom_call.1} parent=11 // pred_check
          %p481 = pneg %p186
        $region34: #{tpu_custom_call.1} parent=11 // pred_check_branch
          %483 = sbr.rel (%p481) target = $region36
        $region35: #{tpu_custom_call.1} parent=11 // pred_region
          %485 = vsyncadd [#allocation9], 0
          %s487 = sshll.u32 %s6, 4
          %s488 = int_to_ptr.hbm [resolvable:$true] %s487
          %s489 = sshll.u32 [#allocation10], 4
          %s490 = int_to_ptr.vmem [resolvable:$true] %s489
          %492 = dma.hbm_to_vmem [thread:$0]  %s488, 16, %s490, [#allocation9]
        $region36: #{tpu_custom_call.1} parent=11 // pred_fallthru
          _
        // Predicated region
        $region37: #{tpu_custom_call.1} parent=11 // pred_check
          %p493 = pneg %p207
        $region38: #{tpu_custom_call.1} parent=11 // pred_check_branch
          %495 = sbr.rel (%p493) target = $region40
        $region39: #{tpu_custom_call.1} parent=11 // pred_region
          %497 = vsyncadd [#allocation12], 0
          %s499 = sshll.u32 %s7, 4
          %s500 = int_to_ptr.hbm [resolvable:$true] %s499
          %s501 = sshll.u32 [#allocation11], 4
          %s502 = int_to_ptr.vmem [resolvable:$true] %s501
          %504 = dma.hbm_to_vmem [thread:$0]  %s500, 64, %s502, [#allocation12]
        $region40: #{tpu_custom_call.1} parent=11 // pred_fallthru
          _
        // Predicated region
        $region41: #{tpu_custom_call.1} parent=11 // pred_check
          %p505 = pneg %p228
        $region42: #{tpu_custom_call.1} parent=11 // pred_check_branch
          %507 = sbr.rel (%p505) target = $region44
        $region43: #{tpu_custom_call.1} parent=11 // pred_region
          %509 = vsyncadd [#allocation12], 0
          %s511 = sshll.u32 %s8, 4
          %s512 = int_to_ptr.hbm [resolvable:$true] %s511
          %s513 = sshll.u32 [#allocation13], 4
          %s514 = int_to_ptr.vmem [resolvable:$true] %s513
          %516 = dma.hbm_to_vmem [thread:$0]  %s512, 64, %s514, [#allocation12]
        $region44: #{tpu_custom_call.1} parent=11 // pred_fallthru
          _
        // Predicated region
        $region45: #{tpu_custom_call.1} parent=11 // pred_check
          %p517 = pneg %p249
        $region46: #{tpu_custom_call.1} parent=11 // pred_check_branch
          %519 = sbr.rel (%p517) target = $region48
        $region47: #{tpu_custom_call.1} parent=11 // pred_region
          %521 = vsyncadd [#allocation15], 0
          %s522 = sshll.u32 %s9, 4
          %s523 = int_to_ptr.hbm [resolvable:$true] %s522
          %s524 = sshll.u32 [#allocation14], 4
          %s525 = int_to_ptr.vmem [resolvable:$true] %s524
          %530 = dma.hbm_to_vmem [thread:$0]  %s523, 256, %s525, [#allocation15], 128, 128, 8
        $region48: #{tpu_custom_call.1} parent=11 // pred_fallthru
          _
        // Predicated region
        $region49: #{tpu_custom_call.1} parent=11 // pred_check
          %p531 = pneg %p270
        $region50: #{tpu_custom_call.1} parent=11 // pred_check_branch
          %533 = sbr.rel (%p531) target = $region52
        $region51: #{tpu_custom_call.1} parent=11 // pred_region
          _
        $region52: #{tpu_custom_call.1} parent=11 // pred_fallthru
          _
        // Predicated region
        $region53: #{tpu_custom_call.1} parent=11 // pred_check
          %p534 = pneg %p291
        $region54: #{tpu_custom_call.1} parent=11 // pred_check_branch
          %536 = sbr.rel (%p534) target = $region56
        $region55: #{tpu_custom_call.1} parent=11 // pred_region
          %538 = vsyncadd [#allocation15], 0
          %s540 = sshll.u32 %s11, 4
          %s541 = int_to_ptr.hbm [resolvable:$true] %s540
          %s542 = sshll.u32 [#allocation16], 4
          %s543 = int_to_ptr.vmem [resolvable:$true] %s542
          %545 = dma.hbm_to_vmem [thread:$0]  %s541, 64, %s543, [#allocation15]
        $region56: #{tpu_custom_call.1} parent=11 // pred_fallthru
          _
        // Predicated region
        $region57: #{tpu_custom_call.1} parent=11 // pred_check
          %p546 = pneg %p312
        $region58: #{tpu_custom_call.1} parent=11 // pred_check_branch
          %548 = sbr.rel (%p546) target = $region60
        $region59: #{tpu_custom_call.1} parent=11 // pred_region
          _
        $region60: #{tpu_custom_call.1} parent=11 // pred_fallthru
          _
        // Predicated region
        $region61: #{tpu_custom_call.1} parent=11 // pred_check
          %p549 = pneg %p333
        $region62: #{tpu_custom_call.1} parent=11 // pred_check_branch
          %551 = sbr.rel (%p549) target = $region64
        $region63: #{tpu_custom_call.1} parent=11 // pred_region
          %553 = vsyncadd [#allocation18], 0
          %s555 = sshll.u32 %s13, 4
          %s556 = int_to_ptr.hbm [resolvable:$true] %s555
          %s557 = sshll.u32 [#allocation17], 4
          %s558 = int_to_ptr.vmem [resolvable:$true] %s557
          %560 = dma.hbm_to_vmem [thread:$0]  %s556, 32, %s558, [#allocation18]
        $region64: #{tpu_custom_call.1} parent=11 // pred_fallthru
          _
        // Predicated region
        $region65: #{tpu_custom_call.1} parent=11 // pred_check
          %p561 = pneg %p354
        $region66: #{tpu_custom_call.1} parent=11 // pred_check_branch
          %563 = sbr.rel (%p561) target = $region68
        $region67: #{tpu_custom_call.1} parent=11 // pred_region
          %565 = vsyncadd [#allocation18], 0
          %s567 = sshll.u32 %s14, 4
          %s568 = int_to_ptr.hbm [resolvable:$true] %s567
          %s569 = sshll.u32 [#allocation19], 4
          %s570 = int_to_ptr.vmem [resolvable:$true] %s569
          %572 = dma.hbm_to_vmem [thread:$0]  %s568, 16, %s570, [#allocation18]
        $region68: #{tpu_custom_call.1} parent=11 // pred_fallthru
          _
        // Predicated region
        $region69: #{tpu_custom_call.1} parent=11 // pred_check
          %p573 = pneg %p375
        $region70: #{tpu_custom_call.1} parent=11 // pred_check_branch
          %575 = sbr.rel (%p573) target = $region72
        $region71: #{tpu_custom_call.1} parent=11 // pred_region
          %577 = vsyncadd [#allocation21], 0
          %s579 = sshll.u32 %s15, 4
          %s580 = int_to_ptr.hbm [resolvable:$true] %s579
          %s581 = sshll.u32 [#allocation20], 4
          %s582 = int_to_ptr.vmem [resolvable:$true] %s581
          %584 = dma.hbm_to_vmem [thread:$0]  %s580, 16, %s582, [#allocation21]
        $region72: #{tpu_custom_call.1} parent=11 // pred_fallthru
          _
        // Predicated region
        $region73: #{tpu_custom_call.1} parent=11 // pred_check
          %p585 = pneg %p396
        $region74: #{tpu_custom_call.1} parent=11 // pred_check_branch
          %587 = sbr.rel (%p585) target = $region76
        $region75: #{tpu_custom_call.1} parent=11 // pred_region
          _
        $region76: #{tpu_custom_call.1} parent=11 // pred_fallthru
          _
      $region12: #{tpu_custom_call.1} parent=5 // pred_fallthru
        _
      %p588 = scmp.lt.s32.totalorder %s34, 2
      // Predicated region
      $region77: #{tpu_custom_call.1} parent=5 // pred_check
        %p589 = pneg %p588
      $region78: #{tpu_custom_call.1} parent=5 // pred_check_branch
        %591 = sbr.rel (%p589) target = $region80
      $region79: #{tpu_custom_call.1} parent=5 // pred_region
        // Predicated region
        $region81: #{tpu_custom_call.1} parent=79 // pred_check
          %p592 = pneg %p54
        $region82: #{tpu_custom_call.1} parent=79 // pred_check_branch
          %594 = sbr.rel (%p592) target = $region84
        $region83: #{tpu_custom_call.1} parent=79 // pred_region
          %s595 = sand.u32 %s44, 1
          %s596 = scalar_lea.sflag [#allocation4], %s595
          %s597 = sand.u32 %s44, 1
          %s598 = smul.addr %s597, 128
          %s599 = scalar_lea.vmem [#allocation3], %s598
          %s600 = smul.u32 2, %s34
          %602 = vsyncadd %s596, 0
          %s603 = smul.addr %s600, 16
          %s604 = smul.addr %s603, 4
          %s605 = scalar_lea.hbm %s0, %s604
          %s606 = sshll.u32 %s605, 4
          %s607 = int_to_ptr.hbm [resolvable:$true] %s606
          %s608 = sshll.u32 %s599, 4
          %s609 = int_to_ptr.vmem [resolvable:$true] %s608
          %614 = dma.hbm_to_vmem [thread:$0]  %s607, 2048, %s609, %s596, 1024, 1024, 64
        $region84: #{tpu_custom_call.1} parent=79 // pred_fallthru
          _
      $region80: #{tpu_custom_call.1} parent=5 // pred_fallthru
        _
      %p615 = scmp.le.s32.totalorder 1, %s34
      %p616 = scmp.lt.s32.totalorder %s34, 3
      %p617 = pnand %p615, %p616
      %p618 = pneg %p617
      // Predicated region
      $region85: #{tpu_custom_call.1} parent=5 // pred_check
        _
      $region86: #{tpu_custom_call.1} parent=5 // pred_check_branch
        %620 = sbr.rel (%p617) target = $region88
      $region87: #{tpu_custom_call.1} parent=5 // pred_region
        %s621 = ssub.s32 %s34, 1
        %s622 = sand.u32 %s47, 1
        %s623 = scalar_lea.sflag [#allocation4], %s622
        %s624 = sand.u32 %s47, 1
        %s625 = smul.addr %s624, 128
        %s626 = scalar_lea.vmem [#allocation3], %s625
        // Predicated region
        $region89: #{tpu_custom_call.1} parent=87 // pred_check
          %p627 = pneg %p60
        $region90: #{tpu_custom_call.1} parent=87 // pred_check_branch
          %629 = sbr.rel (%p627) target = $region92
        $region91: #{tpu_custom_call.1} parent=87 // pred_region
          %631 = dma.done %s623, 2048
        $region92: #{tpu_custom_call.1} parent=87 // pred_fallthru
          _
        // Predicated region
        $region93: #{tpu_custom_call.1} parent=87 // pred_check
          %p632 = pneg %p81
        $region94: #{tpu_custom_call.1} parent=87 // pred_check_branch
          %634 = sbr.rel (%p632) target = $region96
        $region95: #{tpu_custom_call.1} parent=87 // pred_region
          %636 = dma.done [#allocation6], 65536
        $region96: #{tpu_custom_call.1} parent=87 // pred_fallthru
          _
        // Predicated region
        $region97: #{tpu_custom_call.1} parent=87 // pred_check
          %p637 = pneg %p102
        $region98: #{tpu_custom_call.1} parent=87 // pred_check_branch
          %639 = sbr.rel (%p637) target = $region100
        $region99: #{tpu_custom_call.1} parent=87 // pred_region
          %641 = dma.done [#allocation6], 64
        $region100: #{tpu_custom_call.1} parent=87 // pred_fallthru
          _
        // Predicated region
        $region101: #{tpu_custom_call.1} parent=87 // pred_check
          %p642 = pneg %p144
        $region102: #{tpu_custom_call.1} parent=87 // pred_check_branch
          %644 = sbr.rel (%p642) target = $region104
        $region103: #{tpu_custom_call.1} parent=87 // pred_region
          %646 = dma.done [#allocation9], 16
        $region104: #{tpu_custom_call.1} parent=87 // pred_fallthru
          _
        // Predicated region
        $region105: #{tpu_custom_call.1} parent=87 // pred_check
          %p647 = pneg %p186
        $region106: #{tpu_custom_call.1} parent=87 // pred_check_branch
          %649 = sbr.rel (%p647) target = $region108
        $region107: #{tpu_custom_call.1} parent=87 // pred_region
          %651 = dma.done [#allocation9], 16
        $region108: #{tpu_custom_call.1} parent=87 // pred_fallthru
          _
        // Predicated region
        $region109: #{tpu_custom_call.1} parent=87 // pred_check
          %p652 = pneg %p207
        $region110: #{tpu_custom_call.1} parent=87 // pred_check_branch
          %654 = sbr.rel (%p652) target = $region112
        $region111: #{tpu_custom_call.1} parent=87 // pred_region
          %656 = dma.done [#allocation12], 64
        $region112: #{tpu_custom_call.1} parent=87 // pred_fallthru
          _
        // Predicated region
        $region113: #{tpu_custom_call.1} parent=87 // pred_check
          %p657 = pneg %p228
        $region114: #{tpu_custom_call.1} parent=87 // pred_check_branch
          %659 = sbr.rel (%p657) target = $region116
        $region115: #{tpu_custom_call.1} parent=87 // pred_region
          %661 = dma.done [#allocation12], 64
        $region116: #{tpu_custom_call.1} parent=87 // pred_fallthru
          _
        // Predicated region
        $region117: #{tpu_custom_call.1} parent=87 // pred_check
          %p662 = pneg %p249
        $region118: #{tpu_custom_call.1} parent=87 // pred_check_branch
          %664 = sbr.rel (%p662) target = $region120
        $region119: #{tpu_custom_call.1} parent=87 // pred_region
          %666 = dma.done [#allocation15], 256
        $region120: #{tpu_custom_call.1} parent=87 // pred_fallthru
          _
        // Predicated region
        $region121: #{tpu_custom_call.1} parent=87 // pred_check
          %p667 = pneg %p291
        $region122: #{tpu_custom_call.1} parent=87 // pred_check_branch
          %669 = sbr.rel (%p667) target = $region124
        $region123: #{tpu_custom_call.1} parent=87 // pred_region
          %671 = dma.done [#allocation15], 64
        $region124: #{tpu_custom_call.1} parent=87 // pred_fallthru
          _
        // Predicated region
        $region125: #{tpu_custom_call.1} parent=87 // pred_check
          %p672 = pneg %p333
        $region126: #{tpu_custom_call.1} parent=87 // pred_check_branch
          %674 = sbr.rel (%p672) target = $region128
        $region127: #{tpu_custom_call.1} parent=87 // pred_region
          %676 = dma.done [#allocation18], 32
        $region128: #{tpu_custom_call.1} parent=87 // pred_fallthru
          _
        // Predicated region
        $region129: #{tpu_custom_call.1} parent=87 // pred_check
          %p677 = pneg %p354
        $region130: #{tpu_custom_call.1} parent=87 // pred_check_branch
          %679 = sbr.rel (%p677) target = $region132
        $region131: #{tpu_custom_call.1} parent=87 // pred_region
          %681 = dma.done [#allocation18], 16
        $region132: #{tpu_custom_call.1} parent=87 // pred_fallthru
          _
        // Predicated region
        $region133: #{tpu_custom_call.1} parent=87 // pred_check
          %p682 = pneg %p375
        $region134: #{tpu_custom_call.1} parent=87 // pred_check_branch
          %684 = sbr.rel (%p682) target = $region136
        $region135: #{tpu_custom_call.1} parent=87 // pred_region
          %686 = dma.done [#allocation21], 16
        $region136: #{tpu_custom_call.1} parent=87 // pred_fallthru
          _
        %s687 = sand.u32 %s47, 1
        %s688 = scalar_lea.sflag [#allocation4], %s687
        %s689 = sand.u32 %s47, 1
        %s690 = smul.addr %s689, 128
        %s691 = scalar_lea.vmem [#allocation3], %s690
        %p692 = pneg %p60
        %p693 = pneg %p57
        %p694 = pneg %p81
        %p695 = pneg %p78
        %p696 = pneg %p102
        %p697 = pneg %p99
        %p698 = pneg %p123
        %p699 = pneg %p120
        %p700 = pneg %p144
        %p701 = pneg %p141
        %p702 = pneg %p165
        %p703 = pneg %p162
        %p704 = pneg %p186
        %p705 = pneg %p183
        %p706 = pneg %p207
        %p707 = pneg %p204
        %p708 = pneg %p228
        %p709 = pneg %p225
        %p710 = pneg %p249
        %p711 = pneg %p246
        %p712 = pneg %p270
        %p713 = pneg %p267
        %p714 = pneg %p291
        %p715 = pneg %p288
        %p716 = pneg %p312
        %p717 = pneg %p309
        %p718 = pneg %p333
        %p719 = pneg %p330
        %p720 = pneg %p354
        %p721 = pneg %p351
        %p722 = pneg %p375
        %p723 = pneg %p372
        %p724 = pneg %p396
        %p725 = pneg %p393
        %p726 = pneg %p422
        %p727 = pneg %p419
        %s728 = smul.u32 2, %s39
        %p729 = scmp.lt.s32.totalorder %s728, 3
        %s730 = scalar_select %p729, %s728, 3
        %s731 = smul.addr %s730, 8
        %s732 = scalar_lea.vmem %s17, %s731
        %s733 = smul.u32 2, %s39
        %s734 = smul.u32 2, %s39
        %p735 = scmp.lt.s32.totalorder %s734, 3
        %s736 = scalar_select %p735, %s734, 3
        %s737 = smul.addr %s736, 8
        %s738 = scalar_lea.vmem %s17, %s737
        %s739 = smul.u32 2, %s39
        %v740 = vld [vmem:[%s626] sm:$0xff]
        %v741 = vld [vmem:[%s626 + $0x8] sm:$0xff]
        %v742 = vld [vmem:[%s626 + $0x10] sm:$0xff]
        %v743 = vld [vmem:[%s626 + $0x18] sm:$0xff]
        %v744 = vld [vmem:[%s626 + $0x20] sm:$0xff]
        %v745 = vld [vmem:[%s626 + $0x28] sm:$0xff]
        %v746 = vld [vmem:[%s626 + $0x30] sm:$0xff]
        %v747 = vld [vmem:[%s626 + $0x38] sm:$0xff]
        %v748 = vld [vmem:[%s626 + $0x40] sm:$0xff]
        %v749 = vld [vmem:[%s626 + $0x48] sm:$0xff]
        %v750 = vld [vmem:[%s626 + $0x50] sm:$0xff]
        %v751 = vld [vmem:[%s626 + $0x58] sm:$0xff]
        %v752 = vld [vmem:[%s626 + $0x60] sm:$0xff]
        %v753 = vld [vmem:[%s626 + $0x68] sm:$0xff]
        %v754 = vld [vmem:[%s626 + $0x70] sm:$0xff]
        %v755 = vld [vmem:[%s626 + $0x78] sm:$0xff]
        %v756 = vld [vmem:[#allocation5] sm:$0xff]
        %v757 = vld [vmem:[#allocation5 + $0x8] sm:$0xff]
        %v758 = vld [vmem:[#allocation5 + $0x10] sm:$0xff]
        %v759 = vld [vmem:[#allocation5 + $0x18] sm:$0xff]
        %v760 = vld [vmem:[#allocation5 + $0x20] sm:$0xff]
        %v761 = vld [vmem:[#allocation5 + $0x28] sm:$0xff]
        %v762 = vld [vmem:[#allocation5 + $0x30] sm:$0xff]
        %v763 = vld [vmem:[#allocation5 + $0x38] sm:$0xff]
        %v764 = vld [vmem:[#allocation5 + $0x40] sm:$0xff]
        %v765 = vld [vmem:[#allocation5 + $0x48] sm:$0xff]
        %v766 = vld [vmem:[#allocation5 + $0x50] sm:$0xff]
        %v767 = vld [vmem:[#allocation5 + $0x58] sm:$0xff]
        %v768 = vld [vmem:[#allocation5 + $0x60] sm:$0xff]
        %v769 = vld [vmem:[#allocation5 + $0x68] sm:$0xff]
        %v770 = vld [vmem:[#allocation5 + $0x70] sm:$0xff]
        %v771 = vld [vmem:[#allocation5 + $0x78] sm:$0xff]
        %v772 = vld [vmem:[#allocation5 + $0x80] sm:$0xff]
        %v773 = vld [vmem:[#allocation5 + $0x88] sm:$0xff]
        %v774 = vld [vmem:[#allocation5 + $0x90] sm:$0xff]
        %v775 = vld [vmem:[#allocation5 + $0x98] sm:$0xff]
        %v776 = vld [vmem:[#allocation5 + $0xa0] sm:$0xff]
        %v777 = vld [vmem:[#allocation5 + $0xa8] sm:$0xff]
        %v778 = vld [vmem:[#allocation5 + $0xb0] sm:$0xff]
        %v779 = vld [vmem:[#allocation5 + $0xb8] sm:$0xff]
        %v780 = vld [vmem:[#allocation5 + $0xc0] sm:$0xff]
        %v781 = vld [vmem:[#allocation5 + $0xc8] sm:$0xff]
        %v782 = vld [vmem:[#allocation5 + $0xd0] sm:$0xff]
        %v783 = vld [vmem:[#allocation5 + $0xd8] sm:$0xff]
        %v784 = vld [vmem:[#allocation5 + $0xe0] sm:$0xff]
        %v785 = vld [vmem:[#allocation5 + $0xe8] sm:$0xff]
        %v786 = vld [vmem:[#allocation5 + $0xf0] sm:$0xff]
        %v787 = vld [vmem:[#allocation5 + $0xf8] sm:$0xff]
        %v788 = vld [vmem:[#allocation5 + $0x100] sm:$0xff]
        %v789 = vld [vmem:[#allocation5 + $0x108] sm:$0xff]
        %v790 = vld [vmem:[#allocation5 + $0x110] sm:$0xff]
        %v791 = vld [vmem:[#allocation5 + $0x118] sm:$0xff]
        %v792 = vld [vmem:[#allocation5 + $0x120] sm:$0xff]
        %v793 = vld [vmem:[#allocation5 + $0x128] sm:$0xff]
        %v794 = vld [vmem:[#allocation5 + $0x130] sm:$0xff]
        %v795 = vld [vmem:[#allocation5 + $0x138] sm:$0xff]
        %v796 = vld [vmem:[#allocation5 + $0x140] sm:$0xff]
        %v797 = vld [vmem:[#allocation5 + $0x148] sm:$0xff]
        %v798 = vld [vmem:[#allocation5 + $0x150] sm:$0xff]
        %v799 = vld [vmem:[#allocation5 + $0x158] sm:$0xff]
        %v800 = vld [vmem:[#allocation5 + $0x160] sm:$0xff]
        %v801 = vld [vmem:[#allocation5 + $0x168] sm:$0xff]
        %v802 = vld [vmem:[#allocation5 + $0x170] sm:$0xff]
        %v803 = vld [vmem:[#allocation5 + $0x178] sm:$0xff]
        %v804 = vld [vmem:[#allocation5 + $0x180] sm:$0xff]
        %v805 = vld [vmem:[#allocation5 + $0x188] sm:$0xff]
        %v806 = vld [vmem:[#allocation5 + $0x190] sm:$0xff]
        %v807 = vld [vmem:[#allocation5 + $0x198] sm:$0xff]
        %v808 = vld [vmem:[#allocation5 + $0x1a0] sm:$0xff]
        %v809 = vld [vmem:[#allocation5 + $0x1a8] sm:$0xff]
        %v810 = vld [vmem:[#allocation5 + $0x1b0] sm:$0xff]
        %v811 = vld [vmem:[#allocation5 + $0x1b8] sm:$0xff]
        %v812 = vld [vmem:[#allocation5 + $0x1c0] sm:$0xff]
        %v813 = vld [vmem:[#allocation5 + $0x1c8] sm:$0xff]
        %v814 = vld [vmem:[#allocation5 + $0x1d0] sm:$0xff]
        %v815 = vld [vmem:[#allocation5 + $0x1d8] sm:$0xff]
        %v816 = vld [vmem:[#allocation5 + $0x1e0] sm:$0xff]
        %v817 = vld [vmem:[#allocation5 + $0x1e8] sm:$0xff]
        %v818 = vld [vmem:[#allocation5 + $0x1f0] sm:$0xff]
        %v819 = vld [vmem:[#allocation5 + $0x1f8] sm:$0xff]
        %v820 = vld [vmem:[#allocation5 + $0x200] sm:$0xff]
        %v821 = vld [vmem:[#allocation5 + $0x208] sm:$0xff]
        %v822 = vld [vmem:[#allocation5 + $0x210] sm:$0xff]
        %v823 = vld [vmem:[#allocation5 + $0x218] sm:$0xff]
        %v824 = vld [vmem:[#allocation5 + $0x220] sm:$0xff]
        %v825 = vld [vmem:[#allocation5 + $0x228] sm:$0xff]
        %v826 = vld [vmem:[#allocation5 + $0x230] sm:$0xff]
        %v827 = vld [vmem:[#allocation5 + $0x238] sm:$0xff]
        %v828 = vld [vmem:[#allocation5 + $0x240] sm:$0xff]
        %v829 = vld [vmem:[#allocation5 + $0x248] sm:$0xff]
        %v830 = vld [vmem:[#allocation5 + $0x250] sm:$0xff]
        %v831 = vld [vmem:[#allocation5 + $0x258] sm:$0xff]
        %v832 = vld [vmem:[#allocation5 + $0x260] sm:$0xff]
        %v833 = vld [vmem:[#allocation5 + $0x268] sm:$0xff]
        %v834 = vld [vmem:[#allocation5 + $0x270] sm:$0xff]
        %v835 = vld [vmem:[#allocation5 + $0x278] sm:$0xff]
        %v836 = vld [vmem:[#allocation5 + $0x280] sm:$0xff]
        %v837 = vld [vmem:[#allocation5 + $0x288] sm:$0xff]
        %v838 = vld [vmem:[#allocation5 + $0x290] sm:$0xff]
        %v839 = vld [vmem:[#allocation5 + $0x298] sm:$0xff]
        %v840 = vld [vmem:[#allocation5 + $0x2a0] sm:$0xff]
        %v841 = vld [vmem:[#allocation5 + $0x2a8] sm:$0xff]
        %v842 = vld [vmem:[#allocation5 + $0x2b0] sm:$0xff]
        %v843 = vld [vmem:[#allocation5 + $0x2b8] sm:$0xff]
        %v844 = vld [vmem:[#allocation5 + $0x2c0] sm:$0xff]
        %v845 = vld [vmem:[#allocation5 + $0x2c8] sm:$0xff]
        %v846 = vld [vmem:[#allocation5 + $0x2d0] sm:$0xff]
        %v847 = vld [vmem:[#allocation5 + $0x2d8] sm:$0xff]
        %v848 = vld [vmem:[#allocation5 + $0x2e0] sm:$0xff]
        %v849 = vld [vmem:[#allocation5 + $0x2e8] sm:$0xff]
        %v850 = vld [vmem:[#allocation5 + $0x2f0] sm:$0xff]
        %v851 = vld [vmem:[#allocation5 + $0x2f8] sm:$0xff]
        %v852 = vld [vmem:[#allocation5 + $0x300] sm:$0xff]
        %v853 = vld [vmem:[#allocation5 + $0x308] sm:$0xff]
        %v854 = vld [vmem:[#allocation5 + $0x310] sm:$0xff]
        %v855 = vld [vmem:[#allocation5 + $0x318] sm:$0xff]
        %v856 = vld [vmem:[#allocation5 + $0x320] sm:$0xff]
        %v857 = vld [vmem:[#allocation5 + $0x328] sm:$0xff]
        %v858 = vld [vmem:[#allocation5 + $0x330] sm:$0xff]
        %v859 = vld [vmem:[#allocation5 + $0x338] sm:$0xff]
        %v860 = vld [vmem:[#allocation5 + $0x340] sm:$0xff]
        %v861 = vld [vmem:[#allocation5 + $0x348] sm:$0xff]
        %v862 = vld [vmem:[#allocation5 + $0x350] sm:$0xff]
        %v863 = vld [vmem:[#allocation5 + $0x358] sm:$0xff]
        %v864 = vld [vmem:[#allocation5 + $0x360] sm:$0xff]
        %v865 = vld [vmem:[#allocation5 + $0x368] sm:$0xff]
        %v866 = vld [vmem:[#allocation5 + $0x370] sm:$0xff]
        %v867 = vld [vmem:[#allocation5 + $0x378] sm:$0xff]
        %v868 = vld [vmem:[#allocation5 + $0x380] sm:$0xff]
        %v869 = vld [vmem:[#allocation5 + $0x388] sm:$0xff]
        %v870 = vld [vmem:[#allocation5 + $0x390] sm:$0xff]
        %v871 = vld [vmem:[#allocation5 + $0x398] sm:$0xff]
        %v872 = vld [vmem:[#allocation5 + $0x3a0] sm:$0xff]
        %v873 = vld [vmem:[#allocation5 + $0x3a8] sm:$0xff]
        %v874 = vld [vmem:[#allocation5 + $0x3b0] sm:$0xff]
        %v875 = vld [vmem:[#allocation5 + $0x3b8] sm:$0xff]
        %v876 = vld [vmem:[#allocation5 + $0x3c0] sm:$0xff]
        %v877 = vld [vmem:[#allocation5 + $0x3c8] sm:$0xff]
        %v878 = vld [vmem:[#allocation5 + $0x3d0] sm:$0xff]
        %v879 = vld [vmem:[#allocation5 + $0x3d8] sm:$0xff]
        %v880 = vld [vmem:[#allocation5 + $0x3e0] sm:$0xff]
        %v881 = vld [vmem:[#allocation5 + $0x3e8] sm:$0xff]
        %v882 = vld [vmem:[#allocation5 + $0x3f0] sm:$0xff]
        %v883 = vld [vmem:[#allocation5 + $0x3f8] sm:$0xff]
        %v884 = vld [vmem:[#allocation5 + $0x400] sm:$0xff]
        %v885 = vld [vmem:[#allocation5 + $0x408] sm:$0xff]
        %v886 = vld [vmem:[#allocation5 + $0x410] sm:$0xff]
        %v887 = vld [vmem:[#allocation5 + $0x418] sm:$0xff]
        %v888 = vld [vmem:[#allocation5 + $0x420] sm:$0xff]
        %v889 = vld [vmem:[#allocation5 + $0x428] sm:$0xff]
        %v890 = vld [vmem:[#allocation5 + $0x430] sm:$0xff]
        %v891 = vld [vmem:[#allocation5 + $0x438] sm:$0xff]
        %v892 = vld [vmem:[#allocation5 + $0x440] sm:$0xff]
        %v893 = vld [vmem:[#allocation5 + $0x448] sm:$0xff]
        %v894 = vld [vmem:[#allocation5 + $0x450] sm:$0xff]
        %v895 = vld [vmem:[#allocation5 + $0x458] sm:$0xff]
        %v896 = vld [vmem:[#allocation5 + $0x460] sm:$0xff]
        %v897 = vld [vmem:[#allocation5 + $0x468] sm:$0xff]
        %v898 = vld [vmem:[#allocation5 + $0x470] sm:$0xff]
        %v899 = vld [vmem:[#allocation5 + $0x478] sm:$0xff]
        %v900 = vld [vmem:[#allocation5 + $0x480] sm:$0xff]
        %v901 = vld [vmem:[#allocation5 + $0x488] sm:$0xff]
        %v902 = vld [vmem:[#allocation5 + $0x490] sm:$0xff]
        %v903 = vld [vmem:[#allocation5 + $0x498] sm:$0xff]
        %v904 = vld [vmem:[#allocation5 + $0x4a0] sm:$0xff]
        %v905 = vld [vmem:[#allocation5 + $0x4a8] sm:$0xff]
        %v906 = vld [vmem:[#allocation5 + $0x4b0] sm:$0xff]
        %v907 = vld [vmem:[#allocation5 + $0x4b8] sm:$0xff]
        %v908 = vld [vmem:[#allocation5 + $0x4c0] sm:$0xff]
        %v909 = vld [vmem:[#allocation5 + $0x4c8] sm:$0xff]
        %v910 = vld [vmem:[#allocation5 + $0x4d0] sm:$0xff]
        %v911 = vld [vmem:[#allocation5 + $0x4d8] sm:$0xff]
        %v912 = vld [vmem:[#allocation5 + $0x4e0] sm:$0xff]
        %v913 = vld [vmem:[#allocation5 + $0x4e8] sm:$0xff]
        %v914 = vld [vmem:[#allocation5 + $0x4f0] sm:$0xff]
        %v915 = vld [vmem:[#allocation5 + $0x4f8] sm:$0xff]
        %v916 = vld [vmem:[#allocation5 + $0x500] sm:$0xff]
        %v917 = vld [vmem:[#allocation5 + $0x508] sm:$0xff]
        %v918 = vld [vmem:[#allocation5 + $0x510] sm:$0xff]
        %v919 = vld [vmem:[#allocation5 + $0x518] sm:$0xff]
        %v920 = vld [vmem:[#allocation5 + $0x520] sm:$0xff]
        %v921 = vld [vmem:[#allocation5 + $0x528] sm:$0xff]
        %v922 = vld [vmem:[#allocation5 + $0x530] sm:$0xff]
        %v923 = vld [vmem:[#allocation5 + $0x538] sm:$0xff]
        %v924 = vld [vmem:[#allocation5 + $0x540] sm:$0xff]
        %v925 = vld [vmem:[#allocation5 + $0x548] sm:$0xff]
        %v926 = vld [vmem:[#allocation5 + $0x550] sm:$0xff]
        %v927 = vld [vmem:[#allocation5 + $0x558] sm:$0xff]
        %v928 = vld [vmem:[#allocation5 + $0x560] sm:$0xff]
        %v929 = vld [vmem:[#allocation5 + $0x568] sm:$0xff]
        %v930 = vld [vmem:[#allocation5 + $0x570] sm:$0xff]
        %v931 = vld [vmem:[#allocation5 + $0x578] sm:$0xff]
        %v932 = vld [vmem:[#allocation5 + $0x580] sm:$0xff]
        %v933 = vld [vmem:[#allocation5 + $0x588] sm:$0xff]
        %v934 = vld [vmem:[#allocation5 + $0x590] sm:$0xff]
        %v935 = vld [vmem:[#allocation5 + $0x598] sm:$0xff]
        %v936 = vld [vmem:[#allocation5 + $0x5a0] sm:$0xff]
        %v937 = vld [vmem:[#allocation5 + $0x5a8] sm:$0xff]
        %v938 = vld [vmem:[#allocation5 + $0x5b0] sm:$0xff]
        %v939 = vld [vmem:[#allocation5 + $0x5b8] sm:$0xff]
        %v940 = vld [vmem:[#allocation5 + $0x5c0] sm:$0xff]
        %v941 = vld [vmem:[#allocation5 + $0x5c8] sm:$0xff]
        %v942 = vld [vmem:[#allocation5 + $0x5d0] sm:$0xff]
        %v943 = vld [vmem:[#allocation5 + $0x5d8] sm:$0xff]
        %v944 = vld [vmem:[#allocation5 + $0x5e0] sm:$0xff]
        %v945 = vld [vmem:[#allocation5 + $0x5e8] sm:$0xff]
        %v946 = vld [vmem:[#allocation5 + $0x5f0] sm:$0xff]
        %v947 = vld [vmem:[#allocation5 + $0x5f8] sm:$0xff]
        %v948 = vld [vmem:[#allocation5 + $0x600] sm:$0xff]
        %v949 = vld [vmem:[#allocation5 + $0x608] sm:$0xff]
        %v950 = vld [vmem:[#allocation5 + $0x610] sm:$0xff]
        %v951 = vld [vmem:[#allocation5 + $0x618] sm:$0xff]
        %v952 = vld [vmem:[#allocation5 + $0x620] sm:$0xff]
        %v953 = vld [vmem:[#allocation5 + $0x628] sm:$0xff]
        %v954 = vld [vmem:[#allocation5 + $0x630] sm:$0xff]
        %v955 = vld [vmem:[#allocation5 + $0x638] sm:$0xff]
        %v956 = vld [vmem:[#allocation5 + $0x640] sm:$0xff]
        %v957 = vld [vmem:[#allocation5 + $0x648] sm:$0xff]
        %v958 = vld [vmem:[#allocation5 + $0x650] sm:$0xff]
        %v959 = vld [vmem:[#allocation5 + $0x658] sm:$0xff]
        %v960 = vld [vmem:[#allocation5 + $0x660] sm:$0xff]
        %v961 = vld [vmem:[#allocation5 + $0x668] sm:$0xff]
        %v962 = vld [vmem:[#allocation5 + $0x670] sm:$0xff]
        %v963 = vld [vmem:[#allocation5 + $0x678] sm:$0xff]
        %v964 = vld [vmem:[#allocation5 + $0x680] sm:$0xff]
        %v965 = vld [vmem:[#allocation5 + $0x688] sm:$0xff]
        %v966 = vld [vmem:[#allocation5 + $0x690] sm:$0xff]
        %v967 = vld [vmem:[#allocation5 + $0x698] sm:$0xff]
        %v968 = vld [vmem:[#allocation5 + $0x6a0] sm:$0xff]
        %v969 = vld [vmem:[#allocation5 + $0x6a8] sm:$0xff]
        %v970 = vld [vmem:[#allocation5 + $0x6b0] sm:$0xff]
        %v971 = vld [vmem:[#allocation5 + $0x6b8] sm:$0xff]
        %v972 = vld [vmem:[#allocation5 + $0x6c0] sm:$0xff]
        %v973 = vld [vmem:[#allocation5 + $0x6c8] sm:$0xff]
        %v974 = vld [vmem:[#allocation5 + $0x6d0] sm:$0xff]
        %v975 = vld [vmem:[#allocation5 + $0x6d8] sm:$0xff]
        %v976 = vld [vmem:[#allocation5 + $0x6e0] sm:$0xff]
        %v977 = vld [vmem:[#allocation5 + $0x6e8] sm:$0xff]
        %v978 = vld [vmem:[#allocation5 + $0x6f0] sm:$0xff]
        %v979 = vld [vmem:[#allocation5 + $0x6f8] sm:$0xff]
        %v980 = vld [vmem:[#allocation5 + $0x700] sm:$0xff]
        %v981 = vld [vmem:[#allocation5 + $0x708] sm:$0xff]
        %v982 = vld [vmem:[#allocation5 + $0x710] sm:$0xff]
        %v983 = vld [vmem:[#allocation5 + $0x718] sm:$0xff]
        %v984 = vld [vmem:[#allocation5 + $0x720] sm:$0xff]
        %v985 = vld [vmem:[#allocation5 + $0x728] sm:$0xff]
        %v986 = vld [vmem:[#allocation5 + $0x730] sm:$0xff]
        %v987 = vld [vmem:[#allocation5 + $0x738] sm:$0xff]
        %v988 = vld [vmem:[#allocation5 + $0x740] sm:$0xff]
        %v989 = vld [vmem:[#allocation5 + $0x748] sm:$0xff]
        %v990 = vld [vmem:[#allocation5 + $0x750] sm:$0xff]
        %v991 = vld [vmem:[#allocation5 + $0x758] sm:$0xff]
        %v992 = vld [vmem:[#allocation5 + $0x760] sm:$0xff]
        %v993 = vld [vmem:[#allocation5 + $0x768] sm:$0xff]
        %v994 = vld [vmem:[#allocation5 + $0x770] sm:$0xff]
        %v995 = vld [vmem:[#allocation5 + $0x778] sm:$0xff]
        %v996 = vld [vmem:[#allocation5 + $0x780] sm:$0xff]
        %v997 = vld [vmem:[#allocation5 + $0x788] sm:$0xff]
        %v998 = vld [vmem:[#allocation5 + $0x790] sm:$0xff]
        %v999 = vld [vmem:[#allocation5 + $0x798] sm:$0xff]
        %v1000 = vld [vmem:[#allocation5 + $0x7a0] sm:$0xff]
        %v1001 = vld [vmem:[#allocation5 + $0x7a8] sm:$0xff]
        %v1002 = vld [vmem:[#allocation5 + $0x7b0] sm:$0xff]
        %v1003 = vld [vmem:[#allocation5 + $0x7b8] sm:$0xff]
        %v1004 = vld [vmem:[#allocation5 + $0x7c0] sm:$0xff]
        %v1005 = vld [vmem:[#allocation5 + $0x7c8] sm:$0xff]
        %v1006 = vld [vmem:[#allocation5 + $0x7d0] sm:$0xff]
        %v1007 = vld [vmem:[#allocation5 + $0x7d8] sm:$0xff]
        %v1008 = vld [vmem:[#allocation5 + $0x7e0] sm:$0xff]
        %v1009 = vld [vmem:[#allocation5 + $0x7e8] sm:$0xff]
        %v1010 = vld [vmem:[#allocation5 + $0x7f0] sm:$0xff]
        %v1011 = vld [vmem:[#allocation5 + $0x7f8] sm:$0xff]
        %v1012 = vld [vmem:[#allocation5 + $0x800] sm:$0xff]
        %v1013 = vld [vmem:[#allocation5 + $0x808] sm:$0xff]
        %v1014 = vld [vmem:[#allocation5 + $0x810] sm:$0xff]
        %v1015 = vld [vmem:[#allocation5 + $0x818] sm:$0xff]
        %v1016 = vld [vmem:[#allocation5 + $0x820] sm:$0xff]
        %v1017 = vld [vmem:[#allocation5 + $0x828] sm:$0xff]
        %v1018 = vld [vmem:[#allocation5 + $0x830] sm:$0xff]
        %v1019 = vld [vmem:[#allocation5 + $0x838] sm:$0xff]
        %v1020 = vld [vmem:[#allocation5 + $0x840] sm:$0xff]
        %v1021 = vld [vmem:[#allocation5 + $0x848] sm:$0xff]
        %v1022 = vld [vmem:[#allocation5 + $0x850] sm:$0xff]
        %v1023 = vld [vmem:[#allocation5 + $0x858] sm:$0xff]
        %v1024 = vld [vmem:[#allocation5 + $0x860] sm:$0xff]
        %v1025 = vld [vmem:[#allocation5 + $0x868] sm:$0xff]
        %v1026 = vld [vmem:[#allocation5 + $0x870] sm:$0xff]
        %v1027 = vld [vmem:[#allocation5 + $0x878] sm:$0xff]
        %v1028 = vld [vmem:[#allocation5 + $0x880] sm:$0xff]
        %v1029 = vld [vmem:[#allocation5 + $0x888] sm:$0xff]
        %v1030 = vld [vmem:[#allocation5 + $0x890] sm:$0xff]
        %v1031 = vld [vmem:[#allocation5 + $0x898] sm:$0xff]
        %v1032 = vld [vmem:[#allocation5 + $0x8a0] sm:$0xff]
        %v1033 = vld [vmem:[#allocation5 + $0x8a8] sm:$0xff]
        %v1034 = vld [vmem:[#allocation5 + $0x8b0] sm:$0xff]
        %v1035 = vld [vmem:[#allocation5 + $0x8b8] sm:$0xff]
        %v1036 = vld [vmem:[#allocation5 + $0x8c0] sm:$0xff]
        %v1037 = vld [vmem:[#allocation5 + $0x8c8] sm:$0xff]
        %v1038 = vld [vmem:[#allocation5 + $0x8d0] sm:$0xff]
        %v1039 = vld [vmem:[#allocation5 + $0x8d8] sm:$0xff]
        %v1040 = vld [vmem:[#allocation5 + $0x8e0] sm:$0xff]
        %v1041 = vld [vmem:[#allocation5 + $0x8e8] sm:$0xff]
        %v1042 = vld [vmem:[#allocation5 + $0x8f0] sm:$0xff]
        %v1043 = vld [vmem:[#allocation5 + $0x8f8] sm:$0xff]
        %v1044 = vld [vmem:[#allocation5 + $0x900] sm:$0xff]
        %v1045 = vld [vmem:[#allocation5 + $0x908] sm:$0xff]
        %v1046 = vld [vmem:[#allocation5 + $0x910] sm:$0xff]
        %v1047 = vld [vmem:[#allocation5 + $0x918] sm:$0xff]
        %v1048 = vld [vmem:[#allocation5 + $0x920] sm:$0xff]
        %v1049 = vld [vmem:[#allocation5 + $0x928] sm:$0xff]
        %v1050 = vld [vmem:[#allocation5 + $0x930] sm:$0xff]
        %v1051 = vld [vmem:[#allocation5 + $0x938] sm:$0xff]
        %v1052 = vld [vmem:[#allocation5 + $0x940] sm:$0xff]
        %v1053 = vld [vmem:[#allocation5 + $0x948] sm:$0xff]
        %v1054 = vld [vmem:[#allocation5 + $0x950] sm:$0xff]
        %v1055 = vld [vmem:[#allocation5 + $0x958] sm:$0xff]
        %v1056 = vld [vmem:[#allocation5 + $0x960] sm:$0xff]
        %v1057 = vld [vmem:[#allocation5 + $0x968] sm:$0xff]
        %v1058 = vld [vmem:[#allocation5 + $0x970] sm:$0xff]
        %v1059 = vld [vmem:[#allocation5 + $0x978] sm:$0xff]
        %v1060 = vld [vmem:[#allocation5 + $0x980] sm:$0xff]
        %v1061 = vld [vmem:[#allocation5 + $0x988] sm:$0xff]
        %v1062 = vld [vmem:[#allocation5 + $0x990] sm:$0xff]
        %v1063 = vld [vmem:[#allocation5 + $0x998] sm:$0xff]
        %v1064 = vld [vmem:[#allocation5 + $0x9a0] sm:$0xff]
        %v1065 = vld [vmem:[#allocation5 + $0x9a8] sm:$0xff]
        %v1066 = vld [vmem:[#allocation5 + $0x9b0] sm:$0xff]
        %v1067 = vld [vmem:[#allocation5 + $0x9b8] sm:$0xff]
        %v1068 = vld [vmem:[#allocation5 + $0x9c0] sm:$0xff]
        %v1069 = vld [vmem:[#allocation5 + $0x9c8] sm:$0xff]
        %v1070 = vld [vmem:[#allocation5 + $0x9d0] sm:$0xff]
        %v1071 = vld [vmem:[#allocation5 + $0x9d8] sm:$0xff]
        %v1072 = vld [vmem:[#allocation5 + $0x9e0] sm:$0xff]
        %v1073 = vld [vmem:[#allocation5 + $0x9e8] sm:$0xff]
        %v1074 = vld [vmem:[#allocation5 + $0x9f0] sm:$0xff]
        %v1075 = vld [vmem:[#allocation5 + $0x9f8] sm:$0xff]
        %v1076 = vld [vmem:[#allocation5 + $0xa00] sm:$0xff]
        %v1077 = vld [vmem:[#allocation5 + $0xa08] sm:$0xff]
        %v1078 = vld [vmem:[#allocation5 + $0xa10] sm:$0xff]
        %v1079 = vld [vmem:[#allocation5 + $0xa18] sm:$0xff]
        %v1080 = vld [vmem:[#allocation5 + $0xa20] sm:$0xff]
        %v1081 = vld [vmem:[#allocation5 + $0xa28] sm:$0xff]
        %v1082 = vld [vmem:[#allocation5 + $0xa30] sm:$0xff]
        %v1083 = vld [vmem:[#allocation5 + $0xa38] sm:$0xff]
        %v1084 = vld [vmem:[#allocation5 + $0xa40] sm:$0xff]
        %v1085 = vld [vmem:[#allocation5 + $0xa48] sm:$0xff]
        %v1086 = vld [vmem:[#allocation5 + $0xa50] sm:$0xff]
        %v1087 = vld [vmem:[#allocation5 + $0xa58] sm:$0xff]
        %v1088 = vld [vmem:[#allocation5 + $0xa60] sm:$0xff]
        %v1089 = vld [vmem:[#allocation5 + $0xa68] sm:$0xff]
        %v1090 = vld [vmem:[#allocation5 + $0xa70] sm:$0xff]
        %v1091 = vld [vmem:[#allocation5 + $0xa78] sm:$0xff]
        %v1092 = vld [vmem:[#allocation5 + $0xa80] sm:$0xff]
        %v1093 = vld [vmem:[#allocation5 + $0xa88] sm:$0xff]
        %v1094 = vld [vmem:[#allocation5 + $0xa90] sm:$0xff]
        %v1095 = vld [vmem:[#allocation5 + $0xa98] sm:$0xff]
        %v1096 = vld [vmem:[#allocation5 + $0xaa0] sm:$0xff]
        %v1097 = vld [vmem:[#allocation5 + $0xaa8] sm:$0xff]
        %v1098 = vld [vmem:[#allocation5 + $0xab0] sm:$0xff]
        %v1099 = vld [vmem:[#allocation5 + $0xab8] sm:$0xff]
        %v1100 = vld [vmem:[#allocation5 + $0xac0] sm:$0xff]
        %v1101 = vld [vmem:[#allocation5 + $0xac8] sm:$0xff]
        %v1102 = vld [vmem:[#allocation5 + $0xad0] sm:$0xff]
        %v1103 = vld [vmem:[#allocation5 + $0xad8] sm:$0xff]
        %v1104 = vld [vmem:[#allocation5 + $0xae0] sm:$0xff]
        %v1105 = vld [vmem:[#allocation5 + $0xae8] sm:$0xff]
        %v1106 = vld [vmem:[#allocation5 + $0xaf0] sm:$0xff]
        %v1107 = vld [vmem:[#allocation5 + $0xaf8] sm:$0xff]
        %v1108 = vld [vmem:[#allocation5 + $0xb00] sm:$0xff]
        %v1109 = vld [vmem:[#allocation5 + $0xb08] sm:$0xff]
        %v1110 = vld [vmem:[#allocation5 + $0xb10] sm:$0xff]
        %v1111 = vld [vmem:[#allocation5 + $0xb18] sm:$0xff]
        %v1112 = vld [vmem:[#allocation5 + $0xb20] sm:$0xff]
        %v1113 = vld [vmem:[#allocation5 + $0xb28] sm:$0xff]
        %v1114 = vld [vmem:[#allocation5 + $0xb30] sm:$0xff]
        %v1115 = vld [vmem:[#allocation5 + $0xb38] sm:$0xff]
        %v1116 = vld [vmem:[#allocation5 + $0xb40] sm:$0xff]
        %v1117 = vld [vmem:[#allocation5 + $0xb48] sm:$0xff]
        %v1118 = vld [vmem:[#allocation5 + $0xb50] sm:$0xff]
        %v1119 = vld [vmem:[#allocation5 + $0xb58] sm:$0xff]
        %v1120 = vld [vmem:[#allocation5 + $0xb60] sm:$0xff]
        %v1121 = vld [vmem:[#allocation5 + $0xb68] sm:$0xff]
        %v1122 = vld [vmem:[#allocation5 + $0xb70] sm:$0xff]
        %v1123 = vld [vmem:[#allocation5 + $0xb78] sm:$0xff]
        %v1124 = vld [vmem:[#allocation5 + $0xb80] sm:$0xff]
        %v1125 = vld [vmem:[#allocation5 + $0xb88] sm:$0xff]
        %v1126 = vld [vmem:[#allocation5 + $0xb90] sm:$0xff]
        %v1127 = vld [vmem:[#allocation5 + $0xb98] sm:$0xff]
        %v1128 = vld [vmem:[#allocation5 + $0xba0] sm:$0xff]
        %v1129 = vld [vmem:[#allocation5 + $0xba8] sm:$0xff]
        %v1130 = vld [vmem:[#allocation5 + $0xbb0] sm:$0xff]
        %v1131 = vld [vmem:[#allocation5 + $0xbb8] sm:$0xff]
        %v1132 = vld [vmem:[#allocation5 + $0xbc0] sm:$0xff]
        %v1133 = vld [vmem:[#allocation5 + $0xbc8] sm:$0xff]
        %v1134 = vld [vmem:[#allocation5 + $0xbd0] sm:$0xff]
        %v1135 = vld [vmem:[#allocation5 + $0xbd8] sm:$0xff]
        %v1136 = vld [vmem:[#allocation5 + $0xbe0] sm:$0xff]
        %v1137 = vld [vmem:[#allocation5 + $0xbe8] sm:$0xff]
        %v1138 = vld [vmem:[#allocation5 + $0xbf0] sm:$0xff]
        %v1139 = vld [vmem:[#allocation5 + $0xbf8] sm:$0xff]
        %v1140 = vld [vmem:[#allocation5 + $0xc00] sm:$0xff]
        %v1141 = vld [vmem:[#allocation5 + $0xc08] sm:$0xff]
        %v1142 = vld [vmem:[#allocation5 + $0xc10] sm:$0xff]
        %v1143 = vld [vmem:[#allocation5 + $0xc18] sm:$0xff]
        %v1144 = vld [vmem:[#allocation5 + $0xc20] sm:$0xff]
        %v1145 = vld [vmem:[#allocation5 + $0xc28] sm:$0xff]
        %v1146 = vld [vmem:[#allocation5 + $0xc30] sm:$0xff]
        %v1147 = vld [vmem:[#allocation5 + $0xc38] sm:$0xff]
        %v1148 = vld [vmem:[#allocation5 + $0xc40] sm:$0xff]
        %v1149 = vld [vmem:[#allocation5 + $0xc48] sm:$0xff]
        %v1150 = vld [vmem:[#allocation5 + $0xc50] sm:$0xff]
        %v1151 = vld [vmem:[#allocation5 + $0xc58] sm:$0xff]
        %v1152 = vld [vmem:[#allocation5 + $0xc60] sm:$0xff]
        %v1153 = vld [vmem:[#allocation5 + $0xc68] sm:$0xff]
        %v1154 = vld [vmem:[#allocation5 + $0xc70] sm:$0xff]
        %v1155 = vld [vmem:[#allocation5 + $0xc78] sm:$0xff]
        %v1156 = vld [vmem:[#allocation5 + $0xc80] sm:$0xff]
        %v1157 = vld [vmem:[#allocation5 + $0xc88] sm:$0xff]
        %v1158 = vld [vmem:[#allocation5 + $0xc90] sm:$0xff]
        %v1159 = vld [vmem:[#allocation5 + $0xc98] sm:$0xff]
        %v1160 = vld [vmem:[#allocation5 + $0xca0] sm:$0xff]
        %v1161 = vld [vmem:[#allocation5 + $0xca8] sm:$0xff]
        %v1162 = vld [vmem:[#allocation5 + $0xcb0] sm:$0xff]
        %v1163 = vld [vmem:[#allocation5 + $0xcb8] sm:$0xff]
        %v1164 = vld [vmem:[#allocation5 + $0xcc0] sm:$0xff]
        %v1165 = vld [vmem:[#allocation5 + $0xcc8] sm:$0xff]
        %v1166 = vld [vmem:[#allocation5 + $0xcd0] sm:$0xff]
        %v1167 = vld [vmem:[#allocation5 + $0xcd8] sm:$0xff]
        %v1168 = vld [vmem:[#allocation5 + $0xce0] sm:$0xff]
        %v1169 = vld [vmem:[#allocation5 + $0xce8] sm:$0xff]
        %v1170 = vld [vmem:[#allocation5 + $0xcf0] sm:$0xff]
        %v1171 = vld [vmem:[#allocation5 + $0xcf8] sm:$0xff]
        %v1172 = vld [vmem:[#allocation5 + $0xd00] sm:$0xff]
        %v1173 = vld [vmem:[#allocation5 + $0xd08] sm:$0xff]
        %v1174 = vld [vmem:[#allocation5 + $0xd10] sm:$0xff]
        %v1175 = vld [vmem:[#allocation5 + $0xd18] sm:$0xff]
        %v1176 = vld [vmem:[#allocation5 + $0xd20] sm:$0xff]
        %v1177 = vld [vmem:[#allocation5 + $0xd28] sm:$0xff]
        %v1178 = vld [vmem:[#allocation5 + $0xd30] sm:$0xff]
        %v1179 = vld [vmem:[#allocation5 + $0xd38] sm:$0xff]
        %v1180 = vld [vmem:[#allocation5 + $0xd40] sm:$0xff]
        %v1181 = vld [vmem:[#allocation5 + $0xd48] sm:$0xff]
        %v1182 = vld [vmem:[#allocation5 + $0xd50] sm:$0xff]
        %v1183 = vld [vmem:[#allocation5 + $0xd58] sm:$0xff]
        %v1184 = vld [vmem:[#allocation5 + $0xd60] sm:$0xff]
        %v1185 = vld [vmem:[#allocation5 + $0xd68] sm:$0xff]
        %v1186 = vld [vmem:[#allocation5 + $0xd70] sm:$0xff]
        %v1187 = vld [vmem:[#allocation5 + $0xd78] sm:$0xff]
        %v1188 = vld [vmem:[#allocation5 + $0xd80] sm:$0xff]
        %v1189 = vld [vmem:[#allocation5 + $0xd88] sm:$0xff]
        %v1190 = vld [vmem:[#allocation5 + $0xd90] sm:$0xff]
        %v1191 = vld [vmem:[#allocation5 + $0xd98] sm:$0xff]
        %v1192 = vld [vmem:[#allocation5 + $0xda0] sm:$0xff]
        %v1193 = vld [vmem:[#allocation5 + $0xda8] sm:$0xff]
        %v1194 = vld [vmem:[#allocation5 + $0xdb0] sm:$0xff]
        %v1195 = vld [vmem:[#allocation5 + $0xdb8] sm:$0xff]
        %v1196 = vld [vmem:[#allocation5 + $0xdc0] sm:$0xff]
        %v1197 = vld [vmem:[#allocation5 + $0xdc8] sm:$0xff]
        %v1198 = vld [vmem:[#allocation5 + $0xdd0] sm:$0xff]
        %v1199 = vld [vmem:[#allocation5 + $0xdd8] sm:$0xff]
        %v1200 = vld [vmem:[#allocation5 + $0xde0] sm:$0xff]
        %v1201 = vld [vmem:[#allocation5 + $0xde8] sm:$0xff]
        %v1202 = vld [vmem:[#allocation5 + $0xdf0] sm:$0xff]
        %v1203 = vld [vmem:[#allocation5 + $0xdf8] sm:$0xff]
        %v1204 = vld [vmem:[#allocation5 + $0xe00] sm:$0xff]
        %v1205 = vld [vmem:[#allocation5 + $0xe08] sm:$0xff]
        %v1206 = vld [vmem:[#allocation5 + $0xe10] sm:$0xff]
        %v1207 = vld [vmem:[#allocation5 + $0xe18] sm:$0xff]
        %v1208 = vld [vmem:[#allocation5 + $0xe20] sm:$0xff]
        %v1209 = vld [vmem:[#allocation5 + $0xe28] sm:$0xff]
        %v1210 = vld [vmem:[#allocation5 + $0xe30] sm:$0xff]
        %v1211 = vld [vmem:[#allocation5 + $0xe38] sm:$0xff]
        %v1212 = vld [vmem:[#allocation5 + $0xe40] sm:$0xff]
        %v1213 = vld [vmem:[#allocation5 + $0xe48] sm:$0xff]
        %v1214 = vld [vmem:[#allocation5 + $0xe50] sm:$0xff]
        %v1215 = vld [vmem:[#allocation5 + $0xe58] sm:$0xff]
        %v1216 = vld [vmem:[#allocation5 + $0xe60] sm:$0xff]
        %v1217 = vld [vmem:[#allocation5 + $0xe68] sm:$0xff]
        %v1218 = vld [vmem:[#allocation5 + $0xe70] sm:$0xff]
        %v1219 = vld [vmem:[#allocation5 + $0xe78] sm:$0xff]
        %v1220 = vld [vmem:[#allocation5 + $0xe80] sm:$0xff]
        %v1221 = vld [vmem:[#allocation5 + $0xe88] sm:$0xff]
        %v1222 = vld [vmem:[#allocation5 + $0xe90] sm:$0xff]
        %v1223 = vld [vmem:[#allocation5 + $0xe98] sm:$0xff]
        %v1224 = vld [vmem:[#allocation5 + $0xea0] sm:$0xff]
        %v1225 = vld [vmem:[#allocation5 + $0xea8] sm:$0xff]
        %v1226 = vld [vmem:[#allocation5 + $0xeb0] sm:$0xff]
        %v1227 = vld [vmem:[#allocation5 + $0xeb8] sm:$0xff]
        %v1228 = vld [vmem:[#allocation5 + $0xec0] sm:$0xff]
        %v1229 = vld [vmem:[#allocation5 + $0xec8] sm:$0xff]
        %v1230 = vld [vmem:[#allocation5 + $0xed0] sm:$0xff]
        %v1231 = vld [vmem:[#allocation5 + $0xed8] sm:$0xff]
        %v1232 = vld [vmem:[#allocation5 + $0xee0] sm:$0xff]
        %v1233 = vld [vmem:[#allocation5 + $0xee8] sm:$0xff]
        %v1234 = vld [vmem:[#allocation5 + $0xef0] sm:$0xff]
        %v1235 = vld [vmem:[#allocation5 + $0xef8] sm:$0xff]
        %v1236 = vld [vmem:[#allocation5 + $0xf00] sm:$0xff]
        %v1237 = vld [vmem:[#allocation5 + $0xf08] sm:$0xff]
        %v1238 = vld [vmem:[#allocation5 + $0xf10] sm:$0xff]
        %v1239 = vld [vmem:[#allocation5 + $0xf18] sm:$0xff]
        %v1240 = vld [vmem:[#allocation5 + $0xf20] sm:$0xff]
        %v1241 = vld [vmem:[#allocation5 + $0xf28] sm:$0xff]
        %v1242 = vld [vmem:[#allocation5 + $0xf30] sm:$0xff]
        %v1243 = vld [vmem:[#allocation5 + $0xf38] sm:$0xff]
        %v1244 = vld [vmem:[#allocation5 + $0xf40] sm:$0xff]
        %v1245 = vld [vmem:[#allocation5 + $0xf48] sm:$0xff]
        %v1246 = vld [vmem:[#allocation5 + $0xf50] sm:$0xff]
        %v1247 = vld [vmem:[#allocation5 + $0xf58] sm:$0xff]
        %v1248 = vld [vmem:[#allocation5 + $0xf60] sm:$0xff]
        %v1249 = vld [vmem:[#allocation5 + $0xf68] sm:$0xff]
        %v1250 = vld [vmem:[#allocation5 + $0xf70] sm:$0xff]
        %v1251 = vld [vmem:[#allocation5 + $0xf78] sm:$0xff]
        %v1252 = vld [vmem:[#allocation5 + $0xf80] sm:$0xff]
        %v1253 = vld [vmem:[#allocation5 + $0xf88] sm:$0xff]
        %v1254 = vld [vmem:[#allocation5 + $0xf90] sm:$0xff]
        %v1255 = vld [vmem:[#allocation5 + $0xf98] sm:$0xff]
        %v1256 = vld [vmem:[#allocation5 + $0xfa0] sm:$0xff]
        %v1257 = vld [vmem:[#allocation5 + $0xfa8] sm:$0xff]
        %v1258 = vld [vmem:[#allocation5 + $0xfb0] sm:$0xff]
        %v1259 = vld [vmem:[#allocation5 + $0xfb8] sm:$0xff]
        %v1260 = vld [vmem:[#allocation5 + $0xfc0] sm:$0xff]
        %v1261 = vld [vmem:[#allocation5 + $0xfc8] sm:$0xff]
        %v1262 = vld [vmem:[#allocation5 + $0xfd0] sm:$0xff]
        %v1263 = vld [vmem:[#allocation5 + $0xfd8] sm:$0xff]
        %v1264 = vld [vmem:[#allocation5 + $0xfe0] sm:$0xff]
        %v1265 = vld [vmem:[#allocation5 + $0xfe8] sm:$0xff]
        %v1266 = vld [vmem:[#allocation5 + $0xff0] sm:$0xff]
        %v1267 = vld [vmem:[#allocation5 + $0xff8] sm:$0xff]
        %v1268 = vld [vmem:[#allocation7] sm:$0xf]
        %v1270 = vperm.slane %v1268, 0
        %v1271 = vperm.slane %v1268, 1
        %v1272 = vperm.slane %v1268, 2
        %v1273 = vperm.slane %v1268, 3
        %v1294 = vunpack.c.l.b16 %v740
        %v1295 = vunpack.c.h.b16 %v740
        %v1296 = vunpack.c.l.b16 %v741
        %v1297 = vunpack.c.h.b16 %v741
        %v1298 = vunpack.c.l.b16 %v742
        %v1299 = vunpack.c.h.b16 %v742
        %v1300 = vunpack.c.l.b16 %v743
        %v1301 = vunpack.c.h.b16 %v743
        %v1302 = vunpack.c.l.b16 %v744
        %v1303 = vunpack.c.h.b16 %v744
        %v1304 = vunpack.c.l.b16 %v745
        %v1305 = vunpack.c.h.b16 %v745
        %v1306 = vunpack.c.l.b16 %v746
        %v1307 = vunpack.c.h.b16 %v746
        %v1308 = vunpack.c.l.b16 %v747
        %v1309 = vunpack.c.h.b16 %v747
        %v1310 = vunpack.c.l.b16 %v748
        %v1311 = vunpack.c.h.b16 %v748
        %v1312 = vunpack.c.l.b16 %v749
        %v1313 = vunpack.c.h.b16 %v749
        %v1314 = vunpack.c.l.b16 %v750
        %v1315 = vunpack.c.h.b16 %v750
        %v1316 = vunpack.c.l.b16 %v751
        %v1317 = vunpack.c.h.b16 %v751
        %v1318 = vunpack.c.l.b16 %v752
        %v1319 = vunpack.c.h.b16 %v752
        %v1320 = vunpack.c.l.b16 %v753
        %v1321 = vunpack.c.h.b16 %v753
        %v1322 = vunpack.c.l.b16 %v754
        %v1323 = vunpack.c.h.b16 %v754
        %v1324 = vunpack.c.l.b16 %v755
        %v1325 = vunpack.c.h.b16 %v755
        %v1326 = vpack.c.b16 %v1310, %v1294
        %v1327 = vpack.c.b16 %v1311, %v1295
        %v1328 = vpack.c.b16 %v1312, %v1296
        %v1329 = vpack.c.b16 %v1313, %v1297
        %v1330 = vpack.c.b16 %v1314, %v1298
        %v1331 = vpack.c.b16 %v1315, %v1299
        %v1332 = vpack.c.b16 %v1316, %v1300
        %v1333 = vpack.c.b16 %v1317, %v1301
        %v1334 = vpack.c.b16 %v1318, %v1302
        %v1335 = vpack.c.b16 %v1319, %v1303
        %v1336 = vpack.c.b16 %v1320, %v1304
        %v1337 = vpack.c.b16 %v1321, %v1305
        %v1338 = vpack.c.b16 %v1322, %v1306
        %v1339 = vpack.c.b16 %v1323, %v1307
        %v1340 = vpack.c.b16 %v1324, %v1308
        %v1341 = vpack.c.b16 %v1325, %v1309
        %v1870 = vunpack.c.l.b16 %v756
        %v1871 = vunpack.c.h.b16 %v756
        %v1872 = vunpack.c.l.b16 %v757
        %v1873 = vunpack.c.h.b16 %v757
        %v1874 = vunpack.c.l.b16 %v758
        %v1875 = vunpack.c.h.b16 %v758
        %v1876 = vunpack.c.l.b16 %v759
        %v1877 = vunpack.c.h.b16 %v759
        %v1878 = vunpack.c.l.b16 %v760
        %v1879 = vunpack.c.h.b16 %v760
        %v1880 = vunpack.c.l.b16 %v761
        %v1881 = vunpack.c.h.b16 %v761
        %v1882 = vunpack.c.l.b16 %v762
        %v1883 = vunpack.c.h.b16 %v762
        %v1884 = vunpack.c.l.b16 %v763
        %v1885 = vunpack.c.h.b16 %v763
        %v1886 = vunpack.c.l.b16 %v764
        %v1887 = vunpack.c.h.b16 %v764
        %v1888 = vunpack.c.l.b16 %v765
        %v1889 = vunpack.c.h.b16 %v765
        %v1890 = vunpack.c.l.b16 %v766
        %v1891 = vunpack.c.h.b16 %v766
        %v1892 = vunpack.c.l.b16 %v767
        %v1893 = vunpack.c.h.b16 %v767
        %v1894 = vunpack.c.l.b16 %v768
        %v1895 = vunpack.c.h.b16 %v768
        %v1896 = vunpack.c.l.b16 %v769
        %v1897 = vunpack.c.h.b16 %v769
        %v1898 = vunpack.c.l.b16 %v770
        %v1899 = vunpack.c.h.b16 %v770
        %v1900 = vunpack.c.l.b16 %v771
        %v1901 = vunpack.c.h.b16 %v771
        %v1902 = vunpack.c.l.b16 %v772
        %v1903 = vunpack.c.h.b16 %v772
        %v1904 = vunpack.c.l.b16 %v773
        %v1905 = vunpack.c.h.b16 %v773
        %v1906 = vunpack.c.l.b16 %v774
        %v1907 = vunpack.c.h.b16 %v774
        %v1908 = vunpack.c.l.b16 %v775
        %v1909 = vunpack.c.h.b16 %v775
        %v1910 = vunpack.c.l.b16 %v776
        %v1911 = vunpack.c.h.b16 %v776
        %v1912 = vunpack.c.l.b16 %v777
        %v1913 = vunpack.c.h.b16 %v777
        %v1914 = vunpack.c.l.b16 %v778
        %v1915 = vunpack.c.h.b16 %v778
        %v1916 = vunpack.c.l.b16 %v779
        %v1917 = vunpack.c.h.b16 %v779
        %v1918 = vunpack.c.l.b16 %v780
        %v1919 = vunpack.c.h.b16 %v780
        %v1920 = vunpack.c.l.b16 %v781
        %v1921 = vunpack.c.h.b16 %v781
        %v1922 = vunpack.c.l.b16 %v782
        %v1923 = vunpack.c.h.b16 %v782
        %v1924 = vunpack.c.l.b16 %v783
        %v1925 = vunpack.c.h.b16 %v783
        %v1926 = vunpack.c.l.b16 %v784
        %v1927 = vunpack.c.h.b16 %v784
        %v1928 = vunpack.c.l.b16 %v785
        %v1929 = vunpack.c.h.b16 %v785
        %v1930 = vunpack.c.l.b16 %v786
        %v1931 = vunpack.c.h.b16 %v786
        %v1932 = vunpack.c.l.b16 %v787
        %v1933 = vunpack.c.h.b16 %v787
        %v1934 = vunpack.c.l.b16 %v788
        %v1935 = vunpack.c.h.b16 %v788
        %v1936 = vunpack.c.l.b16 %v789
        %v1937 = vunpack.c.h.b16 %v789
        %v1938 = vunpack.c.l.b16 %v790
        %v1939 = vunpack.c.h.b16 %v790
        %v1940 = vunpack.c.l.b16 %v791
        %v1941 = vunpack.c.h.b16 %v791
        %v1942 = vunpack.c.l.b16 %v792
        %v1943 = vunpack.c.h.b16 %v792
        %v1944 = vunpack.c.l.b16 %v793
        %v1945 = vunpack.c.h.b16 %v793
        %v1946 = vunpack.c.l.b16 %v794
        %v1947 = vunpack.c.h.b16 %v794
        %v1948 = vunpack.c.l.b16 %v795
        %v1949 = vunpack.c.h.b16 %v795
        %v1950 = vunpack.c.l.b16 %v796
        %v1951 = vunpack.c.h.b16 %v796
        %v1952 = vunpack.c.l.b16 %v797
        %v1953 = vunpack.c.h.b16 %v797
        %v1954 = vunpack.c.l.b16 %v798
        %v1955 = vunpack.c.h.b16 %v798
        %v1956 = vunpack.c.l.b16 %v799
        %v1957 = vunpack.c.h.b16 %v799
        %v1958 = vunpack.c.l.b16 %v800
        %v1959 = vunpack.c.h.b16 %v800
        %v1960 = vunpack.c.l.b16 %v801
        %v1961 = vunpack.c.h.b16 %v801
        %v1962 = vunpack.c.l.b16 %v802
        %v1963 = vunpack.c.h.b16 %v802
        %v1964 = vunpack.c.l.b16 %v803
        %v1965 = vunpack.c.h.b16 %v803
        %v1966 = vunpack.c.l.b16 %v804
        %v1967 = vunpack.c.h.b16 %v804
        %v1968 = vunpack.c.l.b16 %v805
        %v1969 = vunpack.c.h.b16 %v805
        %v1970 = vunpack.c.l.b16 %v806
        %v1971 = vunpack.c.h.b16 %v806
        %v1972 = vunpack.c.l.b16 %v807
        %v1973 = vunpack.c.h.b16 %v807
        %v1974 = vunpack.c.l.b16 %v808
        %v1975 = vunpack.c.h.b16 %v808
        %v1976 = vunpack.c.l.b16 %v809
        %v1977 = vunpack.c.h.b16 %v809
        %v1978 = vunpack.c.l.b16 %v810
        %v1979 = vunpack.c.h.b16 %v810
        %v1980 = vunpack.c.l.b16 %v811
        %v1981 = vunpack.c.h.b16 %v811
        %v1982 = vunpack.c.l.b16 %v812
        %v1983 = vunpack.c.h.b16 %v812
        %v1984 = vunpack.c.l.b16 %v813
        %v1985 = vunpack.c.h.b16 %v813
        %v1986 = vunpack.c.l.b16 %v814
        %v1987 = vunpack.c.h.b16 %v814
        %v1988 = vunpack.c.l.b16 %v815
        %v1989 = vunpack.c.h.b16 %v815
        %v1990 = vunpack.c.l.b16 %v816
        %v1991 = vunpack.c.h.b16 %v816
        %v1992 = vunpack.c.l.b16 %v817
        %v1993 = vunpack.c.h.b16 %v817
        %v1994 = vunpack.c.l.b16 %v818
        %v1995 = vunpack.c.h.b16 %v818
        %v1996 = vunpack.c.l.b16 %v819
        %v1997 = vunpack.c.h.b16 %v819
        %v1998 = vunpack.c.l.b16 %v820
        %v1999 = vunpack.c.h.b16 %v820
        %v2000 = vunpack.c.l.b16 %v821
        %v2001 = vunpack.c.h.b16 %v821
        %v2002 = vunpack.c.l.b16 %v822
        %v2003 = vunpack.c.h.b16 %v822
        %v2004 = vunpack.c.l.b16 %v823
        %v2005 = vunpack.c.h.b16 %v823
        %v2006 = vunpack.c.l.b16 %v824
        %v2007 = vunpack.c.h.b16 %v824
        %v2008 = vunpack.c.l.b16 %v825
        %v2009 = vunpack.c.h.b16 %v825
        %v2010 = vunpack.c.l.b16 %v826
        %v2011 = vunpack.c.h.b16 %v826
        %v2012 = vunpack.c.l.b16 %v827
        %v2013 = vunpack.c.h.b16 %v827
        %v2014 = vunpack.c.l.b16 %v828
        %v2015 = vunpack.c.h.b16 %v828
        %v2016 = vunpack.c.l.b16 %v829
        %v2017 = vunpack.c.h.b16 %v829
        %v2018 = vunpack.c.l.b16 %v830
        %v2019 = vunpack.c.h.b16 %v830
        %v2020 = vunpack.c.l.b16 %v831
        %v2021 = vunpack.c.h.b16 %v831
        %v2022 = vunpack.c.l.b16 %v832
        %v2023 = vunpack.c.h.b16 %v832
        %v2024 = vunpack.c.l.b16 %v833
        %v2025 = vunpack.c.h.b16 %v833
        %v2026 = vunpack.c.l.b16 %v834
        %v2027 = vunpack.c.h.b16 %v834
        %v2028 = vunpack.c.l.b16 %v835
        %v2029 = vunpack.c.h.b16 %v835
        %v2030 = vunpack.c.l.b16 %v836
        %v2031 = vunpack.c.h.b16 %v836
        %v2032 = vunpack.c.l.b16 %v837
        %v2033 = vunpack.c.h.b16 %v837
        %v2034 = vunpack.c.l.b16 %v838
        %v2035 = vunpack.c.h.b16 %v838
        %v2036 = vunpack.c.l.b16 %v839
        %v2037 = vunpack.c.h.b16 %v839
        %v2038 = vunpack.c.l.b16 %v840
        %v2039 = vunpack.c.h.b16 %v840
        %v2040 = vunpack.c.l.b16 %v841
        %v2041 = vunpack.c.h.b16 %v841
        %v2042 = vunpack.c.l.b16 %v842
        %v2043 = vunpack.c.h.b16 %v842
        %v2044 = vunpack.c.l.b16 %v843
        %v2045 = vunpack.c.h.b16 %v843
        %v2046 = vunpack.c.l.b16 %v844
        %v2047 = vunpack.c.h.b16 %v844
        %v2048 = vunpack.c.l.b16 %v845
        %v2049 = vunpack.c.h.b16 %v845
        %v2050 = vunpack.c.l.b16 %v846
        %v2051 = vunpack.c.h.b16 %v846
        %v2052 = vunpack.c.l.b16 %v847
        %v2053 = vunpack.c.h.b16 %v847
        %v2054 = vunpack.c.l.b16 %v848
        %v2055 = vunpack.c.h.b16 %v848
        %v2056 = vunpack.c.l.b16 %v849
        %v2057 = vunpack.c.h.b16 %v849
        %v2058 = vunpack.c.l.b16 %v850
        %v2059 = vunpack.c.h.b16 %v850
        %v2060 = vunpack.c.l.b16 %v851
        %v2061 = vunpack.c.h.b16 %v851
        %v2062 = vunpack.c.l.b16 %v852
        %v2063 = vunpack.c.h.b16 %v852
        %v2064 = vunpack.c.l.b16 %v853
        %v2065 = vunpack.c.h.b16 %v853
        %v2066 = vunpack.c.l.b16 %v854
        %v2067 = vunpack.c.h.b16 %v854
        %v2068 = vunpack.c.l.b16 %v855
        %v2069 = vunpack.c.h.b16 %v855
        %v2070 = vunpack.c.l.b16 %v856
        %v2071 = vunpack.c.h.b16 %v856
        %v2072 = vunpack.c.l.b16 %v857
        %v2073 = vunpack.c.h.b16 %v857
        %v2074 = vunpack.c.l.b16 %v858
        %v2075 = vunpack.c.h.b16 %v858
        %v2076 = vunpack.c.l.b16 %v859
        %v2077 = vunpack.c.h.b16 %v859
        %v2078 = vunpack.c.l.b16 %v860
        %v2079 = vunpack.c.h.b16 %v860
        %v2080 = vunpack.c.l.b16 %v861
        %v2081 = vunpack.c.h.b16 %v861
        %v2082 = vunpack.c.l.b16 %v862
        %v2083 = vunpack.c.h.b16 %v862
        %v2084 = vunpack.c.l.b16 %v863
        %v2085 = vunpack.c.h.b16 %v863
        %v2086 = vunpack.c.l.b16 %v864
        %v2087 = vunpack.c.h.b16 %v864
        %v2088 = vunpack.c.l.b16 %v865
        %v2089 = vunpack.c.h.b16 %v865
        %v2090 = vunpack.c.l.b16 %v866
        %v2091 = vunpack.c.h.b16 %v866
        %v2092 = vunpack.c.l.b16 %v867
        %v2093 = vunpack.c.h.b16 %v867
        %v2094 = vunpack.c.l.b16 %v868
        %v2095 = vunpack.c.h.b16 %v868
        %v2096 = vunpack.c.l.b16 %v869
        %v2097 = vunpack.c.h.b16 %v869
        %v2098 = vunpack.c.l.b16 %v870
        %v2099 = vunpack.c.h.b16 %v870
        %v2100 = vunpack.c.l.b16 %v871
        %v2101 = vunpack.c.h.b16 %v871
        %v2102 = vunpack.c.l.b16 %v872
        %v2103 = vunpack.c.h.b16 %v872
        %v2104 = vunpack.c.l.b16 %v873
        %v2105 = vunpack.c.h.b16 %v873
        %v2106 = vunpack.c.l.b16 %v874
        %v2107 = vunpack.c.h.b16 %v874
        %v2108 = vunpack.c.l.b16 %v875
        %v2109 = vunpack.c.h.b16 %v875
        %v2110 = vunpack.c.l.b16 %v876
        %v2111 = vunpack.c.h.b16 %v876
        %v2112 = vunpack.c.l.b16 %v877
        %v2113 = vunpack.c.h.b16 %v877
        %v2114 = vunpack.c.l.b16 %v878
        %v2115 = vunpack.c.h.b16 %v878
        %v2116 = vunpack.c.l.b16 %v879
        %v2117 = vunpack.c.h.b16 %v879
        %v2118 = vunpack.c.l.b16 %v880
        %v2119 = vunpack.c.h.b16 %v880
        %v2120 = vunpack.c.l.b16 %v881
        %v2121 = vunpack.c.h.b16 %v881
        %v2122 = vunpack.c.l.b16 %v882
        %v2123 = vunpack.c.h.b16 %v882
        %v2124 = vunpack.c.l.b16 %v883
        %v2125 = vunpack.c.h.b16 %v883
        %v2126 = vunpack.c.l.b16 %v884
        %v2127 = vunpack.c.h.b16 %v884
        %v2128 = vunpack.c.l.b16 %v885
        %v2129 = vunpack.c.h.b16 %v885
        %v2130 = vunpack.c.l.b16 %v886
        %v2131 = vunpack.c.h.b16 %v886
        %v2132 = vunpack.c.l.b16 %v887
        %v2133 = vunpack.c.h.b16 %v887
        %v2134 = vunpack.c.l.b16 %v888
        %v2135 = vunpack.c.h.b16 %v888
        %v2136 = vunpack.c.l.b16 %v889
        %v2137 = vunpack.c.h.b16 %v889
        %v2138 = vunpack.c.l.b16 %v890
        %v2139 = vunpack.c.h.b16 %v890
        %v2140 = vunpack.c.l.b16 %v891
        %v2141 = vunpack.c.h.b16 %v891
        %v2142 = vunpack.c.l.b16 %v892
        %v2143 = vunpack.c.h.b16 %v892
        %v2144 = vunpack.c.l.b16 %v893
        %v2145 = vunpack.c.h.b16 %v893
        %v2146 = vunpack.c.l.b16 %v894
        %v2147 = vunpack.c.h.b16 %v894
        %v2148 = vunpack.c.l.b16 %v895
        %v2149 = vunpack.c.h.b16 %v895
        %v2150 = vunpack.c.l.b16 %v896
        %v2151 = vunpack.c.h.b16 %v896
        %v2152 = vunpack.c.l.b16 %v897
        %v2153 = vunpack.c.h.b16 %v897
        %v2154 = vunpack.c.l.b16 %v898
        %v2155 = vunpack.c.h.b16 %v898
        %v2156 = vunpack.c.l.b16 %v899
        %v2157 = vunpack.c.h.b16 %v899
        %v2158 = vunpack.c.l.b16 %v900
        %v2159 = vunpack.c.h.b16 %v900
        %v2160 = vunpack.c.l.b16 %v901
        %v2161 = vunpack.c.h.b16 %v901
        %v2162 = vunpack.c.l.b16 %v902
        %v2163 = vunpack.c.h.b16 %v902
        %v2164 = vunpack.c.l.b16 %v903
        %v2165 = vunpack.c.h.b16 %v903
        %v2166 = vunpack.c.l.b16 %v904
        %v2167 = vunpack.c.h.b16 %v904
        %v2168 = vunpack.c.l.b16 %v905
        %v2169 = vunpack.c.h.b16 %v905
        %v2170 = vunpack.c.l.b16 %v906
        %v2171 = vunpack.c.h.b16 %v906
        %v2172 = vunpack.c.l.b16 %v907
        %v2173 = vunpack.c.h.b16 %v907
        %v2174 = vunpack.c.l.b16 %v908
        %v2175 = vunpack.c.h.b16 %v908
        %v2176 = vunpack.c.l.b16 %v909
        %v2177 = vunpack.c.h.b16 %v909
        %v2178 = vunpack.c.l.b16 %v910
        %v2179 = vunpack.c.h.b16 %v910
        %v2180 = vunpack.c.l.b16 %v911
        %v2181 = vunpack.c.h.b16 %v911
        %v2182 = vunpack.c.l.b16 %v912
        %v2183 = vunpack.c.h.b16 %v912
        %v2184 = vunpack.c.l.b16 %v913
        %v2185 = vunpack.c.h.b16 %v913
        %v2186 = vunpack.c.l.b16 %v914
        %v2187 = vunpack.c.h.b16 %v914
        %v2188 = vunpack.c.l.b16 %v915
        %v2189 = vunpack.c.h.b16 %v915
        %v2190 = vunpack.c.l.b16 %v916
        %v2191 = vunpack.c.h.b16 %v916
        %v2192 = vunpack.c.l.b16 %v917
        %v2193 = vunpack.c.h.b16 %v917
        %v2194 = vunpack.c.l.b16 %v918
        %v2195 = vunpack.c.h.b16 %v918
        %v2196 = vunpack.c.l.b16 %v919
        %v2197 = vunpack.c.h.b16 %v919
        %v2198 = vunpack.c.l.b16 %v920
        %v2199 = vunpack.c.h.b16 %v920
        %v2200 = vunpack.c.l.b16 %v921
        %v2201 = vunpack.c.h.b16 %v921
        %v2202 = vunpack.c.l.b16 %v922
        %v2203 = vunpack.c.h.b16 %v922
        %v2204 = vunpack.c.l.b16 %v923
        %v2205 = vunpack.c.h.b16 %v923
        %v2206 = vunpack.c.l.b16 %v924
        %v2207 = vunpack.c.h.b16 %v924
        %v2208 = vunpack.c.l.b16 %v925
        %v2209 = vunpack.c.h.b16 %v925
        %v2210 = vunpack.c.l.b16 %v926
        %v2211 = vunpack.c.h.b16 %v926
        %v2212 = vunpack.c.l.b16 %v927
        %v2213 = vunpack.c.h.b16 %v927
        %v2214 = vunpack.c.l.b16 %v928
        %v2215 = vunpack.c.h.b16 %v928
        %v2216 = vunpack.c.l.b16 %v929
        %v2217 = vunpack.c.h.b16 %v929
        %v2218 = vunpack.c.l.b16 %v930
        %v2219 = vunpack.c.h.b16 %v930
        %v2220 = vunpack.c.l.b16 %v931
        %v2221 = vunpack.c.h.b16 %v931
        %v2222 = vunpack.c.l.b16 %v932
        %v2223 = vunpack.c.h.b16 %v932
        %v2224 = vunpack.c.l.b16 %v933
        %v2225 = vunpack.c.h.b16 %v933
        %v2226 = vunpack.c.l.b16 %v934
        %v2227 = vunpack.c.h.b16 %v934
        %v2228 = vunpack.c.l.b16 %v935
        %v2229 = vunpack.c.h.b16 %v935
        %v2230 = vunpack.c.l.b16 %v936
        %v2231 = vunpack.c.h.b16 %v936
        %v2232 = vunpack.c.l.b16 %v937
        %v2233 = vunpack.c.h.b16 %v937
        %v2234 = vunpack.c.l.b16 %v938
        %v2235 = vunpack.c.h.b16 %v938
        %v2236 = vunpack.c.l.b16 %v939
        %v2237 = vunpack.c.h.b16 %v939
        %v2238 = vunpack.c.l.b16 %v940
        %v2239 = vunpack.c.h.b16 %v940
        %v2240 = vunpack.c.l.b16 %v941
        %v2241 = vunpack.c.h.b16 %v941
        %v2242 = vunpack.c.l.b16 %v942
        %v2243 = vunpack.c.h.b16 %v942
        %v2244 = vunpack.c.l.b16 %v943
        %v2245 = vunpack.c.h.b16 %v943
        %v2246 = vunpack.c.l.b16 %v944
        %v2247 = vunpack.c.h.b16 %v944
        %v2248 = vunpack.c.l.b16 %v945
        %v2249 = vunpack.c.h.b16 %v945
        %v2250 = vunpack.c.l.b16 %v946
        %v2251 = vunpack.c.h.b16 %v946
        %v2252 = vunpack.c.l.b16 %v947
        %v2253 = vunpack.c.h.b16 %v947
        %v2254 = vunpack.c.l.b16 %v948
        %v2255 = vunpack.c.h.b16 %v948
        %v2256 = vunpack.c.l.b16 %v949
        %v2257 = vunpack.c.h.b16 %v949
        %v2258 = vunpack.c.l.b16 %v950
        %v2259 = vunpack.c.h.b16 %v950
        %v2260 = vunpack.c.l.b16 %v951
        %v2261 = vunpack.c.h.b16 %v951
        %v2262 = vunpack.c.l.b16 %v952
        %v2263 = vunpack.c.h.b16 %v952
        %v2264 = vunpack.c.l.b16 %v953
        %v2265 = vunpack.c.h.b16 %v953
        %v2266 = vunpack.c.l.b16 %v954
        %v2267 = vunpack.c.h.b16 %v954
        %v2268 = vunpack.c.l.b16 %v955
        %v2269 = vunpack.c.h.b16 %v955
        %v2270 = vunpack.c.l.b16 %v956
        %v2271 = vunpack.c.h.b16 %v956
        %v2272 = vunpack.c.l.b16 %v957
        %v2273 = vunpack.c.h.b16 %v957
        %v2274 = vunpack.c.l.b16 %v958
        %v2275 = vunpack.c.h.b16 %v958
        %v2276 = vunpack.c.l.b16 %v959
        %v2277 = vunpack.c.h.b16 %v959
        %v2278 = vunpack.c.l.b16 %v960
        %v2279 = vunpack.c.h.b16 %v960
        %v2280 = vunpack.c.l.b16 %v961
        %v2281 = vunpack.c.h.b16 %v961
        %v2282 = vunpack.c.l.b16 %v962
        %v2283 = vunpack.c.h.b16 %v962
        %v2284 = vunpack.c.l.b16 %v963
        %v2285 = vunpack.c.h.b16 %v963
        %v2286 = vunpack.c.l.b16 %v964
        %v2287 = vunpack.c.h.b16 %v964
        %v2288 = vunpack.c.l.b16 %v965
        %v2289 = vunpack.c.h.b16 %v965
        %v2290 = vunpack.c.l.b16 %v966
        %v2291 = vunpack.c.h.b16 %v966
        %v2292 = vunpack.c.l.b16 %v967
        %v2293 = vunpack.c.h.b16 %v967
        %v2294 = vunpack.c.l.b16 %v968
        %v2295 = vunpack.c.h.b16 %v968
        %v2296 = vunpack.c.l.b16 %v969
        %v2297 = vunpack.c.h.b16 %v969
        %v2298 = vunpack.c.l.b16 %v970
        %v2299 = vunpack.c.h.b16 %v970
        %v2300 = vunpack.c.l.b16 %v971
        %v2301 = vunpack.c.h.b16 %v971
        %v2302 = vunpack.c.l.b16 %v972
        %v2303 = vunpack.c.h.b16 %v972
        %v2304 = vunpack.c.l.b16 %v973
        %v2305 = vunpack.c.h.b16 %v973
        %v2306 = vunpack.c.l.b16 %v974
        %v2307 = vunpack.c.h.b16 %v974
        %v2308 = vunpack.c.l.b16 %v975
        %v2309 = vunpack.c.h.b16 %v975
        %v2310 = vunpack.c.l.b16 %v976
        %v2311 = vunpack.c.h.b16 %v976
        %v2312 = vunpack.c.l.b16 %v977
        %v2313 = vunpack.c.h.b16 %v977
        %v2314 = vunpack.c.l.b16 %v978
        %v2315 = vunpack.c.h.b16 %v978
        %v2316 = vunpack.c.l.b16 %v979
        %v2317 = vunpack.c.h.b16 %v979
        %v2318 = vunpack.c.l.b16 %v980
        %v2319 = vunpack.c.h.b16 %v980
        %v2320 = vunpack.c.l.b16 %v981
        %v2321 = vunpack.c.h.b16 %v981
        %v2322 = vunpack.c.l.b16 %v982
        %v2323 = vunpack.c.h.b16 %v982
        %v2324 = vunpack.c.l.b16 %v983
        %v2325 = vunpack.c.h.b16 %v983
        %v2326 = vunpack.c.l.b16 %v984
        %v2327 = vunpack.c.h.b16 %v984
        %v2328 = vunpack.c.l.b16 %v985
        %v2329 = vunpack.c.h.b16 %v985
        %v2330 = vunpack.c.l.b16 %v986
        %v2331 = vunpack.c.h.b16 %v986
        %v2332 = vunpack.c.l.b16 %v987
        %v2333 = vunpack.c.h.b16 %v987
        %v2334 = vunpack.c.l.b16 %v988
        %v2335 = vunpack.c.h.b16 %v988
        %v2336 = vunpack.c.l.b16 %v989
        %v2337 = vunpack.c.h.b16 %v989
        %v2338 = vunpack.c.l.b16 %v990
        %v2339 = vunpack.c.h.b16 %v990
        %v2340 = vunpack.c.l.b16 %v991
        %v2341 = vunpack.c.h.b16 %v991
        %v2342 = vunpack.c.l.b16 %v992
        %v2343 = vunpack.c.h.b16 %v992
        %v2344 = vunpack.c.l.b16 %v993
        %v2345 = vunpack.c.h.b16 %v993
        %v2346 = vunpack.c.l.b16 %v994
        %v2347 = vunpack.c.h.b16 %v994
        %v2348 = vunpack.c.l.b16 %v995
        %v2349 = vunpack.c.h.b16 %v995
        %v2350 = vunpack.c.l.b16 %v996
        %v2351 = vunpack.c.h.b16 %v996
        %v2352 = vunpack.c.l.b16 %v997
        %v2353 = vunpack.c.h.b16 %v997
        %v2354 = vunpack.c.l.b16 %v998
        %v2355 = vunpack.c.h.b16 %v998
        %v2356 = vunpack.c.l.b16 %v999
        %v2357 = vunpack.c.h.b16 %v999
        %v2358 = vunpack.c.l.b16 %v1000
        %v2359 = vunpack.c.h.b16 %v1000
        %v2360 = vunpack.c.l.b16 %v1001
        %v2361 = vunpack.c.h.b16 %v1001
        %v2362 = vunpack.c.l.b16 %v1002
        %v2363 = vunpack.c.h.b16 %v1002
        %v2364 = vunpack.c.l.b16 %v1003
        %v2365 = vunpack.c.h.b16 %v1003
        %v2366 = vunpack.c.l.b16 %v1004
        %v2367 = vunpack.c.h.b16 %v1004
        %v2368 = vunpack.c.l.b16 %v1005
        %v2369 = vunpack.c.h.b16 %v1005
        %v2370 = vunpack.c.l.b16 %v1006
        %v2371 = vunpack.c.h.b16 %v1006
        %v2372 = vunpack.c.l.b16 %v1007
        %v2373 = vunpack.c.h.b16 %v1007
        %v2374 = vunpack.c.l.b16 %v1008
        %v2375 = vunpack.c.h.b16 %v1008
        %v2376 = vunpack.c.l.b16 %v1009
        %v2377 = vunpack.c.h.b16 %v1009
        %v2378 = vunpack.c.l.b16 %v1010
        %v2379 = vunpack.c.h.b16 %v1010
        %v2380 = vunpack.c.l.b16 %v1011
        %v2381 = vunpack.c.h.b16 %v1011
        %v2382 = vunpack.c.l.b16 %v1012
        %v2383 = vunpack.c.h.b16 %v1012
        %v2384 = vunpack.c.l.b16 %v1013
        %v2385 = vunpack.c.h.b16 %v1013
        %v2386 = vunpack.c.l.b16 %v1014
        %v2387 = vunpack.c.h.b16 %v1014
        %v2388 = vunpack.c.l.b16 %v1015
        %v2389 = vunpack.c.h.b16 %v1015
        %v2390 = vunpack.c.l.b16 %v1016
        %v2391 = vunpack.c.h.b16 %v1016
        %v2392 = vunpack.c.l.b16 %v1017
        %v2393 = vunpack.c.h.b16 %v1017
        %v2394 = vunpack.c.l.b16 %v1018
        %v2395 = vunpack.c.h.b16 %v1018
        %v2396 = vunpack.c.l.b16 %v1019
        %v2397 = vunpack.c.h.b16 %v1019
        %v2398 = vunpack.c.l.b16 %v1020
        %v2399 = vunpack.c.h.b16 %v1020
        %v2400 = vunpack.c.l.b16 %v1021
        %v2401 = vunpack.c.h.b16 %v1021
        %v2402 = vunpack.c.l.b16 %v1022
        %v2403 = vunpack.c.h.b16 %v1022
        %v2404 = vunpack.c.l.b16 %v1023
        %v2405 = vunpack.c.h.b16 %v1023
        %v2406 = vunpack.c.l.b16 %v1024
        %v2407 = vunpack.c.h.b16 %v1024
        %v2408 = vunpack.c.l.b16 %v1025
        %v2409 = vunpack.c.h.b16 %v1025
        %v2410 = vunpack.c.l.b16 %v1026
        %v2411 = vunpack.c.h.b16 %v1026
        %v2412 = vunpack.c.l.b16 %v1027
        %v2413 = vunpack.c.h.b16 %v1027
        %v2414 = vunpack.c.l.b16 %v1028
        %v2415 = vunpack.c.h.b16 %v1028
        %v2416 = vunpack.c.l.b16 %v1029
        %v2417 = vunpack.c.h.b16 %v1029
        %v2418 = vunpack.c.l.b16 %v1030
        %v2419 = vunpack.c.h.b16 %v1030
        %v2420 = vunpack.c.l.b16 %v1031
        %v2421 = vunpack.c.h.b16 %v1031
        %v2422 = vunpack.c.l.b16 %v1032
        %v2423 = vunpack.c.h.b16 %v1032
        %v2424 = vunpack.c.l.b16 %v1033
        %v2425 = vunpack.c.h.b16 %v1033
        %v2426 = vunpack.c.l.b16 %v1034
        %v2427 = vunpack.c.h.b16 %v1034
        %v2428 = vunpack.c.l.b16 %v1035
        %v2429 = vunpack.c.h.b16 %v1035
        %v2430 = vunpack.c.l.b16 %v1036
        %v2431 = vunpack.c.h.b16 %v1036
        %v2432 = vunpack.c.l.b16 %v1037
        %v2433 = vunpack.c.h.b16 %v1037
        %v2434 = vunpack.c.l.b16 %v1038
        %v2435 = vunpack.c.h.b16 %v1038
        %v2436 = vunpack.c.l.b16 %v1039
        %v2437 = vunpack.c.h.b16 %v1039
        %v2438 = vunpack.c.l.b16 %v1040
        %v2439 = vunpack.c.h.b16 %v1040
        %v2440 = vunpack.c.l.b16 %v1041
        %v2441 = vunpack.c.h.b16 %v1041
        %v2442 = vunpack.c.l.b16 %v1042
        %v2443 = vunpack.c.h.b16 %v1042
        %v2444 = vunpack.c.l.b16 %v1043
        %v2445 = vunpack.c.h.b16 %v1043
        %v2446 = vunpack.c.l.b16 %v1044
        %v2447 = vunpack.c.h.b16 %v1044
        %v2448 = vunpack.c.l.b16 %v1045
        %v2449 = vunpack.c.h.b16 %v1045
        %v2450 = vunpack.c.l.b16 %v1046
        %v2451 = vunpack.c.h.b16 %v1046
        %v2452 = vunpack.c.l.b16 %v1047
        %v2453 = vunpack.c.h.b16 %v1047
        %v2454 = vunpack.c.l.b16 %v1048
        %v2455 = vunpack.c.h.b16 %v1048
        %v2456 = vunpack.c.l.b16 %v1049
        %v2457 = vunpack.c.h.b16 %v1049
        %v2458 = vunpack.c.l.b16 %v1050
        %v2459 = vunpack.c.h.b16 %v1050
        %v2460 = vunpack.c.l.b16 %v1051
        %v2461 = vunpack.c.h.b16 %v1051
        %v2462 = vunpack.c.l.b16 %v1052
        %v2463 = vunpack.c.h.b16 %v1052
        %v2464 = vunpack.c.l.b16 %v1053
        %v2465 = vunpack.c.h.b16 %v1053
        %v2466 = vunpack.c.l.b16 %v1054
        %v2467 = vunpack.c.h.b16 %v1054
        %v2468 = vunpack.c.l.b16 %v1055
        %v2469 = vunpack.c.h.b16 %v1055
        %v2470 = vunpack.c.l.b16 %v1056
        %v2471 = vunpack.c.h.b16 %v1056
        %v2472 = vunpack.c.l.b16 %v1057
        %v2473 = vunpack.c.h.b16 %v1057
        %v2474 = vunpack.c.l.b16 %v1058
        %v2475 = vunpack.c.h.b16 %v1058
        %v2476 = vunpack.c.l.b16 %v1059
        %v2477 = vunpack.c.h.b16 %v1059
        %v2478 = vunpack.c.l.b16 %v1060
        %v2479 = vunpack.c.h.b16 %v1060
        %v2480 = vunpack.c.l.b16 %v1061
        %v2481 = vunpack.c.h.b16 %v1061
        %v2482 = vunpack.c.l.b16 %v1062
        %v2483 = vunpack.c.h.b16 %v1062
        %v2484 = vunpack.c.l.b16 %v1063
        %v2485 = vunpack.c.h.b16 %v1063
        %v2486 = vunpack.c.l.b16 %v1064
        %v2487 = vunpack.c.h.b16 %v1064
        %v2488 = vunpack.c.l.b16 %v1065
        %v2489 = vunpack.c.h.b16 %v1065
        %v2490 = vunpack.c.l.b16 %v1066
        %v2491 = vunpack.c.h.b16 %v1066
        %v2492 = vunpack.c.l.b16 %v1067
        %v2493 = vunpack.c.h.b16 %v1067
        %v2494 = vunpack.c.l.b16 %v1068
        %v2495 = vunpack.c.h.b16 %v1068
        %v2496 = vunpack.c.l.b16 %v1069
        %v2497 = vunpack.c.h.b16 %v1069
        %v2498 = vunpack.c.l.b16 %v1070
        %v2499 = vunpack.c.h.b16 %v1070
        %v2500 = vunpack.c.l.b16 %v1071
        %v2501 = vunpack.c.h.b16 %v1071
        %v2502 = vunpack.c.l.b16 %v1072
        %v2503 = vunpack.c.h.b16 %v1072
        %v2504 = vunpack.c.l.b16 %v1073
        %v2505 = vunpack.c.h.b16 %v1073
        %v2506 = vunpack.c.l.b16 %v1074
        %v2507 = vunpack.c.h.b16 %v1074
        %v2508 = vunpack.c.l.b16 %v1075
        %v2509 = vunpack.c.h.b16 %v1075
        %v2510 = vunpack.c.l.b16 %v1076
        %v2511 = vunpack.c.h.b16 %v1076
        %v2512 = vunpack.c.l.b16 %v1077
        %v2513 = vunpack.c.h.b16 %v1077
        %v2514 = vunpack.c.l.b16 %v1078
        %v2515 = vunpack.c.h.b16 %v1078
        %v2516 = vunpack.c.l.b16 %v1079
        %v2517 = vunpack.c.h.b16 %v1079
        %v2518 = vunpack.c.l.b16 %v1080
        %v2519 = vunpack.c.h.b16 %v1080
        %v2520 = vunpack.c.l.b16 %v1081
        %v2521 = vunpack.c.h.b16 %v1081
        %v2522 = vunpack.c.l.b16 %v1082
        %v2523 = vunpack.c.h.b16 %v1082
        %v2524 = vunpack.c.l.b16 %v1083
        %v2525 = vunpack.c.h.b16 %v1083
        %v2526 = vunpack.c.l.b16 %v1084
        %v2527 = vunpack.c.h.b16 %v1084
        %v2528 = vunpack.c.l.b16 %v1085
        %v2529 = vunpack.c.h.b16 %v1085
        %v2530 = vunpack.c.l.b16 %v1086
        %v2531 = vunpack.c.h.b16 %v1086
        %v2532 = vunpack.c.l.b16 %v1087
        %v2533 = vunpack.c.h.b16 %v1087
        %v2534 = vunpack.c.l.b16 %v1088
        %v2535 = vunpack.c.h.b16 %v1088
        %v2536 = vunpack.c.l.b16 %v1089
        %v2537 = vunpack.c.h.b16 %v1089
        %v2538 = vunpack.c.l.b16 %v1090
        %v2539 = vunpack.c.h.b16 %v1090
        %v2540 = vunpack.c.l.b16 %v1091
        %v2541 = vunpack.c.h.b16 %v1091
        %v2542 = vunpack.c.l.b16 %v1092
        %v2543 = vunpack.c.h.b16 %v1092
        %v2544 = vunpack.c.l.b16 %v1093
        %v2545 = vunpack.c.h.b16 %v1093
        %v2546 = vunpack.c.l.b16 %v1094
        %v2547 = vunpack.c.h.b16 %v1094
        %v2548 = vunpack.c.l.b16 %v1095
        %v2549 = vunpack.c.h.b16 %v1095
        %v2550 = vunpack.c.l.b16 %v1096
        %v2551 = vunpack.c.h.b16 %v1096
        %v2552 = vunpack.c.l.b16 %v1097
        %v2553 = vunpack.c.h.b16 %v1097
        %v2554 = vunpack.c.l.b16 %v1098
        %v2555 = vunpack.c.h.b16 %v1098
        %v2556 = vunpack.c.l.b16 %v1099
        %v2557 = vunpack.c.h.b16 %v1099
        %v2558 = vunpack.c.l.b16 %v1100
        %v2559 = vunpack.c.h.b16 %v1100
        %v2560 = vunpack.c.l.b16 %v1101
        %v2561 = vunpack.c.h.b16 %v1101
        %v2562 = vunpack.c.l.b16 %v1102
        %v2563 = vunpack.c.h.b16 %v1102
        %v2564 = vunpack.c.l.b16 %v1103
        %v2565 = vunpack.c.h.b16 %v1103
        %v2566 = vunpack.c.l.b16 %v1104
        %v2567 = vunpack.c.h.b16 %v1104
        %v2568 = vunpack.c.l.b16 %v1105
        %v2569 = vunpack.c.h.b16 %v1105
        %v2570 = vunpack.c.l.b16 %v1106
        %v2571 = vunpack.c.h.b16 %v1106
        %v2572 = vunpack.c.l.b16 %v1107
        %v2573 = vunpack.c.h.b16 %v1107
        %v2574 = vunpack.c.l.b16 %v1108
        %v2575 = vunpack.c.h.b16 %v1108
        %v2576 = vunpack.c.l.b16 %v1109
        %v2577 = vunpack.c.h.b16 %v1109
        %v2578 = vunpack.c.l.b16 %v1110
        %v2579 = vunpack.c.h.b16 %v1110
        %v2580 = vunpack.c.l.b16 %v1111
        %v2581 = vunpack.c.h.b16 %v1111
        %v2582 = vunpack.c.l.b16 %v1112
        %v2583 = vunpack.c.h.b16 %v1112
        %v2584 = vunpack.c.l.b16 %v1113
        %v2585 = vunpack.c.h.b16 %v1113
        %v2586 = vunpack.c.l.b16 %v1114
        %v2587 = vunpack.c.h.b16 %v1114
        %v2588 = vunpack.c.l.b16 %v1115
        %v2589 = vunpack.c.h.b16 %v1115
        %v2590 = vunpack.c.l.b16 %v1116
        %v2591 = vunpack.c.h.b16 %v1116
        %v2592 = vunpack.c.l.b16 %v1117
        %v2593 = vunpack.c.h.b16 %v1117
        %v2594 = vunpack.c.l.b16 %v1118
        %v2595 = vunpack.c.h.b16 %v1118
        %v2596 = vunpack.c.l.b16 %v1119
        %v2597 = vunpack.c.h.b16 %v1119
        %v2598 = vunpack.c.l.b16 %v1120
        %v2599 = vunpack.c.h.b16 %v1120
        %v2600 = vunpack.c.l.b16 %v1121
        %v2601 = vunpack.c.h.b16 %v1121
        %v2602 = vunpack.c.l.b16 %v1122
        %v2603 = vunpack.c.h.b16 %v1122
        %v2604 = vunpack.c.l.b16 %v1123
        %v2605 = vunpack.c.h.b16 %v1123
        %v2606 = vunpack.c.l.b16 %v1124
        %v2607 = vunpack.c.h.b16 %v1124
        %v2608 = vunpack.c.l.b16 %v1125
        %v2609 = vunpack.c.h.b16 %v1125
        %v2610 = vunpack.c.l.b16 %v1126
        %v2611 = vunpack.c.h.b16 %v1126
        %v2612 = vunpack.c.l.b16 %v1127
        %v2613 = vunpack.c.h.b16 %v1127
        %v2614 = vunpack.c.l.b16 %v1128
        %v2615 = vunpack.c.h.b16 %v1128
        %v2616 = vunpack.c.l.b16 %v1129
        %v2617 = vunpack.c.h.b16 %v1129
        %v2618 = vunpack.c.l.b16 %v1130
        %v2619 = vunpack.c.h.b16 %v1130
        %v2620 = vunpack.c.l.b16 %v1131
        %v2621 = vunpack.c.h.b16 %v1131
        %v2622 = vunpack.c.l.b16 %v1132
        %v2623 = vunpack.c.h.b16 %v1132
        %v2624 = vunpack.c.l.b16 %v1133
        %v2625 = vunpack.c.h.b16 %v1133
        %v2626 = vunpack.c.l.b16 %v1134
        %v2627 = vunpack.c.h.b16 %v1134
        %v2628 = vunpack.c.l.b16 %v1135
        %v2629 = vunpack.c.h.b16 %v1135
        %v2630 = vunpack.c.l.b16 %v1136
        %v2631 = vunpack.c.h.b16 %v1136
        %v2632 = vunpack.c.l.b16 %v1137
        %v2633 = vunpack.c.h.b16 %v1137
        %v2634 = vunpack.c.l.b16 %v1138
        %v2635 = vunpack.c.h.b16 %v1138
        %v2636 = vunpack.c.l.b16 %v1139
        %v2637 = vunpack.c.h.b16 %v1139
        %v2638 = vunpack.c.l.b16 %v1140
        %v2639 = vunpack.c.h.b16 %v1140
        %v2640 = vunpack.c.l.b16 %v1141
        %v2641 = vunpack.c.h.b16 %v1141
        %v2642 = vunpack.c.l.b16 %v1142
        %v2643 = vunpack.c.h.b16 %v1142
        %v2644 = vunpack.c.l.b16 %v1143
        %v2645 = vunpack.c.h.b16 %v1143
        %v2646 = vunpack.c.l.b16 %v1144
        %v2647 = vunpack.c.h.b16 %v1144
        %v2648 = vunpack.c.l.b16 %v1145
        %v2649 = vunpack.c.h.b16 %v1145
        %v2650 = vunpack.c.l.b16 %v1146
        %v2651 = vunpack.c.h.b16 %v1146
        %v2652 = vunpack.c.l.b16 %v1147
        %v2653 = vunpack.c.h.b16 %v1147
        %v2654 = vunpack.c.l.b16 %v1148
        %v2655 = vunpack.c.h.b16 %v1148
        %v2656 = vunpack.c.l.b16 %v1149
        %v2657 = vunpack.c.h.b16 %v1149
        %v2658 = vunpack.c.l.b16 %v1150
        %v2659 = vunpack.c.h.b16 %v1150
        %v2660 = vunpack.c.l.b16 %v1151
        %v2661 = vunpack.c.h.b16 %v1151
        %v2662 = vunpack.c.l.b16 %v1152
        %v2663 = vunpack.c.h.b16 %v1152
        %v2664 = vunpack.c.l.b16 %v1153
        %v2665 = vunpack.c.h.b16 %v1153
        %v2666 = vunpack.c.l.b16 %v1154
        %v2667 = vunpack.c.h.b16 %v1154
        %v2668 = vunpack.c.l.b16 %v1155
        %v2669 = vunpack.c.h.b16 %v1155
        %v2670 = vunpack.c.l.b16 %v1156
        %v2671 = vunpack.c.h.b16 %v1156
        %v2672 = vunpack.c.l.b16 %v1157
        %v2673 = vunpack.c.h.b16 %v1157
        %v2674 = vunpack.c.l.b16 %v1158
        %v2675 = vunpack.c.h.b16 %v1158
        %v2676 = vunpack.c.l.b16 %v1159
        %v2677 = vunpack.c.h.b16 %v1159
        %v2678 = vunpack.c.l.b16 %v1160
        %v2679 = vunpack.c.h.b16 %v1160
        %v2680 = vunpack.c.l.b16 %v1161
        %v2681 = vunpack.c.h.b16 %v1161
        %v2682 = vunpack.c.l.b16 %v1162
        %v2683 = vunpack.c.h.b16 %v1162
        %v2684 = vunpack.c.l.b16 %v1163
        %v2685 = vunpack.c.h.b16 %v1163
        %v2686 = vunpack.c.l.b16 %v1164
        %v2687 = vunpack.c.h.b16 %v1164
        %v2688 = vunpack.c.l.b16 %v1165
        %v2689 = vunpack.c.h.b16 %v1165
        %v2690 = vunpack.c.l.b16 %v1166
        %v2691 = vunpack.c.h.b16 %v1166
        %v2692 = vunpack.c.l.b16 %v1167
        %v2693 = vunpack.c.h.b16 %v1167
        %v2694 = vunpack.c.l.b16 %v1168
        %v2695 = vunpack.c.h.b16 %v1168
        %v2696 = vunpack.c.l.b16 %v1169
        %v2697 = vunpack.c.h.b16 %v1169
        %v2698 = vunpack.c.l.b16 %v1170
        %v2699 = vunpack.c.h.b16 %v1170
        %v2700 = vunpack.c.l.b16 %v1171
        %v2701 = vunpack.c.h.b16 %v1171
        %v2702 = vunpack.c.l.b16 %v1172
        %v2703 = vunpack.c.h.b16 %v1172
        %v2704 = vunpack.c.l.b16 %v1173
        %v2705 = vunpack.c.h.b16 %v1173
        %v2706 = vunpack.c.l.b16 %v1174
        %v2707 = vunpack.c.h.b16 %v1174
        %v2708 = vunpack.c.l.b16 %v1175
        %v2709 = vunpack.c.h.b16 %v1175
        %v2710 = vunpack.c.l.b16 %v1176
        %v2711 = vunpack.c.h.b16 %v1176
        %v2712 = vunpack.c.l.b16 %v1177
        %v2713 = vunpack.c.h.b16 %v1177
        %v2714 = vunpack.c.l.b16 %v1178
        %v2715 = vunpack.c.h.b16 %v1178
        %v2716 = vunpack.c.l.b16 %v1179
        %v2717 = vunpack.c.h.b16 %v1179
        %v2718 = vunpack.c.l.b16 %v1180
        %v2719 = vunpack.c.h.b16 %v1180
        %v2720 = vunpack.c.l.b16 %v1181
        %v2721 = vunpack.c.h.b16 %v1181
        %v2722 = vunpack.c.l.b16 %v1182
        %v2723 = vunpack.c.h.b16 %v1182
        %v2724 = vunpack.c.l.b16 %v1183
        %v2725 = vunpack.c.h.b16 %v1183
        %v2726 = vunpack.c.l.b16 %v1184
        %v2727 = vunpack.c.h.b16 %v1184
        %v2728 = vunpack.c.l.b16 %v1185
        %v2729 = vunpack.c.h.b16 %v1185
        %v2730 = vunpack.c.l.b16 %v1186
        %v2731 = vunpack.c.h.b16 %v1186
        %v2732 = vunpack.c.l.b16 %v1187
        %v2733 = vunpack.c.h.b16 %v1187
        %v2734 = vunpack.c.l.b16 %v1188
        %v2735 = vunpack.c.h.b16 %v1188
        %v2736 = vunpack.c.l.b16 %v1189
        %v2737 = vunpack.c.h.b16 %v1189
        %v2738 = vunpack.c.l.b16 %v1190
        %v2739 = vunpack.c.h.b16 %v1190
        %v2740 = vunpack.c.l.b16 %v1191
        %v2741 = vunpack.c.h.b16 %v1191
        %v2742 = vunpack.c.l.b16 %v1192
        %v2743 = vunpack.c.h.b16 %v1192
        %v2744 = vunpack.c.l.b16 %v1193
        %v2745 = vunpack.c.h.b16 %v1193
        %v2746 = vunpack.c.l.b16 %v1194
        %v2747 = vunpack.c.h.b16 %v1194
        %v2748 = vunpack.c.l.b16 %v1195
        %v2749 = vunpack.c.h.b16 %v1195
        %v2750 = vunpack.c.l.b16 %v1196
        %v2751 = vunpack.c.h.b16 %v1196
        %v2752 = vunpack.c.l.b16 %v1197
        %v2753 = vunpack.c.h.b16 %v1197
        %v2754 = vunpack.c.l.b16 %v1198
        %v2755 = vunpack.c.h.b16 %v1198
        %v2756 = vunpack.c.l.b16 %v1199
        %v2757 = vunpack.c.h.b16 %v1199
        %v2758 = vunpack.c.l.b16 %v1200
        %v2759 = vunpack.c.h.b16 %v1200
        %v2760 = vunpack.c.l.b16 %v1201
        %v2761 = vunpack.c.h.b16 %v1201
        %v2762 = vunpack.c.l.b16 %v1202
        %v2763 = vunpack.c.h.b16 %v1202
        %v2764 = vunpack.c.l.b16 %v1203
        %v2765 = vunpack.c.h.b16 %v1203
        %v2766 = vunpack.c.l.b16 %v1204
        %v2767 = vunpack.c.h.b16 %v1204
        %v2768 = vunpack.c.l.b16 %v1205
        %v2769 = vunpack.c.h.b16 %v1205
        %v2770 = vunpack.c.l.b16 %v1206
        %v2771 = vunpack.c.h.b16 %v1206
        %v2772 = vunpack.c.l.b16 %v1207
        %v2773 = vunpack.c.h.b16 %v1207
        %v2774 = vunpack.c.l.b16 %v1208
        %v2775 = vunpack.c.h.b16 %v1208
        %v2776 = vunpack.c.l.b16 %v1209
        %v2777 = vunpack.c.h.b16 %v1209
        %v2778 = vunpack.c.l.b16 %v1210
        %v2779 = vunpack.c.h.b16 %v1210
        %v2780 = vunpack.c.l.b16 %v1211
        %v2781 = vunpack.c.h.b16 %v1211
        %v2782 = vunpack.c.l.b16 %v1212
        %v2783 = vunpack.c.h.b16 %v1212
        %v2784 = vunpack.c.l.b16 %v1213
        %v2785 = vunpack.c.h.b16 %v1213
        %v2786 = vunpack.c.l.b16 %v1214
        %v2787 = vunpack.c.h.b16 %v1214
        %v2788 = vunpack.c.l.b16 %v1215
        %v2789 = vunpack.c.h.b16 %v1215
        %v2790 = vunpack.c.l.b16 %v1216
        %v2791 = vunpack.c.h.b16 %v1216
        %v2792 = vunpack.c.l.b16 %v1217
        %v2793 = vunpack.c.h.b16 %v1217
        %v2794 = vunpack.c.l.b16 %v1218
        %v2795 = vunpack.c.h.b16 %v1218
        %v2796 = vunpack.c.l.b16 %v1219
        %v2797 = vunpack.c.h.b16 %v1219
        %v2798 = vunpack.c.l.b16 %v1220
        %v2799 = vunpack.c.h.b16 %v1220
        %v2800 = vunpack.c.l.b16 %v1221
        %v2801 = vunpack.c.h.b16 %v1221
        %v2802 = vunpack.c.l.b16 %v1222
        %v2803 = vunpack.c.h.b16 %v1222
        %v2804 = vunpack.c.l.b16 %v1223
        %v2805 = vunpack.c.h.b16 %v1223
        %v2806 = vunpack.c.l.b16 %v1224
        %v2807 = vunpack.c.h.b16 %v1224
        %v2808 = vunpack.c.l.b16 %v1225
        %v2809 = vunpack.c.h.b16 %v1225
        %v2810 = vunpack.c.l.b16 %v1226
        %v2811 = vunpack.c.h.b16 %v1226
        %v2812 = vunpack.c.l.b16 %v1227
        %v2813 = vunpack.c.h.b16 %v1227
        %v2814 = vunpack.c.l.b16 %v1228
        %v2815 = vunpack.c.h.b16 %v1228
        %v2816 = vunpack.c.l.b16 %v1229
        %v2817 = vunpack.c.h.b16 %v1229
        %v2818 = vunpack.c.l.b16 %v1230
        %v2819 = vunpack.c.h.b16 %v1230
        %v2820 = vunpack.c.l.b16 %v1231
        %v2821 = vunpack.c.h.b16 %v1231
        %v2822 = vunpack.c.l.b16 %v1232
        %v2823 = vunpack.c.h.b16 %v1232
        %v2824 = vunpack.c.l.b16 %v1233
        %v2825 = vunpack.c.h.b16 %v1233
        %v2826 = vunpack.c.l.b16 %v1234
        %v2827 = vunpack.c.h.b16 %v1234
        %v2828 = vunpack.c.l.b16 %v1235
        %v2829 = vunpack.c.h.b16 %v1235
        %v2830 = vunpack.c.l.b16 %v1236
        %v2831 = vunpack.c.h.b16 %v1236
        %v2832 = vunpack.c.l.b16 %v1237
        %v2833 = vunpack.c.h.b16 %v1237
        %v2834 = vunpack.c.l.b16 %v1238
        %v2835 = vunpack.c.h.b16 %v1238
        %v2836 = vunpack.c.l.b16 %v1239
        %v2837 = vunpack.c.h.b16 %v1239
        %v2838 = vunpack.c.l.b16 %v1240
        %v2839 = vunpack.c.h.b16 %v1240
        %v2840 = vunpack.c.l.b16 %v1241
        %v2841 = vunpack.c.h.b16 %v1241
        %v2842 = vunpack.c.l.b16 %v1242
        %v2843 = vunpack.c.h.b16 %v1242
        %v2844 = vunpack.c.l.b16 %v1243
        %v2845 = vunpack.c.h.b16 %v1243
        %v2846 = vunpack.c.l.b16 %v1244
        %v2847 = vunpack.c.h.b16 %v1244
        %v2848 = vunpack.c.l.b16 %v1245
        %v2849 = vunpack.c.h.b16 %v1245
        %v2850 = vunpack.c.l.b16 %v1246
        %v2851 = vunpack.c.h.b16 %v1246
        %v2852 = vunpack.c.l.b16 %v1247
        %v2853 = vunpack.c.h.b16 %v1247
        %v2854 = vunpack.c.l.b16 %v1248
        %v2855 = vunpack.c.h.b16 %v1248
        %v2856 = vunpack.c.l.b16 %v1249
        %v2857 = vunpack.c.h.b16 %v1249
        %v2858 = vunpack.c.l.b16 %v1250
        %v2859 = vunpack.c.h.b16 %v1250
        %v2860 = vunpack.c.l.b16 %v1251
        %v2861 = vunpack.c.h.b16 %v1251
        %v2862 = vunpack.c.l.b16 %v1252
        %v2863 = vunpack.c.h.b16 %v1252
        %v2864 = vunpack.c.l.b16 %v1253
        %v2865 = vunpack.c.h.b16 %v1253
        %v2866 = vunpack.c.l.b16 %v1254
        %v2867 = vunpack.c.h.b16 %v1254
        %v2868 = vunpack.c.l.b16 %v1255
        %v2869 = vunpack.c.h.b16 %v1255
        %v2870 = vunpack.c.l.b16 %v1256
        %v2871 = vunpack.c.h.b16 %v1256
        %v2872 = vunpack.c.l.b16 %v1257
        %v2873 = vunpack.c.h.b16 %v1257
        %v2874 = vunpack.c.l.b16 %v1258
        %v2875 = vunpack.c.h.b16 %v1258
        %v2876 = vunpack.c.l.b16 %v1259
        %v2877 = vunpack.c.h.b16 %v1259
        %v2878 = vunpack.c.l.b16 %v1260
        %v2879 = vunpack.c.h.b16 %v1260
        %v2880 = vunpack.c.l.b16 %v1261
        %v2881 = vunpack.c.h.b16 %v1261
        %v2882 = vunpack.c.l.b16 %v1262
        %v2883 = vunpack.c.h.b16 %v1262
        %v2884 = vunpack.c.l.b16 %v1263
        %v2885 = vunpack.c.h.b16 %v1263
        %v2886 = vunpack.c.l.b16 %v1264
        %v2887 = vunpack.c.h.b16 %v1264
        %v2888 = vunpack.c.l.b16 %v1265
        %v2889 = vunpack.c.h.b16 %v1265
        %v2890 = vunpack.c.l.b16 %v1266
        %v2891 = vunpack.c.h.b16 %v1266
        %v2892 = vunpack.c.l.b16 %v1267
        %v2893 = vunpack.c.h.b16 %v1267
        %v2894 = vpack.c.b16 %v1874, %v1870
        %v2895 = vpack.c.b16 %v1875, %v1871
        %v2896 = vpack.c.b16 %v1876, %v1872
        %v2897 = vpack.c.b16 %v1877, %v1873
        %v2898 = vpack.c.b16 %v1882, %v1878
        %v2899 = vpack.c.b16 %v1883, %v1879
        %v2900 = vpack.c.b16 %v1884, %v1880
        %v2901 = vpack.c.b16 %v1885, %v1881
        %v2902 = vpack.c.b16 %v1890, %v1886
        %v2903 = vpack.c.b16 %v1891, %v1887
        %v2904 = vpack.c.b16 %v1892, %v1888
        %v2905 = vpack.c.b16 %v1893, %v1889
        %v2906 = vpack.c.b16 %v1898, %v1894
        %v2907 = vpack.c.b16 %v1899, %v1895
        %v2908 = vpack.c.b16 %v1900, %v1896
        %v2909 = vpack.c.b16 %v1901, %v1897
        %v2910 = vpack.c.b16 %v1906, %v1902
        %v2911 = vpack.c.b16 %v1907, %v1903
        %v2912 = vpack.c.b16 %v1908, %v1904
        %v2913 = vpack.c.b16 %v1909, %v1905
        %v2914 = vpack.c.b16 %v1914, %v1910
        %v2915 = vpack.c.b16 %v1915, %v1911
        %v2916 = vpack.c.b16 %v1916, %v1912
        %v2917 = vpack.c.b16 %v1917, %v1913
        %v2918 = vpack.c.b16 %v1922, %v1918
        %v2919 = vpack.c.b16 %v1923, %v1919
        %v2920 = vpack.c.b16 %v1924, %v1920
        %v2921 = vpack.c.b16 %v1925, %v1921
        %v2922 = vpack.c.b16 %v1930, %v1926
        %v2923 = vpack.c.b16 %v1931, %v1927
        %v2924 = vpack.c.b16 %v1932, %v1928
        %v2925 = vpack.c.b16 %v1933, %v1929
        %v2926 = vpack.c.b16 %v1938, %v1934
        %v2927 = vpack.c.b16 %v1939, %v1935
        %v2928 = vpack.c.b16 %v1940, %v1936
        %v2929 = vpack.c.b16 %v1941, %v1937
        %v2930 = vpack.c.b16 %v1946, %v1942
        %v2931 = vpack.c.b16 %v1947, %v1943
        %v2932 = vpack.c.b16 %v1948, %v1944
        %v2933 = vpack.c.b16 %v1949, %v1945
        %v2934 = vpack.c.b16 %v1954, %v1950
        %v2935 = vpack.c.b16 %v1955, %v1951
        %v2936 = vpack.c.b16 %v1956, %v1952
        %v2937 = vpack.c.b16 %v1957, %v1953
        %v2938 = vpack.c.b16 %v1962, %v1958
        %v2939 = vpack.c.b16 %v1963, %v1959
        %v2940 = vpack.c.b16 %v1964, %v1960
        %v2941 = vpack.c.b16 %v1965, %v1961
        %v2942 = vpack.c.b16 %v1970, %v1966
        %v2943 = vpack.c.b16 %v1971, %v1967
        %v2944 = vpack.c.b16 %v1972, %v1968
        %v2945 = vpack.c.b16 %v1973, %v1969
        %v2946 = vpack.c.b16 %v1978, %v1974
        %v2947 = vpack.c.b16 %v1979, %v1975
        %v2948 = vpack.c.b16 %v1980, %v1976
        %v2949 = vpack.c.b16 %v1981, %v1977
        %v2950 = vpack.c.b16 %v1986, %v1982
        %v2951 = vpack.c.b16 %v1987, %v1983
        %v2952 = vpack.c.b16 %v1988, %v1984
        %v2953 = vpack.c.b16 %v1989, %v1985
        %v2954 = vpack.c.b16 %v1994, %v1990
        %v2955 = vpack.c.b16 %v1995, %v1991
        %v2956 = vpack.c.b16 %v1996, %v1992
        %v2957 = vpack.c.b16 %v1997, %v1993
        %v2958 = vpack.c.b16 %v2002, %v1998
        %v2959 = vpack.c.b16 %v2003, %v1999
        %v2960 = vpack.c.b16 %v2004, %v2000
        %v2961 = vpack.c.b16 %v2005, %v2001
        %v2962 = vpack.c.b16 %v2010, %v2006
        %v2963 = vpack.c.b16 %v2011, %v2007
        %v2964 = vpack.c.b16 %v2012, %v2008
        %v2965 = vpack.c.b16 %v2013, %v2009
        %v2966 = vpack.c.b16 %v2018, %v2014
        %v2967 = vpack.c.b16 %v2019, %v2015
        %v2968 = vpack.c.b16 %v2020, %v2016
        %v2969 = vpack.c.b16 %v2021, %v2017
        %v2970 = vpack.c.b16 %v2026, %v2022
        %v2971 = vpack.c.b16 %v2027, %v2023
        %v2972 = vpack.c.b16 %v2028, %v2024
        %v2973 = vpack.c.b16 %v2029, %v2025
        %v2974 = vpack.c.b16 %v2034, %v2030
        %v2975 = vpack.c.b16 %v2035, %v2031
        %v2976 = vpack.c.b16 %v2036, %v2032
        %v2977 = vpack.c.b16 %v2037, %v2033
        %v2978 = vpack.c.b16 %v2042, %v2038
        %v2979 = vpack.c.b16 %v2043, %v2039
        %v2980 = vpack.c.b16 %v2044, %v2040
        %v2981 = vpack.c.b16 %v2045, %v2041
        %v2982 = vpack.c.b16 %v2050, %v2046
        %v2983 = vpack.c.b16 %v2051, %v2047
        %v2984 = vpack.c.b16 %v2052, %v2048
        %v2985 = vpack.c.b16 %v2053, %v2049
        %v2986 = vpack.c.b16 %v2058, %v2054
        %v2987 = vpack.c.b16 %v2059, %v2055
        %v2988 = vpack.c.b16 %v2060, %v2056
        %v2989 = vpack.c.b16 %v2061, %v2057
        %v2990 = vpack.c.b16 %v2066, %v2062
        %v2991 = vpack.c.b16 %v2067, %v2063
        %v2992 = vpack.c.b16 %v2068, %v2064
        %v2993 = vpack.c.b16 %v2069, %v2065
        %v2994 = vpack.c.b16 %v2074, %v2070
        %v2995 = vpack.c.b16 %v2075, %v2071
        %v2996 = vpack.c.b16 %v2076, %v2072
        %v2997 = vpack.c.b16 %v2077, %v2073
        %v2998 = vpack.c.b16 %v2082, %v2078
        %v2999 = vpack.c.b16 %v2083, %v2079
        %v3000 = vpack.c.b16 %v2084, %v2080
        %v3001 = vpack.c.b16 %v2085, %v2081
        %v3002 = vpack.c.b16 %v2090, %v2086
        %v3003 = vpack.c.b16 %v2091, %v2087
        %v3004 = vpack.c.b16 %v2092, %v2088
        %v3005 = vpack.c.b16 %v2093, %v2089
        %v3006 = vpack.c.b16 %v2098, %v2094
        %v3007 = vpack.c.b16 %v2099, %v2095
        %v3008 = vpack.c.b16 %v2100, %v2096
        %v3009 = vpack.c.b16 %v2101, %v2097
        %v3010 = vpack.c.b16 %v2106, %v2102
        %v3011 = vpack.c.b16 %v2107, %v2103
        %v3012 = vpack.c.b16 %v2108, %v2104
        %v3013 = vpack.c.b16 %v2109, %v2105
        %v3014 = vpack.c.b16 %v2114, %v2110
        %v3015 = vpack.c.b16 %v2115, %v2111
        %v3016 = vpack.c.b16 %v2116, %v2112
        %v3017 = vpack.c.b16 %v2117, %v2113
        %v3018 = vpack.c.b16 %v2122, %v2118
        %v3019 = vpack.c.b16 %v2123, %v2119
        %v3020 = vpack.c.b16 %v2124, %v2120
        %v3021 = vpack.c.b16 %v2125, %v2121
        %v3022 = vpack.c.b16 %v2130, %v2126
        %v3023 = vpack.c.b16 %v2131, %v2127
        %v3024 = vpack.c.b16 %v2132, %v2128
        %v3025 = vpack.c.b16 %v2133, %v2129
        %v3026 = vpack.c.b16 %v2138, %v2134
        %v3027 = vpack.c.b16 %v2139, %v2135
        %v3028 = vpack.c.b16 %v2140, %v2136
        %v3029 = vpack.c.b16 %v2141, %v2137
        %v3030 = vpack.c.b16 %v2146, %v2142
        %v3031 = vpack.c.b16 %v2147, %v2143
        %v3032 = vpack.c.b16 %v2148, %v2144
        %v3033 = vpack.c.b16 %v2149, %v2145
        %v3034 = vpack.c.b16 %v2154, %v2150
        %v3035 = vpack.c.b16 %v2155, %v2151
        %v3036 = vpack.c.b16 %v2156, %v2152
        %v3037 = vpack.c.b16 %v2157, %v2153
        %v3038 = vpack.c.b16 %v2162, %v2158
        %v3039 = vpack.c.b16 %v2163, %v2159
        %v3040 = vpack.c.b16 %v2164, %v2160
        %v3041 = vpack.c.b16 %v2165, %v2161
        %v3042 = vpack.c.b16 %v2170, %v2166
        %v3043 = vpack.c.b16 %v2171, %v2167
        %v3044 = vpack.c.b16 %v2172, %v2168
        %v3045 = vpack.c.b16 %v2173, %v2169
        %v3046 = vpack.c.b16 %v2178, %v2174
        %v3047 = vpack.c.b16 %v2179, %v2175
        %v3048 = vpack.c.b16 %v2180, %v2176
        %v3049 = vpack.c.b16 %v2181, %v2177
        %v3050 = vpack.c.b16 %v2186, %v2182
        %v3051 = vpack.c.b16 %v2187, %v2183
        %v3052 = vpack.c.b16 %v2188, %v2184
        %v3053 = vpack.c.b16 %v2189, %v2185
        %v3054 = vpack.c.b16 %v2194, %v2190
        %v3055 = vpack.c.b16 %v2195, %v2191
        %v3056 = vpack.c.b16 %v2196, %v2192
        %v3057 = vpack.c.b16 %v2197, %v2193
        %v3058 = vpack.c.b16 %v2202, %v2198
        %v3059 = vpack.c.b16 %v2203, %v2199
        %v3060 = vpack.c.b16 %v2204, %v2200
        %v3061 = vpack.c.b16 %v2205, %v2201
        %v3062 = vpack.c.b16 %v2210, %v2206
        %v3063 = vpack.c.b16 %v2211, %v2207
        %v3064 = vpack.c.b16 %v2212, %v2208
        %v3065 = vpack.c.b16 %v2213, %v2209
        %v3066 = vpack.c.b16 %v2218, %v2214
        %v3067 = vpack.c.b16 %v2219, %v2215
        %v3068 = vpack.c.b16 %v2220, %v2216
        %v3069 = vpack.c.b16 %v2221, %v2217
        %v3070 = vpack.c.b16 %v2226, %v2222
        %v3071 = vpack.c.b16 %v2227, %v2223
        %v3072 = vpack.c.b16 %v2228, %v2224
        %v3073 = vpack.c.b16 %v2229, %v2225
        %v3074 = vpack.c.b16 %v2234, %v2230
        %v3075 = vpack.c.b16 %v2235, %v2231
        %v3076 = vpack.c.b16 %v2236, %v2232
        %v3077 = vpack.c.b16 %v2237, %v2233
        %v3078 = vpack.c.b16 %v2242, %v2238
        %v3079 = vpack.c.b16 %v2243, %v2239
        %v3080 = vpack.c.b16 %v2244, %v2240
        %v3081 = vpack.c.b16 %v2245, %v2241
        %v3082 = vpack.c.b16 %v2250, %v2246
        %v3083 = vpack.c.b16 %v2251, %v2247
        %v3084 = vpack.c.b16 %v2252, %v2248
        %v3085 = vpack.c.b16 %v2253, %v2249
        %v3086 = vpack.c.b16 %v2258, %v2254
        %v3087 = vpack.c.b16 %v2259, %v2255
        %v3088 = vpack.c.b16 %v2260, %v2256
        %v3089 = vpack.c.b16 %v2261, %v2257
        %v3090 = vpack.c.b16 %v2266, %v2262
        %v3091 = vpack.c.b16 %v2267, %v2263
        %v3092 = vpack.c.b16 %v2268, %v2264
        %v3093 = vpack.c.b16 %v2269, %v2265
        %v3094 = vpack.c.b16 %v2274, %v2270
        %v3095 = vpack.c.b16 %v2275, %v2271
        %v3096 = vpack.c.b16 %v2276, %v2272
        %v3097 = vpack.c.b16 %v2277, %v2273
        %v3098 = vpack.c.b16 %v2282, %v2278
        %v3099 = vpack.c.b16 %v2283, %v2279
        %v3100 = vpack.c.b16 %v2284, %v2280
        %v3101 = vpack.c.b16 %v2285, %v2281
        %v3102 = vpack.c.b16 %v2290, %v2286
        %v3103 = vpack.c.b16 %v2291, %v2287
        %v3104 = vpack.c.b16 %v2292, %v2288
        %v3105 = vpack.c.b16 %v2293, %v2289
        %v3106 = vpack.c.b16 %v2298, %v2294
        %v3107 = vpack.c.b16 %v2299, %v2295
        %v3108 = vpack.c.b16 %v2300, %v2296
        %v3109 = vpack.c.b16 %v2301, %v2297
        %v3110 = vpack.c.b16 %v2306, %v2302
        %v3111 = vpack.c.b16 %v2307, %v2303
        %v3112 = vpack.c.b16 %v2308, %v2304
        %v3113 = vpack.c.b16 %v2309, %v2305
        %v3114 = vpack.c.b16 %v2314, %v2310
        %v3115 = vpack.c.b16 %v2315, %v2311
        %v3116 = vpack.c.b16 %v2316, %v2312
        %v3117 = vpack.c.b16 %v2317, %v2313
        %v3118 = vpack.c.b16 %v2322, %v2318
        %v3119 = vpack.c.b16 %v2323, %v2319
        %v3120 = vpack.c.b16 %v2324, %v2320
        %v3121 = vpack.c.b16 %v2325, %v2321
        %v3122 = vpack.c.b16 %v2330, %v2326
        %v3123 = vpack.c.b16 %v2331, %v2327
        %v3124 = vpack.c.b16 %v2332, %v2328
        %v3125 = vpack.c.b16 %v2333, %v2329
        %v3126 = vpack.c.b16 %v2338, %v2334
        %v3127 = vpack.c.b16 %v2339, %v2335
        %v3128 = vpack.c.b16 %v2340, %v2336
        %v3129 = vpack.c.b16 %v2341, %v2337
        %v3130 = vpack.c.b16 %v2346, %v2342
        %v3131 = vpack.c.b16 %v2347, %v2343
        %v3132 = vpack.c.b16 %v2348, %v2344
        %v3133 = vpack.c.b16 %v2349, %v2345
        %v3134 = vpack.c.b16 %v2354, %v2350
        %v3135 = vpack.c.b16 %v2355, %v2351
        %v3136 = vpack.c.b16 %v2356, %v2352
        %v3137 = vpack.c.b16 %v2357, %v2353
        %v3138 = vpack.c.b16 %v2362, %v2358
        %v3139 = vpack.c.b16 %v2363, %v2359
        %v3140 = vpack.c.b16 %v2364, %v2360
        %v3141 = vpack.c.b16 %v2365, %v2361
        %v3142 = vpack.c.b16 %v2370, %v2366
        %v3143 = vpack.c.b16 %v2371, %v2367
        %v3144 = vpack.c.b16 %v2372, %v2368
        %v3145 = vpack.c.b16 %v2373, %v2369
        %v3146 = vpack.c.b16 %v2378, %v2374
        %v3147 = vpack.c.b16 %v2379, %v2375
        %v3148 = vpack.c.b16 %v2380, %v2376
        %v3149 = vpack.c.b16 %v2381, %v2377
        %v3150 = vpack.c.b16 %v2386, %v2382
        %v3151 = vpack.c.b16 %v2387, %v2383
        %v3152 = vpack.c.b16 %v2388, %v2384
        %v3153 = vpack.c.b16 %v2389, %v2385
        %v3154 = vpack.c.b16 %v2394, %v2390
        %v3155 = vpack.c.b16 %v2395, %v2391
        %v3156 = vpack.c.b16 %v2396, %v2392
        %v3157 = vpack.c.b16 %v2397, %v2393
        %v3158 = vpack.c.b16 %v2402, %v2398
        %v3159 = vpack.c.b16 %v2403, %v2399
        %v3160 = vpack.c.b16 %v2404, %v2400
        %v3161 = vpack.c.b16 %v2405, %v2401
        %v3162 = vpack.c.b16 %v2410, %v2406
        %v3163 = vpack.c.b16 %v2411, %v2407
        %v3164 = vpack.c.b16 %v2412, %v2408
        %v3165 = vpack.c.b16 %v2413, %v2409
        %v3166 = vpack.c.b16 %v2418, %v2414
        %v3167 = vpack.c.b16 %v2419, %v2415
        %v3168 = vpack.c.b16 %v2420, %v2416
        %v3169 = vpack.c.b16 %v2421, %v2417
        %v3170 = vpack.c.b16 %v2426, %v2422
        %v3171 = vpack.c.b16 %v2427, %v2423
        %v3172 = vpack.c.b16 %v2428, %v2424
        %v3173 = vpack.c.b16 %v2429, %v2425
        %v3174 = vpack.c.b16 %v2434, %v2430
        %v3175 = vpack.c.b16 %v2435, %v2431
        %v3176 = vpack.c.b16 %v2436, %v2432
        %v3177 = vpack.c.b16 %v2437, %v2433
        %v3178 = vpack.c.b16 %v2442, %v2438
        %v3179 = vpack.c.b16 %v2443, %v2439
        %v3180 = vpack.c.b16 %v2444, %v2440
        %v3181 = vpack.c.b16 %v2445, %v2441
        %v3182 = vpack.c.b16 %v2450, %v2446
        %v3183 = vpack.c.b16 %v2451, %v2447
        %v3184 = vpack.c.b16 %v2452, %v2448
        %v3185 = vpack.c.b16 %v2453, %v2449
        %v3186 = vpack.c.b16 %v2458, %v2454
        %v3187 = vpack.c.b16 %v2459, %v2455
        %v3188 = vpack.c.b16 %v2460, %v2456
        %v3189 = vpack.c.b16 %v2461, %v2457
        %v3190 = vpack.c.b16 %v2466, %v2462
        %v3191 = vpack.c.b16 %v2467, %v2463
        %v3192 = vpack.c.b16 %v2468, %v2464
        %v3193 = vpack.c.b16 %v2469, %v2465
        %v3194 = vpack.c.b16 %v2474, %v2470
        %v3195 = vpack.c.b16 %v2475, %v2471
        %v3196 = vpack.c.b16 %v2476, %v2472
        %v3197 = vpack.c.b16 %v2477, %v2473
        %v3198 = vpack.c.b16 %v2482, %v2478
        %v3199 = vpack.c.b16 %v2483, %v2479
        %v3200 = vpack.c.b16 %v2484, %v2480
        %v3201 = vpack.c.b16 %v2485, %v2481
        %v3202 = vpack.c.b16 %v2490, %v2486
        %v3203 = vpack.c.b16 %v2491, %v2487
        %v3204 = vpack.c.b16 %v2492, %v2488
        %v3205 = vpack.c.b16 %v2493, %v2489
        %v3206 = vpack.c.b16 %v2498, %v2494
        %v3207 = vpack.c.b16 %v2499, %v2495
        %v3208 = vpack.c.b16 %v2500, %v2496
        %v3209 = vpack.c.b16 %v2501, %v2497
        %v3210 = vpack.c.b16 %v2506, %v2502
        %v3211 = vpack.c.b16 %v2507, %v2503
        %v3212 = vpack.c.b16 %v2508, %v2504
        %v3213 = vpack.c.b16 %v2509, %v2505
        %v3214 = vpack.c.b16 %v2514, %v2510
        %v3215 = vpack.c.b16 %v2515, %v2511
        %v3216 = vpack.c.b16 %v2516, %v2512
        %v3217 = vpack.c.b16 %v2517, %v2513
        %v3218 = vpack.c.b16 %v2522, %v2518
        %v3219 = vpack.c.b16 %v2523, %v2519
        %v3220 = vpack.c.b16 %v2524, %v2520
        %v3221 = vpack.c.b16 %v2525, %v2521
        %v3222 = vpack.c.b16 %v2530, %v2526
        %v3223 = vpack.c.b16 %v2531, %v2527
        %v3224 = vpack.c.b16 %v2532, %v2528
        %v3225 = vpack.c.b16 %v2533, %v2529
        %v3226 = vpack.c.b16 %v2538, %v2534
        %v3227 = vpack.c.b16 %v2539, %v2535
        %v3228 = vpack.c.b16 %v2540, %v2536
        %v3229 = vpack.c.b16 %v2541, %v2537
        %v3230 = vpack.c.b16 %v2546, %v2542
        %v3231 = vpack.c.b16 %v2547, %v2543
        %v3232 = vpack.c.b16 %v2548, %v2544
        %v3233 = vpack.c.b16 %v2549, %v2545
        %v3234 = vpack.c.b16 %v2554, %v2550
        %v3235 = vpack.c.b16 %v2555, %v2551
        %v3236 = vpack.c.b16 %v2556, %v2552
        %v3237 = vpack.c.b16 %v2557, %v2553
        %v3238 = vpack.c.b16 %v2562, %v2558
        %v3239 = vpack.c.b16 %v2563, %v2559
        %v3240 = vpack.c.b16 %v2564, %v2560
        %v3241 = vpack.c.b16 %v2565, %v2561
        %v3242 = vpack.c.b16 %v2570, %v2566
        %v3243 = vpack.c.b16 %v2571, %v2567
        %v3244 = vpack.c.b16 %v2572, %v2568
        %v3245 = vpack.c.b16 %v2573, %v2569
        %v3246 = vpack.c.b16 %v2578, %v2574
        %v3247 = vpack.c.b16 %v2579, %v2575
        %v3248 = vpack.c.b16 %v2580, %v2576
        %v3249 = vpack.c.b16 %v2581, %v2577
        %v3250 = vpack.c.b16 %v2586, %v2582
        %v3251 = vpack.c.b16 %v2587, %v2583
        %v3252 = vpack.c.b16 %v2588, %v2584
        %v3253 = vpack.c.b16 %v2589, %v2585
        %v3254 = vpack.c.b16 %v2594, %v2590
        %v3255 = vpack.c.b16 %v2595, %v2591
        %v3256 = vpack.c.b16 %v2596, %v2592
        %v3257 = vpack.c.b16 %v2597, %v2593
        %v3258 = vpack.c.b16 %v2602, %v2598
        %v3259 = vpack.c.b16 %v2603, %v2599
        %v3260 = vpack.c.b16 %v2604, %v2600
        %v3261 = vpack.c.b16 %v2605, %v2601
        %v3262 = vpack.c.b16 %v2610, %v2606
        %v3263 = vpack.c.b16 %v2611, %v2607
        %v3264 = vpack.c.b16 %v2612, %v2608
        %v3265 = vpack.c.b16 %v2613, %v2609
        %v3266 = vpack.c.b16 %v2618, %v2614
        %v3267 = vpack.c.b16 %v2619, %v2615
        %v3268 = vpack.c.b16 %v2620, %v2616
        %v3269 = vpack.c.b16 %v2621, %v2617
        %v3270 = vpack.c.b16 %v2626, %v2622
        %v3271 = vpack.c.b16 %v2627, %v2623
        %v3272 = vpack.c.b16 %v2628, %v2624
        %v3273 = vpack.c.b16 %v2629, %v2625
        %v3274 = vpack.c.b16 %v2634, %v2630
        %v3275 = vpack.c.b16 %v2635, %v2631
        %v3276 = vpack.c.b16 %v2636, %v2632
        %v3277 = vpack.c.b16 %v2637, %v2633
        %v3278 = vpack.c.b16 %v2642, %v2638
        %v3279 = vpack.c.b16 %v2643, %v2639
        %v3280 = vpack.c.b16 %v2644, %v2640
        %v3281 = vpack.c.b16 %v2645, %v2641
        %v3282 = vpack.c.b16 %v2650, %v2646
        %v3283 = vpack.c.b16 %v2651, %v2647
        %v3284 = vpack.c.b16 %v2652, %v2648
        %v3285 = vpack.c.b16 %v2653, %v2649
        %v3286 = vpack.c.b16 %v2658, %v2654
        %v3287 = vpack.c.b16 %v2659, %v2655
        %v3288 = vpack.c.b16 %v2660, %v2656
        %v3289 = vpack.c.b16 %v2661, %v2657
        %v3290 = vpack.c.b16 %v2666, %v2662
        %v3291 = vpack.c.b16 %v2667, %v2663
        %v3292 = vpack.c.b16 %v2668, %v2664
        %v3293 = vpack.c.b16 %v2669, %v2665
        %v3294 = vpack.c.b16 %v2674, %v2670
        %v3295 = vpack.c.b16 %v2675, %v2671
        %v3296 = vpack.c.b16 %v2676, %v2672
        %v3297 = vpack.c.b16 %v2677, %v2673
        %v3298 = vpack.c.b16 %v2682, %v2678
        %v3299 = vpack.c.b16 %v2683, %v2679
        %v3300 = vpack.c.b16 %v2684, %v2680
        %v3301 = vpack.c.b16 %v2685, %v2681
        %v3302 = vpack.c.b16 %v2690, %v2686
        %v3303 = vpack.c.b16 %v2691, %v2687
        %v3304 = vpack.c.b16 %v2692, %v2688
        %v3305 = vpack.c.b16 %v2693, %v2689
        %v3306 = vpack.c.b16 %v2698, %v2694
        %v3307 = vpack.c.b16 %v2699, %v2695
        %v3308 = vpack.c.b16 %v2700, %v2696
        %v3309 = vpack.c.b16 %v2701, %v2697
        %v3310 = vpack.c.b16 %v2706, %v2702
        %v3311 = vpack.c.b16 %v2707, %v2703
        %v3312 = vpack.c.b16 %v2708, %v2704
        %v3313 = vpack.c.b16 %v2709, %v2705
        %v3314 = vpack.c.b16 %v2714, %v2710
        %v3315 = vpack.c.b16 %v2715, %v2711
        %v3316 = vpack.c.b16 %v2716, %v2712
        %v3317 = vpack.c.b16 %v2717, %v2713
        %v3318 = vpack.c.b16 %v2722, %v2718
        %v3319 = vpack.c.b16 %v2723, %v2719
        %v3320 = vpack.c.b16 %v2724, %v2720
        %v3321 = vpack.c.b16 %v2725, %v2721
        %v3322 = vpack.c.b16 %v2730, %v2726
        %v3323 = vpack.c.b16 %v2731, %v2727
        %v3324 = vpack.c.b16 %v2732, %v2728
        %v3325 = vpack.c.b16 %v2733, %v2729
        %v3326 = vpack.c.b16 %v2738, %v2734
        %v3327 = vpack.c.b16 %v2739, %v2735
        %v3328 = vpack.c.b16 %v2740, %v2736
        %v3329 = vpack.c.b16 %v2741, %v2737
        %v3330 = vpack.c.b16 %v2746, %v2742
        %v3331 = vpack.c.b16 %v2747, %v2743
        %v3332 = vpack.c.b16 %v2748, %v2744
        %v3333 = vpack.c.b16 %v2749, %v2745
        %v3334 = vpack.c.b16 %v2754, %v2750
        %v3335 = vpack.c.b16 %v2755, %v2751
        %v3336 = vpack.c.b16 %v2756, %v2752
        %v3337 = vpack.c.b16 %v2757, %v2753
        %v3338 = vpack.c.b16 %v2762, %v2758
        %v3339 = vpack.c.b16 %v2763, %v2759
        %v3340 = vpack.c.b16 %v2764, %v2760
        %v3341 = vpack.c.b16 %v2765, %v2761
        %v3342 = vpack.c.b16 %v2770, %v2766
        %v3343 = vpack.c.b16 %v2771, %v2767
        %v3344 = vpack.c.b16 %v2772, %v2768
        %v3345 = vpack.c.b16 %v2773, %v2769
        %v3346 = vpack.c.b16 %v2778, %v2774
        %v3347 = vpack.c.b16 %v2779, %v2775
        %v3348 = vpack.c.b16 %v2780, %v2776
        %v3349 = vpack.c.b16 %v2781, %v2777
        %v3350 = vpack.c.b16 %v2786, %v2782
        %v3351 = vpack.c.b16 %v2787, %v2783
        %v3352 = vpack.c.b16 %v2788, %v2784
        %v3353 = vpack.c.b16 %v2789, %v2785
        %v3354 = vpack.c.b16 %v2794, %v2790
        %v3355 = vpack.c.b16 %v2795, %v2791
        %v3356 = vpack.c.b16 %v2796, %v2792
        %v3357 = vpack.c.b16 %v2797, %v2793
        %v3358 = vpack.c.b16 %v2802, %v2798
        %v3359 = vpack.c.b16 %v2803, %v2799
        %v3360 = vpack.c.b16 %v2804, %v2800
        %v3361 = vpack.c.b16 %v2805, %v2801
        %v3362 = vpack.c.b16 %v2810, %v2806
        %v3363 = vpack.c.b16 %v2811, %v2807
        %v3364 = vpack.c.b16 %v2812, %v2808
        %v3365 = vpack.c.b16 %v2813, %v2809
        %v3366 = vpack.c.b16 %v2818, %v2814
        %v3367 = vpack.c.b16 %v2819, %v2815
        %v3368 = vpack.c.b16 %v2820, %v2816
        %v3369 = vpack.c.b16 %v2821, %v2817
        %v3370 = vpack.c.b16 %v2826, %v2822
        %v3371 = vpack.c.b16 %v2827, %v2823
        %v3372 = vpack.c.b16 %v2828, %v2824
        %v3373 = vpack.c.b16 %v2829, %v2825
        %v3374 = vpack.c.b16 %v2834, %v2830
        %v3375 = vpack.c.b16 %v2835, %v2831
        %v3376 = vpack.c.b16 %v2836, %v2832
        %v3377 = vpack.c.b16 %v2837, %v2833
        %v3378 = vpack.c.b16 %v2842, %v2838
        %v3379 = vpack.c.b16 %v2843, %v2839
        %v3380 = vpack.c.b16 %v2844, %v2840
        %v3381 = vpack.c.b16 %v2845, %v2841
        %v3382 = vpack.c.b16 %v2850, %v2846
        %v3383 = vpack.c.b16 %v2851, %v2847
        %v3384 = vpack.c.b16 %v2852, %v2848
        %v3385 = vpack.c.b16 %v2853, %v2849
        %v3386 = vpack.c.b16 %v2858, %v2854
        %v3387 = vpack.c.b16 %v2859, %v2855
        %v3388 = vpack.c.b16 %v2860, %v2856
        %v3389 = vpack.c.b16 %v2861, %v2857
        %v3390 = vpack.c.b16 %v2866, %v2862
        %v3391 = vpack.c.b16 %v2867, %v2863
        %v3392 = vpack.c.b16 %v2868, %v2864
        %v3393 = vpack.c.b16 %v2869, %v2865
        %v3394 = vpack.c.b16 %v2874, %v2870
        %v3395 = vpack.c.b16 %v2875, %v2871
        %v3396 = vpack.c.b16 %v2876, %v2872
        %v3397 = vpack.c.b16 %v2877, %v2873
        %v3398 = vpack.c.b16 %v2882, %v2878
        %v3399 = vpack.c.b16 %v2883, %v2879
        %v3400 = vpack.c.b16 %v2884, %v2880
        %v3401 = vpack.c.b16 %v2885, %v2881
        %v3402 = vpack.c.b16 %v2890, %v2886
        %v3403 = vpack.c.b16 %v2891, %v2887
        %v3404 = vpack.c.b16 %v2892, %v2888
        %v3405 = vpack.c.b16 %v2893, %v2889
        %3918 = vmatpush.bf16.msra.mxu0 %v2922
        %3919 = vmatpush.bf16.msra.mxu0 %v2918
        %3920 = vmatpush.bf16.msra.mxu0 %v2914
        %3921 = vmatpush.bf16.msra.mxu0 %v2910
        %3922 = vmatpush.bf16.msra.mxu0 %v2906
        %3923 = vmatpush.bf16.msra.mxu0 %v2902
        %3924 = vmatpush.bf16.msra.mxu0 %v2898
        %3925 = vmatpush.bf16.msra.mxu0 %v2894
        %3926 = vmatmul.bf16.gmra.mxu0 %v1326
        %v3927 = vpop.f32.mrf.mxu0
        %v3928 = vadd.f32 %v1270, %v3927
        %v3929 = vpop.f32.mrf.mxu0
        %v3930 = vadd.f32 %v1270, %v3929
        %3931 = vdwg.mxu0
        %3932 = vmatpush.bf16.msra.mxu0 %v2954
        %3933 = vmatpush.bf16.msra.mxu0 %v2950
        %3934 = vmatpush.bf16.msra.mxu0 %v2946
        %3935 = vmatpush.bf16.msra.mxu0 %v2942
        %3936 = vmatpush.bf16.msra.mxu0 %v2938
        %3937 = vmatpush.bf16.msra.mxu0 %v2934
        %3938 = vmatpush.bf16.msra.mxu0 %v2930
        %3939 = vmatpush.bf16.msra.mxu0 %v2926
        %3940 = vmatmul.bf16.gmra.mxu0 %v1327
        %v3941 = vpop.f32.mrf.mxu0
        %v3942 = vadd.f32 %v3928, %v3941
        %v3943 = vpop.f32.mrf.mxu0
        %v3944 = vadd.f32 %v3930, %v3943
        %3945 = vdwg.mxu0
        %3946 = vmatpush.bf16.msra.mxu0 %v2986
        %3947 = vmatpush.bf16.msra.mxu0 %v2982
        %3948 = vmatpush.bf16.msra.mxu0 %v2978
        %3949 = vmatpush.bf16.msra.mxu0 %v2974
        %3950 = vmatpush.bf16.msra.mxu0 %v2970
        %3951 = vmatpush.bf16.msra.mxu0 %v2966
        %3952 = vmatpush.bf16.msra.mxu0 %v2962
        %3953 = vmatpush.bf16.msra.mxu0 %v2958
        %3954 = vmatmul.bf16.gmra.mxu0 %v1328
        %v3955 = vpop.f32.mrf.mxu0
        %v3956 = vadd.f32 %v3942, %v3955
        %v3957 = vpop.f32.mrf.mxu0
        %v3958 = vadd.f32 %v3944, %v3957
        %3959 = vdwg.mxu0
        %3960 = vmatpush.bf16.msra.mxu0 %v3018
        %3961 = vmatpush.bf16.msra.mxu0 %v3014
        %3962 = vmatpush.bf16.msra.mxu0 %v3010
        %3963 = vmatpush.bf16.msra.mxu0 %v3006
        %3964 = vmatpush.bf16.msra.mxu0 %v3002
        %3965 = vmatpush.bf16.msra.mxu0 %v2998
        %3966 = vmatpush.bf16.msra.mxu0 %v2994
        %3967 = vmatpush.bf16.msra.mxu0 %v2990
        %3968 = vmatmul.bf16.gmra.mxu0 %v1329
        %v3969 = vpop.f32.mrf.mxu0
        %v3970 = vadd.f32 %v3956, %v3969
        %v3971 = vpop.f32.mrf.mxu0
        %v3972 = vadd.f32 %v3958, %v3971
        %3973 = vdwg.mxu0
        %3974 = vmatpush.bf16.msra.mxu0 %v3050
        %3975 = vmatpush.bf16.msra.mxu0 %v3046
        %3976 = vmatpush.bf16.msra.mxu0 %v3042
        %3977 = vmatpush.bf16.msra.mxu0 %v3038
        %3978 = vmatpush.bf16.msra.mxu0 %v3034
        %3979 = vmatpush.bf16.msra.mxu0 %v3030
        %3980 = vmatpush.bf16.msra.mxu0 %v3026
        %3981 = vmatpush.bf16.msra.mxu0 %v3022
        %3982 = vmatmul.bf16.gmra.mxu0 %v1330
        %v3983 = vpop.f32.mrf.mxu0
        %v3984 = vadd.f32 %v3970, %v3983
        %v3985 = vpop.f32.mrf.mxu0
        %v3986 = vadd.f32 %v3972, %v3985
        %3987 = vdwg.mxu0
        %3988 = vmatpush.bf16.msra.mxu0 %v3082
        %3989 = vmatpush.bf16.msra.mxu0 %v3078
        %3990 = vmatpush.bf16.msra.mxu0 %v3074
        %3991 = vmatpush.bf16.msra.mxu0 %v3070
        %3992 = vmatpush.bf16.msra.mxu0 %v3066
        %3993 = vmatpush.bf16.msra.mxu0 %v3062
        %3994 = vmatpush.bf16.msra.mxu0 %v3058
        %3995 = vmatpush.bf16.msra.mxu0 %v3054
        %3996 = vmatmul.bf16.gmra.mxu0 %v1331
        %v3997 = vpop.f32.mrf.mxu0
        %v3998 = vadd.f32 %v3984, %v3997
        %v3999 = vpop.f32.mrf.mxu0
        %v4000 = vadd.f32 %v3986, %v3999
        %4001 = vdwg.mxu0
        %4002 = vmatpush.bf16.msra.mxu0 %v3114
        %4003 = vmatpush.bf16.msra.mxu0 %v3110
        %4004 = vmatpush.bf16.msra.mxu0 %v3106
        %4005 = vmatpush.bf16.msra.mxu0 %v3102
        %4006 = vmatpush.bf16.msra.mxu0 %v3098
        %4007 = vmatpush.bf16.msra.mxu0 %v3094
        %4008 = vmatpush.bf16.msra.mxu0 %v3090
        %4009 = vmatpush.bf16.msra.mxu0 %v3086
        %4010 = vmatmul.bf16.gmra.mxu0 %v1332
        %v4011 = vpop.f32.mrf.mxu0
        %v4012 = vadd.f32 %v3998, %v4011
        %v4013 = vpop.f32.mrf.mxu0
        %v4014 = vadd.f32 %v4000, %v4013
        %4015 = vdwg.mxu0
        %4016 = vmatpush.bf16.msra.mxu0 %v3146
        %4017 = vmatpush.bf16.msra.mxu0 %v3142
        %4018 = vmatpush.bf16.msra.mxu0 %v3138
        %4019 = vmatpush.bf16.msra.mxu0 %v3134
        %4020 = vmatpush.bf16.msra.mxu0 %v3130
        %4021 = vmatpush.bf16.msra.mxu0 %v3126
        %4022 = vmatpush.bf16.msra.mxu0 %v3122
        %4023 = vmatpush.bf16.msra.mxu0 %v3118
        %4024 = vmatmul.bf16.gmra.mxu0 %v1333
        %v4025 = vpop.f32.mrf.mxu0
        %v4026 = vadd.f32 %v4012, %v4025
        %v4027 = vpop.f32.mrf.mxu0
        %v4028 = vadd.f32 %v4014, %v4027
        %4029 = vdwg.mxu0
        %4030 = vmatpush.bf16.msra.mxu0 %v3178
        %4031 = vmatpush.bf16.msra.mxu0 %v3174
        %4032 = vmatpush.bf16.msra.mxu0 %v3170
        %4033 = vmatpush.bf16.msra.mxu0 %v3166
        %4034 = vmatpush.bf16.msra.mxu0 %v3162
        %4035 = vmatpush.bf16.msra.mxu0 %v3158
        %4036 = vmatpush.bf16.msra.mxu0 %v3154
        %4037 = vmatpush.bf16.msra.mxu0 %v3150
        %4038 = vmatmul.bf16.gmra.mxu0 %v1334
        %v4039 = vpop.f32.mrf.mxu0
        %v4040 = vadd.f32 %v4026, %v4039
        %v4041 = vpop.f32.mrf.mxu0
        %v4042 = vadd.f32 %v4028, %v4041
        %4043 = vdwg.mxu0
        %4044 = vmatpush.bf16.msra.mxu0 %v3210
        %4045 = vmatpush.bf16.msra.mxu0 %v3206
        %4046 = vmatpush.bf16.msra.mxu0 %v3202
        %4047 = vmatpush.bf16.msra.mxu0 %v3198
        %4048 = vmatpush.bf16.msra.mxu0 %v3194
        %4049 = vmatpush.bf16.msra.mxu0 %v3190
        %4050 = vmatpush.bf16.msra.mxu0 %v3186
        %4051 = vmatpush.bf16.msra.mxu0 %v3182
        %4052 = vmatmul.bf16.gmra.mxu0 %v1335
        %v4053 = vpop.f32.mrf.mxu0
        %v4054 = vadd.f32 %v4040, %v4053
        %v4055 = vpop.f32.mrf.mxu0
        %v4056 = vadd.f32 %v4042, %v4055
        %4057 = vdwg.mxu0
        %4058 = vmatpush.bf16.msra.mxu0 %v3242
        %4059 = vmatpush.bf16.msra.mxu0 %v3238
        %4060 = vmatpush.bf16.msra.mxu0 %v3234
        %4061 = vmatpush.bf16.msra.mxu0 %v3230
        %4062 = vmatpush.bf16.msra.mxu0 %v3226
        %4063 = vmatpush.bf16.msra.mxu0 %v3222
        %4064 = vmatpush.bf16.msra.mxu0 %v3218
        %4065 = vmatpush.bf16.msra.mxu0 %v3214
        %4066 = vmatmul.bf16.gmra.mxu0 %v1336
        %v4067 = vpop.f32.mrf.mxu0
        %v4068 = vadd.f32 %v4054, %v4067
        %v4069 = vpop.f32.mrf.mxu0
        %v4070 = vadd.f32 %v4056, %v4069
        %4071 = vdwg.mxu0
        %4072 = vmatpush.bf16.msra.mxu0 %v3274
        %4073 = vmatpush.bf16.msra.mxu0 %v3270
        %4074 = vmatpush.bf16.msra.mxu0 %v3266
        %4075 = vmatpush.bf16.msra.mxu0 %v3262
        %4076 = vmatpush.bf16.msra.mxu0 %v3258
        %4077 = vmatpush.bf16.msra.mxu0 %v3254
        %4078 = vmatpush.bf16.msra.mxu0 %v3250
        %4079 = vmatpush.bf16.msra.mxu0 %v3246
        %4080 = vmatmul.bf16.gmra.mxu0 %v1337
        %v4081 = vpop.f32.mrf.mxu0
        %v4082 = vadd.f32 %v4068, %v4081
        %v4083 = vpop.f32.mrf.mxu0
        %v4084 = vadd.f32 %v4070, %v4083
        %4085 = vdwg.mxu0
        %4086 = vmatpush.bf16.msra.mxu0 %v3306
        %4087 = vmatpush.bf16.msra.mxu0 %v3302
        %4088 = vmatpush.bf16.msra.mxu0 %v3298
        %4089 = vmatpush.bf16.msra.mxu0 %v3294
        %4090 = vmatpush.bf16.msra.mxu0 %v3290
        %4091 = vmatpush.bf16.msra.mxu0 %v3286
        %4092 = vmatpush.bf16.msra.mxu0 %v3282
        %4093 = vmatpush.bf16.msra.mxu0 %v3278
        %4094 = vmatmul.bf16.gmra.mxu0 %v1338
        %v4095 = vpop.f32.mrf.mxu0
        %v4096 = vadd.f32 %v4082, %v4095
        %v4097 = vpop.f32.mrf.mxu0
        %v4098 = vadd.f32 %v4084, %v4097
        %4099 = vdwg.mxu0
        %4100 = vmatpush.bf16.msra.mxu0 %v3338
        %4101 = vmatpush.bf16.msra.mxu0 %v3334
        %4102 = vmatpush.bf16.msra.mxu0 %v3330
        %4103 = vmatpush.bf16.msra.mxu0 %v3326
        %4104 = vmatpush.bf16.msra.mxu0 %v3322
        %4105 = vmatpush.bf16.msra.mxu0 %v3318
        %4106 = vmatpush.bf16.msra.mxu0 %v3314
        %4107 = vmatpush.bf16.msra.mxu0 %v3310
        %4108 = vmatmul.bf16.gmra.mxu0 %v1339
        %v4109 = vpop.f32.mrf.mxu0
        %v4110 = vadd.f32 %v4096, %v4109
        %v4111 = vpop.f32.mrf.mxu0
        %v4112 = vadd.f32 %v4098, %v4111
        %4113 = vdwg.mxu0
        %4114 = vmatpush.bf16.msra.mxu0 %v3370
        %4115 = vmatpush.bf16.msra.mxu0 %v3366
        %4116 = vmatpush.bf16.msra.mxu0 %v3362
        %4117 = vmatpush.bf16.msra.mxu0 %v3358
        %4118 = vmatpush.bf16.msra.mxu0 %v3354
        %4119 = vmatpush.bf16.msra.mxu0 %v3350
        %4120 = vmatpush.bf16.msra.mxu0 %v3346
        %4121 = vmatpush.bf16.msra.mxu0 %v3342
        %4122 = vmatmul.bf16.gmra.mxu0 %v1340
        %v4123 = vpop.f32.mrf.mxu0
        %v4124 = vadd.f32 %v4110, %v4123
        %v4125 = vpop.f32.mrf.mxu0
        %v4126 = vadd.f32 %v4112, %v4125
        %4127 = vdwg.mxu0
        %4128 = vmatpush.bf16.msra.mxu0 %v3402
        %4129 = vmatpush.bf16.msra.mxu0 %v3398
        %4130 = vmatpush.bf16.msra.mxu0 %v3394
        %4131 = vmatpush.bf16.msra.mxu0 %v3390
        %4132 = vmatpush.bf16.msra.mxu0 %v3386
        %4133 = vmatpush.bf16.msra.mxu0 %v3382
        %4134 = vmatpush.bf16.msra.mxu0 %v3378
        %4135 = vmatpush.bf16.msra.mxu0 %v3374
        %4136 = vmatmul.bf16.gmra.mxu0 %v1341
        %v4137 = vpop.f32.mrf.mxu0
        %v4138 = vadd.f32 %v4124, %v4137
        %v4139 = vpop.f32.mrf.mxu0
        %v4140 = vadd.f32 %v4126, %v4139
        %4141 = vdwg.mxu0
        %4142 = vmatpush.bf16.msra.mxu0 %v2923
        %4143 = vmatpush.bf16.msra.mxu0 %v2919
        %4144 = vmatpush.bf16.msra.mxu0 %v2915
        %4145 = vmatpush.bf16.msra.mxu0 %v2911
        %4146 = vmatpush.bf16.msra.mxu0 %v2907
        %4147 = vmatpush.bf16.msra.mxu0 %v2903
        %4148 = vmatpush.bf16.msra.mxu0 %v2899
        %4149 = vmatpush.bf16.msra.mxu0 %v2895
        %4150 = vmatmul.bf16.gmra.mxu0 %v1326
        %v4151 = vpop.f32.mrf.mxu0
        %v4152 = vadd.f32 %v1271, %v4151
        %v4153 = vpop.f32.mrf.mxu0
        %v4154 = vadd.f32 %v1271, %v4153
        %4155 = vdwg.mxu0
        %4156 = vmatpush.bf16.msra.mxu0 %v2955
        %4157 = vmatpush.bf16.msra.mxu0 %v2951
        %4158 = vmatpush.bf16.msra.mxu0 %v2947
        %4159 = vmatpush.bf16.msra.mxu0 %v2943
        %4160 = vmatpush.bf16.msra.mxu0 %v2939
        %4161 = vmatpush.bf16.msra.mxu0 %v2935
        %4162 = vmatpush.bf16.msra.mxu0 %v2931
        %4163 = vmatpush.bf16.msra.mxu0 %v2927
        %4164 = vmatmul.bf16.gmra.mxu0 %v1327
        %v4165 = vpop.f32.mrf.mxu0
        %v4166 = vadd.f32 %v4152, %v4165
        %v4167 = vpop.f32.mrf.mxu0
        %v4168 = vadd.f32 %v4154, %v4167
        %4169 = vdwg.mxu0
        %4170 = vmatpush.bf16.msra.mxu0 %v2987
        %4171 = vmatpush.bf16.msra.mxu0 %v2983
        %4172 = vmatpush.bf16.msra.mxu0 %v2979
        %4173 = vmatpush.bf16.msra.mxu0 %v2975
        %4174 = vmatpush.bf16.msra.mxu0 %v2971
        %4175 = vmatpush.bf16.msra.mxu0 %v2967
        %4176 = vmatpush.bf16.msra.mxu0 %v2963
        %4177 = vmatpush.bf16.msra.mxu0 %v2959
        %4178 = vmatmul.bf16.gmra.mxu0 %v1328
        %v4179 = vpop.f32.mrf.mxu0
        %v4180 = vadd.f32 %v4166, %v4179
        %v4181 = vpop.f32.mrf.mxu0
        %v4182 = vadd.f32 %v4168, %v4181
        %4183 = vdwg.mxu0
        %4184 = vmatpush.bf16.msra.mxu0 %v3019
        %4185 = vmatpush.bf16.msra.mxu0 %v3015
        %4186 = vmatpush.bf16.msra.mxu0 %v3011
        %4187 = vmatpush.bf16.msra.mxu0 %v3007
        %4188 = vmatpush.bf16.msra.mxu0 %v3003
        %4189 = vmatpush.bf16.msra.mxu0 %v2999
        %4190 = vmatpush.bf16.msra.mxu0 %v2995
        %4191 = vmatpush.bf16.msra.mxu0 %v2991
        %4192 = vmatmul.bf16.gmra.mxu0 %v1329
        %v4193 = vpop.f32.mrf.mxu0
        %v4194 = vadd.f32 %v4180, %v4193
        %v4195 = vpop.f32.mrf.mxu0
        %v4196 = vadd.f32 %v4182, %v4195
        %4197 = vdwg.mxu0
        %4198 = vmatpush.bf16.msra.mxu0 %v3051
        %4199 = vmatpush.bf16.msra.mxu0 %v3047
        %4200 = vmatpush.bf16.msra.mxu0 %v3043
        %4201 = vmatpush.bf16.msra.mxu0 %v3039
        %4202 = vmatpush.bf16.msra.mxu0 %v3035
        %4203 = vmatpush.bf16.msra.mxu0 %v3031
        %4204 = vmatpush.bf16.msra.mxu0 %v3027
        %4205 = vmatpush.bf16.msra.mxu0 %v3023
        %4206 = vmatmul.bf16.gmra.mxu0 %v1330
        %v4207 = vpop.f32.mrf.mxu0
        %v4208 = vadd.f32 %v4194, %v4207
        %v4209 = vpop.f32.mrf.mxu0
        %v4210 = vadd.f32 %v4196, %v4209
        %4211 = vdwg.mxu0
        %4212 = vmatpush.bf16.msra.mxu0 %v3083
        %4213 = vmatpush.bf16.msra.mxu0 %v3079
        %4214 = vmatpush.bf16.msra.mxu0 %v3075
        %4215 = vmatpush.bf16.msra.mxu0 %v3071
        %4216 = vmatpush.bf16.msra.mxu0 %v3067
        %4217 = vmatpush.bf16.msra.mxu0 %v3063
        %4218 = vmatpush.bf16.msra.mxu0 %v3059
        %4219 = vmatpush.bf16.msra.mxu0 %v3055
        %4220 = vmatmul.bf16.gmra.mxu0 %v1331
        %v4221 = vpop.f32.mrf.mxu0
        %v4222 = vadd.f32 %v4208, %v4221
        %v4223 = vpop.f32.mrf.mxu0
        %v4224 = vadd.f32 %v4210, %v4223
        %4225 = vdwg.mxu0
        %4226 = vmatpush.bf16.msra.mxu0 %v3115
        %4227 = vmatpush.bf16.msra.mxu0 %v3111
        %4228 = vmatpush.bf16.msra.mxu0 %v3107
        %4229 = vmatpush.bf16.msra.mxu0 %v3103
        %4230 = vmatpush.bf16.msra.mxu0 %v3099
        %4231 = vmatpush.bf16.msra.mxu0 %v3095
        %4232 = vmatpush.bf16.msra.mxu0 %v3091
        %4233 = vmatpush.bf16.msra.mxu0 %v3087
        %4234 = vmatmul.bf16.gmra.mxu0 %v1332
        %v4235 = vpop.f32.mrf.mxu0
        %v4236 = vadd.f32 %v4222, %v4235
        %v4237 = vpop.f32.mrf.mxu0
        %v4238 = vadd.f32 %v4224, %v4237
        %4239 = vdwg.mxu0
        %4240 = vmatpush.bf16.msra.mxu0 %v3147
        %4241 = vmatpush.bf16.msra.mxu0 %v3143
        %4242 = vmatpush.bf16.msra.mxu0 %v3139
        %4243 = vmatpush.bf16.msra.mxu0 %v3135
        %4244 = vmatpush.bf16.msra.mxu0 %v3131
        %4245 = vmatpush.bf16.msra.mxu0 %v3127
        %4246 = vmatpush.bf16.msra.mxu0 %v3123
        %4247 = vmatpush.bf16.msra.mxu0 %v3119
        %4248 = vmatmul.bf16.gmra.mxu0 %v1333
        %v4249 = vpop.f32.mrf.mxu0
        %v4250 = vadd.f32 %v4236, %v4249
        %v4251 = vpop.f32.mrf.mxu0
        %v4252 = vadd.f32 %v4238, %v4251
        %4253 = vdwg.mxu0
        %4254 = vmatpush.bf16.msra.mxu0 %v3179
        %4255 = vmatpush.bf16.msra.mxu0 %v3175
        %4256 = vmatpush.bf16.msra.mxu0 %v3171
        %4257 = vmatpush.bf16.msra.mxu0 %v3167
        %4258 = vmatpush.bf16.msra.mxu0 %v3163
        %4259 = vmatpush.bf16.msra.mxu0 %v3159
        %4260 = vmatpush.bf16.msra.mxu0 %v3155
        %4261 = vmatpush.bf16.msra.mxu0 %v3151
        %4262 = vmatmul.bf16.gmra.mxu0 %v1334
        %v4263 = vpop.f32.mrf.mxu0
        %v4264 = vadd.f32 %v4250, %v4263
        %v4265 = vpop.f32.mrf.mxu0
        %v4266 = vadd.f32 %v4252, %v4265
        %4267 = vdwg.mxu0
        %4268 = vmatpush.bf16.msra.mxu0 %v3211
        %4269 = vmatpush.bf16.msra.mxu0 %v3207
        %4270 = vmatpush.bf16.msra.mxu0 %v3203
        %4271 = vmatpush.bf16.msra.mxu0 %v3199
        %4272 = vmatpush.bf16.msra.mxu0 %v3195
        %4273 = vmatpush.bf16.msra.mxu0 %v3191
        %4274 = vmatpush.bf16.msra.mxu0 %v3187
        %4275 = vmatpush.bf16.msra.mxu0 %v3183
        %4276 = vmatmul.bf16.gmra.mxu0 %v1335
        %v4277 = vpop.f32.mrf.mxu0
        %v4278 = vadd.f32 %v4264, %v4277
        %v4279 = vpop.f32.mrf.mxu0
        %v4280 = vadd.f32 %v4266, %v4279
        %4281 = vdwg.mxu0
        %4282 = vmatpush.bf16.msra.mxu0 %v3243
        %4283 = vmatpush.bf16.msra.mxu0 %v3239
        %4284 = vmatpush.bf16.msra.mxu0 %v3235
        %4285 = vmatpush.bf16.msra.mxu0 %v3231
        %4286 = vmatpush.bf16.msra.mxu0 %v3227
        %4287 = vmatpush.bf16.msra.mxu0 %v3223
        %4288 = vmatpush.bf16.msra.mxu0 %v3219
        %4289 = vmatpush.bf16.msra.mxu0 %v3215
        %4290 = vmatmul.bf16.gmra.mxu0 %v1336
        %v4291 = vpop.f32.mrf.mxu0
        %v4292 = vadd.f32 %v4278, %v4291
        %v4293 = vpop.f32.mrf.mxu0
        %v4294 = vadd.f32 %v4280, %v4293
        %4295 = vdwg.mxu0
        %4296 = vmatpush.bf16.msra.mxu0 %v3275
        %4297 = vmatpush.bf16.msra.mxu0 %v3271
        %4298 = vmatpush.bf16.msra.mxu0 %v3267
        %4299 = vmatpush.bf16.msra.mxu0 %v3263
        %4300 = vmatpush.bf16.msra.mxu0 %v3259
        %4301 = vmatpush.bf16.msra.mxu0 %v3255
        %4302 = vmatpush.bf16.msra.mxu0 %v3251
        %4303 = vmatpush.bf16.msra.mxu0 %v3247
        %4304 = vmatmul.bf16.gmra.mxu0 %v1337
        %v4305 = vpop.f32.mrf.mxu0
        %v4306 = vadd.f32 %v4292, %v4305
        %v4307 = vpop.f32.mrf.mxu0
        %v4308 = vadd.f32 %v4294, %v4307
        %4309 = vdwg.mxu0
        %4310 = vmatpush.bf16.msra.mxu0 %v3307
        %4311 = vmatpush.bf16.msra.mxu0 %v3303
        %4312 = vmatpush.bf16.msra.mxu0 %v3299
        %4313 = vmatpush.bf16.msra.mxu0 %v3295
        %4314 = vmatpush.bf16.msra.mxu0 %v3291
        %4315 = vmatpush.bf16.msra.mxu0 %v3287
        %4316 = vmatpush.bf16.msra.mxu0 %v3283
        %4317 = vmatpush.bf16.msra.mxu0 %v3279
        %4318 = vmatmul.bf16.gmra.mxu0 %v1338
        %v4319 = vpop.f32.mrf.mxu0
        %v4320 = vadd.f32 %v4306, %v4319
        %v4321 = vpop.f32.mrf.mxu0
        %v4322 = vadd.f32 %v4308, %v4321
        %4323 = vdwg.mxu0
        %4324 = vmatpush.bf16.msra.mxu0 %v3339
        %4325 = vmatpush.bf16.msra.mxu0 %v3335
        %4326 = vmatpush.bf16.msra.mxu0 %v3331
        %4327 = vmatpush.bf16.msra.mxu0 %v3327
        %4328 = vmatpush.bf16.msra.mxu0 %v3323
        %4329 = vmatpush.bf16.msra.mxu0 %v3319
        %4330 = vmatpush.bf16.msra.mxu0 %v3315
        %4331 = vmatpush.bf16.msra.mxu0 %v3311
        %4332 = vmatmul.bf16.gmra.mxu0 %v1339
        %v4333 = vpop.f32.mrf.mxu0
        %v4334 = vadd.f32 %v4320, %v4333
        %v4335 = vpop.f32.mrf.mxu0
        %v4336 = vadd.f32 %v4322, %v4335
        %4337 = vdwg.mxu0
        %4338 = vmatpush.bf16.msra.mxu0 %v3371
        %4339 = vmatpush.bf16.msra.mxu0 %v3367
        %4340 = vmatpush.bf16.msra.mxu0 %v3363
        %4341 = vmatpush.bf16.msra.mxu0 %v3359
        %4342 = vmatpush.bf16.msra.mxu0 %v3355
        %4343 = vmatpush.bf16.msra.mxu0 %v3351
        %4344 = vmatpush.bf16.msra.mxu0 %v3347
        %4345 = vmatpush.bf16.msra.mxu0 %v3343
        %4346 = vmatmul.bf16.gmra.mxu0 %v1340
        %v4347 = vpop.f32.mrf.mxu0
        %v4348 = vadd.f32 %v4334, %v4347
        %v4349 = vpop.f32.mrf.mxu0
        %v4350 = vadd.f32 %v4336, %v4349
        %4351 = vdwg.mxu0
        %4352 = vmatpush.bf16.msra.mxu0 %v3403
        %4353 = vmatpush.bf16.msra.mxu0 %v3399
        %4354 = vmatpush.bf16.msra.mxu0 %v3395
        %4355 = vmatpush.bf16.msra.mxu0 %v3391
        %4356 = vmatpush.bf16.msra.mxu0 %v3387
        %4357 = vmatpush.bf16.msra.mxu0 %v3383
        %4358 = vmatpush.bf16.msra.mxu0 %v3379
        %4359 = vmatpush.bf16.msra.mxu0 %v3375
        %4360 = vmatmul.bf16.gmra.mxu0 %v1341
        %v4361 = vpop.f32.mrf.mxu0
        %v4362 = vadd.f32 %v4348, %v4361
        %v4363 = vpop.f32.mrf.mxu0
        %v4364 = vadd.f32 %v4350, %v4363
        %4365 = vdwg.mxu0
        %4366 = vmatpush.bf16.msra.mxu0 %v2924
        %4367 = vmatpush.bf16.msra.mxu0 %v2920
        %4368 = vmatpush.bf16.msra.mxu0 %v2916
        %4369 = vmatpush.bf16.msra.mxu0 %v2912
        %4370 = vmatpush.bf16.msra.mxu0 %v2908
        %4371 = vmatpush.bf16.msra.mxu0 %v2904
        %4372 = vmatpush.bf16.msra.mxu0 %v2900
        %4373 = vmatpush.bf16.msra.mxu0 %v2896
        %4374 = vmatmul.bf16.gmra.mxu0 %v1326
        %v4375 = vpop.f32.mrf.mxu0
        %v4376 = vadd.f32 %v1272, %v4375
        %v4377 = vpop.f32.mrf.mxu0
        %v4378 = vadd.f32 %v1272, %v4377
        %4379 = vdwg.mxu0
        %4380 = vmatpush.bf16.msra.mxu0 %v2956
        %4381 = vmatpush.bf16.msra.mxu0 %v2952
        %4382 = vmatpush.bf16.msra.mxu0 %v2948
        %4383 = vmatpush.bf16.msra.mxu0 %v2944
        %4384 = vmatpush.bf16.msra.mxu0 %v2940
        %4385 = vmatpush.bf16.msra.mxu0 %v2936
        %4386 = vmatpush.bf16.msra.mxu0 %v2932
        %4387 = vmatpush.bf16.msra.mxu0 %v2928
        %4388 = vmatmul.bf16.gmra.mxu0 %v1327
        %v4389 = vpop.f32.mrf.mxu0
        %v4390 = vadd.f32 %v4376, %v4389
        %v4391 = vpop.f32.mrf.mxu0
        %v4392 = vadd.f32 %v4378, %v4391
        %4393 = vdwg.mxu0
        %4394 = vmatpush.bf16.msra.mxu0 %v2988
        %4395 = vmatpush.bf16.msra.mxu0 %v2984
        %4396 = vmatpush.bf16.msra.mxu0 %v2980
        %4397 = vmatpush.bf16.msra.mxu0 %v2976
        %4398 = vmatpush.bf16.msra.mxu0 %v2972
        %4399 = vmatpush.bf16.msra.mxu0 %v2968
        %4400 = vmatpush.bf16.msra.mxu0 %v2964
        %4401 = vmatpush.bf16.msra.mxu0 %v2960
        %4402 = vmatmul.bf16.gmra.mxu0 %v1328
        %v4403 = vpop.f32.mrf.mxu0
        %v4404 = vadd.f32 %v4390, %v4403
        %v4405 = vpop.f32.mrf.mxu0
        %v4406 = vadd.f32 %v4392, %v4405
        %4407 = vdwg.mxu0
        %4408 = vmatpush.bf16.msra.mxu0 %v3020
        %4409 = vmatpush.bf16.msra.mxu0 %v3016
        %4410 = vmatpush.bf16.msra.mxu0 %v3012
        %4411 = vmatpush.bf16.msra.mxu0 %v3008
        %4412 = vmatpush.bf16.msra.mxu0 %v3004
        %4413 = vmatpush.bf16.msra.mxu0 %v3000
        %4414 = vmatpush.bf16.msra.mxu0 %v2996
        %4415 = vmatpush.bf16.msra.mxu0 %v2992
        %4416 = vmatmul.bf16.gmra.mxu0 %v1329
        %v4417 = vpop.f32.mrf.mxu0
        %v4418 = vadd.f32 %v4404, %v4417
        %v4419 = vpop.f32.mrf.mxu0
        %v4420 = vadd.f32 %v4406, %v4419
        %4421 = vdwg.mxu0
        %4422 = vmatpush.bf16.msra.mxu0 %v3052
        %4423 = vmatpush.bf16.msra.mxu0 %v3048
        %4424 = vmatpush.bf16.msra.mxu0 %v3044
        %4425 = vmatpush.bf16.msra.mxu0 %v3040
        %4426 = vmatpush.bf16.msra.mxu0 %v3036
        %4427 = vmatpush.bf16.msra.mxu0 %v3032
        %4428 = vmatpush.bf16.msra.mxu0 %v3028
        %4429 = vmatpush.bf16.msra.mxu0 %v3024
        %4430 = vmatmul.bf16.gmra.mxu0 %v1330
        %v4431 = vpop.f32.mrf.mxu0
        %v4432 = vadd.f32 %v4418, %v4431
        %v4433 = vpop.f32.mrf.mxu0
        %v4434 = vadd.f32 %v4420, %v4433
        %4435 = vdwg.mxu0
        %4436 = vmatpush.bf16.msra.mxu0 %v3084
        %4437 = vmatpush.bf16.msra.mxu0 %v3080
        %4438 = vmatpush.bf16.msra.mxu0 %v3076
        %4439 = vmatpush.bf16.msra.mxu0 %v3072
        %4440 = vmatpush.bf16.msra.mxu0 %v3068
        %4441 = vmatpush.bf16.msra.mxu0 %v3064
        %4442 = vmatpush.bf16.msra.mxu0 %v3060
        %4443 = vmatpush.bf16.msra.mxu0 %v3056
        %4444 = vmatmul.bf16.gmra.mxu0 %v1331
        %v4445 = vpop.f32.mrf.mxu0
        %v4446 = vadd.f32 %v4432, %v4445
        %v4447 = vpop.f32.mrf.mxu0
        %v4448 = vadd.f32 %v4434, %v4447
        %4449 = vdwg.mxu0
        %4450 = vmatpush.bf16.msra.mxu0 %v3116
        %4451 = vmatpush.bf16.msra.mxu0 %v3112
        %4452 = vmatpush.bf16.msra.mxu0 %v3108
        %4453 = vmatpush.bf16.msra.mxu0 %v3104
        %4454 = vmatpush.bf16.msra.mxu0 %v3100
        %4455 = vmatpush.bf16.msra.mxu0 %v3096
        %4456 = vmatpush.bf16.msra.mxu0 %v3092
        %4457 = vmatpush.bf16.msra.mxu0 %v3088
        %4458 = vmatmul.bf16.gmra.mxu0 %v1332
        %v4459 = vpop.f32.mrf.mxu0
        %v4460 = vadd.f32 %v4446, %v4459
        %v4461 = vpop.f32.mrf.mxu0
        %v4462 = vadd.f32 %v4448, %v4461
        %4463 = vdwg.mxu0
        %4464 = vmatpush.bf16.msra.mxu0 %v3148
        %4465 = vmatpush.bf16.msra.mxu0 %v3144
        %4466 = vmatpush.bf16.msra.mxu0 %v3140
        %4467 = vmatpush.bf16.msra.mxu0 %v3136
        %4468 = vmatpush.bf16.msra.mxu0 %v3132
        %4469 = vmatpush.bf16.msra.mxu0 %v3128
        %4470 = vmatpush.bf16.msra.mxu0 %v3124
        %4471 = vmatpush.bf16.msra.mxu0 %v3120
        %4472 = vmatmul.bf16.gmra.mxu0 %v1333
        %v4473 = vpop.f32.mrf.mxu0
        %v4474 = vadd.f32 %v4460, %v4473
        %v4475 = vpop.f32.mrf.mxu0
        %v4476 = vadd.f32 %v4462, %v4475
        %4477 = vdwg.mxu0
        %4478 = vmatpush.bf16.msra.mxu0 %v3180
        %4479 = vmatpush.bf16.msra.mxu0 %v3176
        %4480 = vmatpush.bf16.msra.mxu0 %v3172
        %4481 = vmatpush.bf16.msra.mxu0 %v3168
        %4482 = vmatpush.bf16.msra.mxu0 %v3164
        %4483 = vmatpush.bf16.msra.mxu0 %v3160
        %4484 = vmatpush.bf16.msra.mxu0 %v3156
        %4485 = vmatpush.bf16.msra.mxu0 %v3152
        %4486 = vmatmul.bf16.gmra.mxu0 %v1334
        %v4487 = vpop.f32.mrf.mxu0
        %v4488 = vadd.f32 %v4474, %v4487
        %v4489 = vpop.f32.mrf.mxu0
        %v4490 = vadd.f32 %v4476, %v4489
        %4491 = vdwg.mxu0
        %4492 = vmatpush.bf16.msra.mxu0 %v3212
        %4493 = vmatpush.bf16.msra.mxu0 %v3208
        %4494 = vmatpush.bf16.msra.mxu0 %v3204
        %4495 = vmatpush.bf16.msra.mxu0 %v3200
        %4496 = vmatpush.bf16.msra.mxu0 %v3196
        %4497 = vmatpush.bf16.msra.mxu0 %v3192
        %4498 = vmatpush.bf16.msra.mxu0 %v3188
        %4499 = vmatpush.bf16.msra.mxu0 %v3184
        %4500 = vmatmul.bf16.gmra.mxu0 %v1335
        %v4501 = vpop.f32.mrf.mxu0
        %v4502 = vadd.f32 %v4488, %v4501
        %v4503 = vpop.f32.mrf.mxu0
        %v4504 = vadd.f32 %v4490, %v4503
        %4505 = vdwg.mxu0
        %4506 = vmatpush.bf16.msra.mxu0 %v3244
        %4507 = vmatpush.bf16.msra.mxu0 %v3240
        %4508 = vmatpush.bf16.msra.mxu0 %v3236
        %4509 = vmatpush.bf16.msra.mxu0 %v3232
        %4510 = vmatpush.bf16.msra.mxu0 %v3228
        %4511 = vmatpush.bf16.msra.mxu0 %v3224
        %4512 = vmatpush.bf16.msra.mxu0 %v3220
        %4513 = vmatpush.bf16.msra.mxu0 %v3216
        %4514 = vmatmul.bf16.gmra.mxu0 %v1336
        %v4515 = vpop.f32.mrf.mxu0
        %v4516 = vadd.f32 %v4502, %v4515
        %v4517 = vpop.f32.mrf.mxu0
        %v4518 = vadd.f32 %v4504, %v4517
        %4519 = vdwg.mxu0
        %4520 = vmatpush.bf16.msra.mxu0 %v3276
        %4521 = vmatpush.bf16.msra.mxu0 %v3272
        %4522 = vmatpush.bf16.msra.mxu0 %v3268
        %4523 = vmatpush.bf16.msra.mxu0 %v3264
        %4524 = vmatpush.bf16.msra.mxu0 %v3260
        %4525 = vmatpush.bf16.msra.mxu0 %v3256
        %4526 = vmatpush.bf16.msra.mxu0 %v3252
        %4527 = vmatpush.bf16.msra.mxu0 %v3248
        %4528 = vmatmul.bf16.gmra.mxu0 %v1337
        %v4529 = vpop.f32.mrf.mxu0
        %v4530 = vadd.f32 %v4516, %v4529
        %v4531 = vpop.f32.mrf.mxu0
        %v4532 = vadd.f32 %v4518, %v4531
        %4533 = vdwg.mxu0
        %4534 = vmatpush.bf16.msra.mxu0 %v3308
        %4535 = vmatpush.bf16.msra.mxu0 %v3304
        %4536 = vmatpush.bf16.msra.mxu0 %v3300
        %4537 = vmatpush.bf16.msra.mxu0 %v3296
        %4538 = vmatpush.bf16.msra.mxu0 %v3292
        %4539 = vmatpush.bf16.msra.mxu0 %v3288
        %4540 = vmatpush.bf16.msra.mxu0 %v3284
        %4541 = vmatpush.bf16.msra.mxu0 %v3280
        %4542 = vmatmul.bf16.gmra.mxu0 %v1338
        %v4543 = vpop.f32.mrf.mxu0
        %v4544 = vadd.f32 %v4530, %v4543
        %v4545 = vpop.f32.mrf.mxu0
        %v4546 = vadd.f32 %v4532, %v4545
        %4547 = vdwg.mxu0
        %4548 = vmatpush.bf16.msra.mxu0 %v3340
        %4549 = vmatpush.bf16.msra.mxu0 %v3336
        %4550 = vmatpush.bf16.msra.mxu0 %v3332
        %4551 = vmatpush.bf16.msra.mxu0 %v3328
        %4552 = vmatpush.bf16.msra.mxu0 %v3324
        %4553 = vmatpush.bf16.msra.mxu0 %v3320
        %4554 = vmatpush.bf16.msra.mxu0 %v3316
        %4555 = vmatpush.bf16.msra.mxu0 %v3312
        %4556 = vmatmul.bf16.gmra.mxu0 %v1339
        %v4557 = vpop.f32.mrf.mxu0
        %v4558 = vadd.f32 %v4544, %v4557
        %v4559 = vpop.f32.mrf.mxu0
        %v4560 = vadd.f32 %v4546, %v4559
        %4561 = vdwg.mxu0
        %4562 = vmatpush.bf16.msra.mxu0 %v3372
        %4563 = vmatpush.bf16.msra.mxu0 %v3368
        %4564 = vmatpush.bf16.msra.mxu0 %v3364
        %4565 = vmatpush.bf16.msra.mxu0 %v3360
        %4566 = vmatpush.bf16.msra.mxu0 %v3356
        %4567 = vmatpush.bf16.msra.mxu0 %v3352
        %4568 = vmatpush.bf16.msra.mxu0 %v3348
        %4569 = vmatpush.bf16.msra.mxu0 %v3344
        %4570 = vmatmul.bf16.gmra.mxu0 %v1340
        %v4571 = vpop.f32.mrf.mxu0
        %v4572 = vadd.f32 %v4558, %v4571
        %v4573 = vpop.f32.mrf.mxu0
        %v4574 = vadd.f32 %v4560, %v4573
        %4575 = vdwg.mxu0
        %4576 = vmatpush.bf16.msra.mxu0 %v3404
        %4577 = vmatpush.bf16.msra.mxu0 %v3400
        %4578 = vmatpush.bf16.msra.mxu0 %v3396
        %4579 = vmatpush.bf16.msra.mxu0 %v3392
        %4580 = vmatpush.bf16.msra.mxu0 %v3388
        %4581 = vmatpush.bf16.msra.mxu0 %v3384
        %4582 = vmatpush.bf16.msra.mxu0 %v3380
        %4583 = vmatpush.bf16.msra.mxu0 %v3376
        %4584 = vmatmul.bf16.gmra.mxu0 %v1341
        %v4585 = vpop.f32.mrf.mxu0
        %v4586 = vadd.f32 %v4572, %v4585
        %v4587 = vpop.f32.mrf.mxu0
        %v4588 = vadd.f32 %v4574, %v4587
        %4589 = vdwg.mxu0
        %4590 = vmatpush.bf16.msra.mxu0 %v2925
        %4591 = vmatpush.bf16.msra.mxu0 %v2921
        %4592 = vmatpush.bf16.msra.mxu0 %v2917
        %4593 = vmatpush.bf16.msra.mxu0 %v2913
        %4594 = vmatpush.bf16.msra.mxu0 %v2909
        %4595 = vmatpush.bf16.msra.mxu0 %v2905
        %4596 = vmatpush.bf16.msra.mxu0 %v2901
        %4597 = vmatpush.bf16.msra.mxu0 %v2897
        %4598 = vmatmul.bf16.gmra.mxu0 %v1326
        %v4599 = vpop.f32.mrf.mxu0
        %v4600 = vadd.f32 %v1273, %v4599
        %v4601 = vpop.f32.mrf.mxu0
        %v4602 = vadd.f32 %v1273, %v4601
        %4603 = vdwg.mxu0
        %4604 = vmatpush.bf16.msra.mxu0 %v2957
        %4605 = vmatpush.bf16.msra.mxu0 %v2953
        %4606 = vmatpush.bf16.msra.mxu0 %v2949
        %4607 = vmatpush.bf16.msra.mxu0 %v2945
        %4608 = vmatpush.bf16.msra.mxu0 %v2941
        %4609 = vmatpush.bf16.msra.mxu0 %v2937
        %4610 = vmatpush.bf16.msra.mxu0 %v2933
        %4611 = vmatpush.bf16.msra.mxu0 %v2929
        %4612 = vmatmul.bf16.gmra.mxu0 %v1327
        %v4613 = vpop.f32.mrf.mxu0
        %v4614 = vadd.f32 %v4600, %v4613
        %v4615 = vpop.f32.mrf.mxu0
        %v4616 = vadd.f32 %v4602, %v4615
        %4617 = vdwg.mxu0
        %4618 = vmatpush.bf16.msra.mxu0 %v2989
        %4619 = vmatpush.bf16.msra.mxu0 %v2985
        %4620 = vmatpush.bf16.msra.mxu0 %v2981
        %4621 = vmatpush.bf16.msra.mxu0 %v2977
        %4622 = vmatpush.bf16.msra.mxu0 %v2973
        %4623 = vmatpush.bf16.msra.mxu0 %v2969
        %4624 = vmatpush.bf16.msra.mxu0 %v2965
        %4625 = vmatpush.bf16.msra.mxu0 %v2961
        %4626 = vmatmul.bf16.gmra.mxu0 %v1328
        %v4627 = vpop.f32.mrf.mxu0
        %v4628 = vadd.f32 %v4614, %v4627
        %v4629 = vpop.f32.mrf.mxu0
        %v4630 = vadd.f32 %v4616, %v4629
        %4631 = vdwg.mxu0
        %4632 = vmatpush.bf16.msra.mxu0 %v3021
        %4633 = vmatpush.bf16.msra.mxu0 %v3017
        %4634 = vmatpush.bf16.msra.mxu0 %v3013
        %4635 = vmatpush.bf16.msra.mxu0 %v3009
        %4636 = vmatpush.bf16.msra.mxu0 %v3005
        %4637 = vmatpush.bf16.msra.mxu0 %v3001
        %4638 = vmatpush.bf16.msra.mxu0 %v2997
        %4639 = vmatpush.bf16.msra.mxu0 %v2993
        %4640 = vmatmul.bf16.gmra.mxu0 %v1329
        %v4641 = vpop.f32.mrf.mxu0
        %v4642 = vadd.f32 %v4628, %v4641
        %v4643 = vpop.f32.mrf.mxu0
        %v4644 = vadd.f32 %v4630, %v4643
        %4645 = vdwg.mxu0
        %4646 = vmatpush.bf16.msra.mxu0 %v3053
        %4647 = vmatpush.bf16.msra.mxu0 %v3049
        %4648 = vmatpush.bf16.msra.mxu0 %v3045
        %4649 = vmatpush.bf16.msra.mxu0 %v3041
        %4650 = vmatpush.bf16.msra.mxu0 %v3037
        %4651 = vmatpush.bf16.msra.mxu0 %v3033
        %4652 = vmatpush.bf16.msra.mxu0 %v3029
        %4653 = vmatpush.bf16.msra.mxu0 %v3025
        %4654 = vmatmul.bf16.gmra.mxu0 %v1330
        %v4655 = vpop.f32.mrf.mxu0
        %v4656 = vadd.f32 %v4642, %v4655
        %v4657 = vpop.f32.mrf.mxu0
        %v4658 = vadd.f32 %v4644, %v4657
        %4659 = vdwg.mxu0
        %4660 = vmatpush.bf16.msra.mxu0 %v3085
        %4661 = vmatpush.bf16.msra.mxu0 %v3081
        %4662 = vmatpush.bf16.msra.mxu0 %v3077
        %4663 = vmatpush.bf16.msra.mxu0 %v3073
        %4664 = vmatpush.bf16.msra.mxu0 %v3069
        %4665 = vmatpush.bf16.msra.mxu0 %v3065
        %4666 = vmatpush.bf16.msra.mxu0 %v3061
        %4667 = vmatpush.bf16.msra.mxu0 %v3057
        %4668 = vmatmul.bf16.gmra.mxu0 %v1331
        %v4669 = vpop.f32.mrf.mxu0
        %v4670 = vadd.f32 %v4656, %v4669
        %v4671 = vpop.f32.mrf.mxu0
        %v4672 = vadd.f32 %v4658, %v4671
        %4673 = vdwg.mxu0
        %4674 = vmatpush.bf16.msra.mxu0 %v3117
        %4675 = vmatpush.bf16.msra.mxu0 %v3113
        %4676 = vmatpush.bf16.msra.mxu0 %v3109
        %4677 = vmatpush.bf16.msra.mxu0 %v3105
        %4678 = vmatpush.bf16.msra.mxu0 %v3101
        %4679 = vmatpush.bf16.msra.mxu0 %v3097
        %4680 = vmatpush.bf16.msra.mxu0 %v3093
        %4681 = vmatpush.bf16.msra.mxu0 %v3089
        %4682 = vmatmul.bf16.gmra.mxu0 %v1332
        %v4683 = vpop.f32.mrf.mxu0
        %v4684 = vadd.f32 %v4670, %v4683
        %v4685 = vpop.f32.mrf.mxu0
        %v4686 = vadd.f32 %v4672, %v4685
        %4687 = vdwg.mxu0
        %4688 = vmatpush.bf16.msra.mxu0 %v3149
        %4689 = vmatpush.bf16.msra.mxu0 %v3145
        %4690 = vmatpush.bf16.msra.mxu0 %v3141
        %4691 = vmatpush.bf16.msra.mxu0 %v3137
        %4692 = vmatpush.bf16.msra.mxu0 %v3133
        %4693 = vmatpush.bf16.msra.mxu0 %v3129
        %4694 = vmatpush.bf16.msra.mxu0 %v3125
        %4695 = vmatpush.bf16.msra.mxu0 %v3121
        %4696 = vmatmul.bf16.gmra.mxu0 %v1333
        %v4697 = vpop.f32.mrf.mxu0
        %v4698 = vadd.f32 %v4684, %v4697
        %v4699 = vpop.f32.mrf.mxu0
        %v4700 = vadd.f32 %v4686, %v4699
        %4701 = vdwg.mxu0
        %4702 = vmatpush.bf16.msra.mxu0 %v3181
        %4703 = vmatpush.bf16.msra.mxu0 %v3177
        %4704 = vmatpush.bf16.msra.mxu0 %v3173
        %4705 = vmatpush.bf16.msra.mxu0 %v3169
        %4706 = vmatpush.bf16.msra.mxu0 %v3165
        %4707 = vmatpush.bf16.msra.mxu0 %v3161
        %4708 = vmatpush.bf16.msra.mxu0 %v3157
        %4709 = vmatpush.bf16.msra.mxu0 %v3153
        %4710 = vmatmul.bf16.gmra.mxu0 %v1334
        %v4711 = vpop.f32.mrf.mxu0
        %v4712 = vadd.f32 %v4698, %v4711
        %v4713 = vpop.f32.mrf.mxu0
        %v4714 = vadd.f32 %v4700, %v4713
        %4715 = vdwg.mxu0
        %4716 = vmatpush.bf16.msra.mxu0 %v3213
        %4717 = vmatpush.bf16.msra.mxu0 %v3209
        %4718 = vmatpush.bf16.msra.mxu0 %v3205
        %4719 = vmatpush.bf16.msra.mxu0 %v3201
        %4720 = vmatpush.bf16.msra.mxu0 %v3197
        %4721 = vmatpush.bf16.msra.mxu0 %v3193
        %4722 = vmatpush.bf16.msra.mxu0 %v3189
        %4723 = vmatpush.bf16.msra.mxu0 %v3185
        %4724 = vmatmul.bf16.gmra.mxu0 %v1335
        %v4725 = vpop.f32.mrf.mxu0
        %v4726 = vadd.f32 %v4712, %v4725
        %v4727 = vpop.f32.mrf.mxu0
        %v4728 = vadd.f32 %v4714, %v4727
        %4729 = vdwg.mxu0
        %4730 = vmatpush.bf16.msra.mxu0 %v3245
        %4731 = vmatpush.bf16.msra.mxu0 %v3241
        %4732 = vmatpush.bf16.msra.mxu0 %v3237
        %4733 = vmatpush.bf16.msra.mxu0 %v3233
        %4734 = vmatpush.bf16.msra.mxu0 %v3229
        %4735 = vmatpush.bf16.msra.mxu0 %v3225
        %4736 = vmatpush.bf16.msra.mxu0 %v3221
        %4737 = vmatpush.bf16.msra.mxu0 %v3217
        %4738 = vmatmul.bf16.gmra.mxu0 %v1336
        %v4739 = vpop.f32.mrf.mxu0
        %v4740 = vadd.f32 %v4726, %v4739
        %v4741 = vpop.f32.mrf.mxu0
        %v4742 = vadd.f32 %v4728, %v4741
        %4743 = vdwg.mxu0
        %4744 = vmatpush.bf16.msra.mxu0 %v3277
        %4745 = vmatpush.bf16.msra.mxu0 %v3273
        %4746 = vmatpush.bf16.msra.mxu0 %v3269
        %4747 = vmatpush.bf16.msra.mxu0 %v3265
        %4748 = vmatpush.bf16.msra.mxu0 %v3261
        %4749 = vmatpush.bf16.msra.mxu0 %v3257
        %4750 = vmatpush.bf16.msra.mxu0 %v3253
        %4751 = vmatpush.bf16.msra.mxu0 %v3249
        %4752 = vmatmul.bf16.gmra.mxu0 %v1337
        %v4753 = vpop.f32.mrf.mxu0
        %v4754 = vadd.f32 %v4740, %v4753
        %v4755 = vpop.f32.mrf.mxu0
        %v4756 = vadd.f32 %v4742, %v4755
        %4757 = vdwg.mxu0
        %4758 = vmatpush.bf16.msra.mxu0 %v3309
        %4759 = vmatpush.bf16.msra.mxu0 %v3305
        %4760 = vmatpush.bf16.msra.mxu0 %v3301
        %4761 = vmatpush.bf16.msra.mxu0 %v3297
        %4762 = vmatpush.bf16.msra.mxu0 %v3293
        %4763 = vmatpush.bf16.msra.mxu0 %v3289
        %4764 = vmatpush.bf16.msra.mxu0 %v3285
        %4765 = vmatpush.bf16.msra.mxu0 %v3281
        %4766 = vmatmul.bf16.gmra.mxu0 %v1338
        %v4767 = vpop.f32.mrf.mxu0
        %v4768 = vadd.f32 %v4754, %v4767
        %v4769 = vpop.f32.mrf.mxu0
        %v4770 = vadd.f32 %v4756, %v4769
        %4771 = vdwg.mxu0
        %4772 = vmatpush.bf16.msra.mxu0 %v3341
        %4773 = vmatpush.bf16.msra.mxu0 %v3337
        %4774 = vmatpush.bf16.msra.mxu0 %v3333
        %4775 = vmatpush.bf16.msra.mxu0 %v3329
        %4776 = vmatpush.bf16.msra.mxu0 %v3325
        %4777 = vmatpush.bf16.msra.mxu0 %v3321
        %4778 = vmatpush.bf16.msra.mxu0 %v3317
        %4779 = vmatpush.bf16.msra.mxu0 %v3313
        %4780 = vmatmul.bf16.gmra.mxu0 %v1339
        %v4781 = vpop.f32.mrf.mxu0
        %v4782 = vadd.f32 %v4768, %v4781
        %v4783 = vpop.f32.mrf.mxu0
        %v4784 = vadd.f32 %v4770, %v4783
        %4785 = vdwg.mxu0
        %4786 = vmatpush.bf16.msra.mxu0 %v3373
        %4787 = vmatpush.bf16.msra.mxu0 %v3369
        %4788 = vmatpush.bf16.msra.mxu0 %v3365
        %4789 = vmatpush.bf16.msra.mxu0 %v3361
        %4790 = vmatpush.bf16.msra.mxu0 %v3357
        %4791 = vmatpush.bf16.msra.mxu0 %v3353
        %4792 = vmatpush.bf16.msra.mxu0 %v3349
        %4793 = vmatpush.bf16.msra.mxu0 %v3345
        %4794 = vmatmul.bf16.gmra.mxu0 %v1340
        %v4795 = vpop.f32.mrf.mxu0
        %v4796 = vadd.f32 %v4782, %v4795
        %v4797 = vpop.f32.mrf.mxu0
        %v4798 = vadd.f32 %v4784, %v4797
        %4799 = vdwg.mxu0
        %4800 = vmatpush.bf16.msra.mxu0 %v3405
        %4801 = vmatpush.bf16.msra.mxu0 %v3401
        %4802 = vmatpush.bf16.msra.mxu0 %v3397
        %4803 = vmatpush.bf16.msra.mxu0 %v3393
        %4804 = vmatpush.bf16.msra.mxu0 %v3389
        %4805 = vmatpush.bf16.msra.mxu0 %v3385
        %4806 = vmatpush.bf16.msra.mxu0 %v3381
        %4807 = vmatpush.bf16.msra.mxu0 %v3377
        %4808 = vmatmul.bf16.gmra.mxu0 %v1341
        %v4809 = vpop.f32.mrf.mxu0
        %v4810 = vadd.f32 %v4796, %v4809
        %v4811 = vpop.f32.mrf.mxu0
        %v4812 = vadd.f32 %v4798, %v4811
        %4813 = vdwg.mxu0
        %v4814 = vmax.f32 %v4138, 0.0
        %v4815 = vmax.f32 %v4362, 0.0
        %v4816 = vmax.f32 %v4586, 0.0
        %v4817 = vmax.f32 %v4810, 0.0
        %v4818 = vmax.f32 %v4140, 0.0
        %v4819 = vmax.f32 %v4364, 0.0
        %v4820 = vmax.f32 %v4588, 0.0
        %v4821 = vmax.f32 %v4812, 0.0
        %v4822 = vpack.c.bf16 %v4818, %v4814
        %v4823 = vpack.c.bf16 %v4819, %v4815
        %v4824 = vpack.c.bf16 %v4820, %v4816
        %v4825 = vpack.c.bf16 %v4821, %v4817
        %v4826 = vld [vmem:[%s3] sm:$0xf]
        %v4827 = vld [vmem:[%s3 + $0x4] sm:$0xf]
        %v4828 = vld [vmem:[%s3 + $0x8] sm:$0xf]
        %v4829 = vld [vmem:[%s3 + $0xc] sm:$0xf]
        %v4830 = vld [vmem:[%s3 + $0x10] sm:$0xf]
        %v4831 = vld [vmem:[%s3 + $0x14] sm:$0xf]
        %v4832 = vld [vmem:[%s3 + $0x18] sm:$0xf]
        %v4833 = vld [vmem:[%s3 + $0x1c] sm:$0xf]
        %v4834 = vld [vmem:[%s3 + $0x20] sm:$0xf]
        %v4835 = vld [vmem:[%s3 + $0x24] sm:$0xf]
        %v4836 = vld [vmem:[%s3 + $0x28] sm:$0xf]
        %v4837 = vld [vmem:[%s3 + $0x2c] sm:$0xf]
        %v4838 = vld [vmem:[%s3 + $0x30] sm:$0xf]
        %v4839 = vld [vmem:[%s3 + $0x34] sm:$0xf]
        %v4840 = vld [vmem:[%s3 + $0x38] sm:$0xf]
        %v4841 = vld [vmem:[%s3 + $0x3c] sm:$0xf]
        %v4842 = vld [vmem:[%s3 + $0x40] sm:$0xf]
        %v4843 = vld [vmem:[%s3 + $0x44] sm:$0xf]
        %v4844 = vld [vmem:[%s3 + $0x48] sm:$0xf]
        %v4845 = vld [vmem:[%s3 + $0x4c] sm:$0xf]
        %v4846 = vld [vmem:[%s3 + $0x50] sm:$0xf]
        %v4847 = vld [vmem:[%s3 + $0x54] sm:$0xf]
        %v4848 = vld [vmem:[%s3 + $0x58] sm:$0xf]
        %v4849 = vld [vmem:[%s3 + $0x5c] sm:$0xf]
        %v4850 = vld [vmem:[%s3 + $0x60] sm:$0xf]
        %v4851 = vld [vmem:[%s3 + $0x64] sm:$0xf]
        %v4852 = vld [vmem:[%s3 + $0x68] sm:$0xf]
        %v4853 = vld [vmem:[%s3 + $0x6c] sm:$0xf]
        %v4854 = vld [vmem:[%s3 + $0x70] sm:$0xf]
        %v4855 = vld [vmem:[%s3 + $0x74] sm:$0xf]
        %v4856 = vld [vmem:[%s3 + $0x78] sm:$0xf]
        %v4857 = vld [vmem:[%s3 + $0x7c] sm:$0xf]
        %v4858 = vld [vmem:[%s3 + $0x80] sm:$0xf]
        %v4859 = vld [vmem:[%s3 + $0x84] sm:$0xf]
        %v4860 = vld [vmem:[%s3 + $0x88] sm:$0xf]
        %v4861 = vld [vmem:[%s3 + $0x8c] sm:$0xf]
        %v4862 = vld [vmem:[%s3 + $0x90] sm:$0xf]
        %v4863 = vld [vmem:[%s3 + $0x94] sm:$0xf]
        %v4864 = vld [vmem:[%s3 + $0x98] sm:$0xf]
        %v4865 = vld [vmem:[%s3 + $0x9c] sm:$0xf]
        %v4866 = vld [vmem:[%s3 + $0xa0] sm:$0xf]
        %v4867 = vld [vmem:[%s3 + $0xa4] sm:$0xf]
        %v4868 = vld [vmem:[%s3 + $0xa8] sm:$0xf]
        %v4869 = vld [vmem:[%s3 + $0xac] sm:$0xf]
        %v4870 = vld [vmem:[%s3 + $0xb0] sm:$0xf]
        %v4871 = vld [vmem:[%s3 + $0xb4] sm:$0xf]
        %v4872 = vld [vmem:[%s3 + $0xb8] sm:$0xf]
        %v4873 = vld [vmem:[%s3 + $0xbc] sm:$0xf]
        %v4874 = vld [vmem:[%s3 + $0xc0] sm:$0xf]
        %v4875 = vld [vmem:[%s3 + $0xc4] sm:$0xf]
        %v4876 = vld [vmem:[%s3 + $0xc8] sm:$0xf]
        %v4877 = vld [vmem:[%s3 + $0xcc] sm:$0xf]
        %v4878 = vld [vmem:[%s3 + $0xd0] sm:$0xf]
        %v4879 = vld [vmem:[%s3 + $0xd4] sm:$0xf]
        %v4880 = vld [vmem:[%s3 + $0xd8] sm:$0xf]
        %v4881 = vld [vmem:[%s3 + $0xdc] sm:$0xf]
        %v4882 = vld [vmem:[%s3 + $0xe0] sm:$0xf]
        %v4883 = vld [vmem:[%s3 + $0xe4] sm:$0xf]
        %v4884 = vld [vmem:[%s3 + $0xe8] sm:$0xf]
        %v4885 = vld [vmem:[%s3 + $0xec] sm:$0xf]
        %v4886 = vld [vmem:[%s3 + $0xf0] sm:$0xf]
        %v4887 = vld [vmem:[%s3 + $0xf4] sm:$0xf]
        %v4888 = vld [vmem:[%s3 + $0xf8] sm:$0xf]
        %v4889 = vld [vmem:[%s3 + $0xfc] sm:$0xf]
        %v4890 = vld [vmem:[#allocation8] sm:$0x1]
        %v4892 = vperm.slane %v4890, 0
        %v4958 = vunpack.c.l.b16 %v4826
        %v4959 = vunpack.c.l.b16 %v4827
        %v4960 = vunpack.c.l.b16 %v4828
        %v4961 = vunpack.c.l.b16 %v4829
        %v4962 = vunpack.c.l.b16 %v4830
        %v4963 = vunpack.c.l.b16 %v4831
        %v4964 = vunpack.c.l.b16 %v4832
        %v4965 = vunpack.c.l.b16 %v4833
        %v4966 = vunpack.c.l.b16 %v4834
        %v4967 = vunpack.c.l.b16 %v4835
        %v4968 = vunpack.c.l.b16 %v4836
        %v4969 = vunpack.c.l.b16 %v4837
        %v4970 = vunpack.c.l.b16 %v4838
        %v4971 = vunpack.c.l.b16 %v4839
        %v4972 = vunpack.c.l.b16 %v4840
        %v4973 = vunpack.c.l.b16 %v4841
        %v4974 = vunpack.c.l.b16 %v4842
        %v4975 = vunpack.c.l.b16 %v4843
        %v4976 = vunpack.c.l.b16 %v4844
        %v4977 = vunpack.c.l.b16 %v4845
        %v4978 = vunpack.c.l.b16 %v4846
        %v4979 = vunpack.c.l.b16 %v4847
        %v4980 = vunpack.c.l.b16 %v4848
        %v4981 = vunpack.c.l.b16 %v4849
        %v4982 = vunpack.c.l.b16 %v4850
        %v4983 = vunpack.c.l.b16 %v4851
        %v4984 = vunpack.c.l.b16 %v4852
        %v4985 = vunpack.c.l.b16 %v4853
        %v4986 = vunpack.c.l.b16 %v4854
        %v4987 = vunpack.c.l.b16 %v4855
        %v4988 = vunpack.c.l.b16 %v4856
        %v4989 = vunpack.c.l.b16 %v4857
        %v4990 = vunpack.c.l.b16 %v4858
        %v4991 = vunpack.c.l.b16 %v4859
        %v4992 = vunpack.c.l.b16 %v4860
        %v4993 = vunpack.c.l.b16 %v4861
        %v4994 = vunpack.c.l.b16 %v4862
        %v4995 = vunpack.c.l.b16 %v4863
        %v4996 = vunpack.c.l.b16 %v4864
        %v4997 = vunpack.c.l.b16 %v4865
        %v4998 = vunpack.c.l.b16 %v4866
        %v4999 = vunpack.c.l.b16 %v4867
        %v5000 = vunpack.c.l.b16 %v4868
        %v5001 = vunpack.c.l.b16 %v4869
        %v5002 = vunpack.c.l.b16 %v4870
        %v5003 = vunpack.c.l.b16 %v4871
        %v5004 = vunpack.c.l.b16 %v4872
        %v5005 = vunpack.c.l.b16 %v4873
        %v5006 = vunpack.c.l.b16 %v4874
        %v5007 = vunpack.c.l.b16 %v4875
        %v5008 = vunpack.c.l.b16 %v4876
        %v5009 = vunpack.c.l.b16 %v4877
        %v5010 = vunpack.c.l.b16 %v4878
        %v5011 = vunpack.c.l.b16 %v4879
        %v5012 = vunpack.c.l.b16 %v4880
        %v5013 = vunpack.c.l.b16 %v4881
        %v5014 = vunpack.c.l.b16 %v4882
        %v5015 = vunpack.c.l.b16 %v4883
        %v5016 = vunpack.c.l.b16 %v4884
        %v5017 = vunpack.c.l.b16 %v4885
        %v5018 = vunpack.c.l.b16 %v4886
        %v5019 = vunpack.c.l.b16 %v4887
        %v5020 = vunpack.c.l.b16 %v4888
        %v5021 = vunpack.c.l.b16 %v4889
        %v5022 = vpack.c.b16 %v4959, %v4958
        %v5023 = vpack.c.b16 %v4961, %v4960
        %v5024 = vpack.c.b16 %v4963, %v4962
        %v5025 = vpack.c.b16 %v4965, %v4964
        %v5026 = vpack.c.b16 %v4967, %v4966
        %v5027 = vpack.c.b16 %v4969, %v4968
        %v5028 = vpack.c.b16 %v4971, %v4970
        %v5029 = vpack.c.b16 %v4973, %v4972
        %v5030 = vpack.c.b16 %v4975, %v4974
        %v5031 = vpack.c.b16 %v4977, %v4976
        %v5032 = vpack.c.b16 %v4979, %v4978
        %v5033 = vpack.c.b16 %v4981, %v4980
        %v5034 = vpack.c.b16 %v4983, %v4982
        %v5035 = vpack.c.b16 %v4985, %v4984
        %v5036 = vpack.c.b16 %v4987, %v4986
        %v5037 = vpack.c.b16 %v4989, %v4988
        %v5038 = vpack.c.b16 %v4991, %v4990
        %v5039 = vpack.c.b16 %v4993, %v4992
        %v5040 = vpack.c.b16 %v4995, %v4994
        %v5041 = vpack.c.b16 %v4997, %v4996
        %v5042 = vpack.c.b16 %v4999, %v4998
        %v5043 = vpack.c.b16 %v5001, %v5000
        %v5044 = vpack.c.b16 %v5003, %v5002
        %v5045 = vpack.c.b16 %v5005, %v5004
        %v5046 = vpack.c.b16 %v5007, %v5006
        %v5047 = vpack.c.b16 %v5009, %v5008
        %v5048 = vpack.c.b16 %v5011, %v5010
        %v5049 = vpack.c.b16 %v5013, %v5012
        %v5050 = vpack.c.b16 %v5015, %v5014
        %v5051 = vpack.c.b16 %v5017, %v5016
        %v5052 = vpack.c.b16 %v5019, %v5018
        %v5053 = vpack.c.b16 %v5021, %v5020
        %5086 = vmatpush.bf16.msra.mxu0 %v5029
        %5087 = vmatpush.bf16.msra.mxu0 %v5028
        %5088 = vmatpush.bf16.msra.mxu0 %v5027
        %5089 = vmatpush.bf16.msra.mxu0 %v5026
        %5090 = vmatpush.bf16.msra.mxu0 %v5025
        %5091 = vmatpush.bf16.msra.mxu0 %v5024
        %5092 = vmatpush.bf16.msra.mxu0 %v5023
        %5093 = vmatpush.bf16.msra.mxu0 %v5022
        %5094 = vmatmul.bf16.gmra.mxu0 %v4822
        %v5095 = vpop.f32.mrf.mxu0
        %v5096 = vadd.f32 %v4892, %v5095
        %v5097 = vpop.f32.mrf.mxu0
        %v5098 = vadd.f32 %v4892, %v5097
        %5099 = vdwg.mxu0
        %5100 = vmatpush.bf16.msra.mxu0 %v5037
        %5101 = vmatpush.bf16.msra.mxu0 %v5036
        %5102 = vmatpush.bf16.msra.mxu0 %v5035
        %5103 = vmatpush.bf16.msra.mxu0 %v5034
        %5104 = vmatpush.bf16.msra.mxu0 %v5033
        %5105 = vmatpush.bf16.msra.mxu0 %v5032
        %5106 = vmatpush.bf16.msra.mxu0 %v5031
        %5107 = vmatpush.bf16.msra.mxu0 %v5030
        %5108 = vmatmul.bf16.gmra.mxu0 %v4823
        %v5109 = vpop.f32.mrf.mxu0
        %v5110 = vadd.f32 %v5096, %v5109
        %v5111 = vpop.f32.mrf.mxu0
        %v5112 = vadd.f32 %v5098, %v5111
        %5113 = vdwg.mxu0
        %5114 = vmatpush.bf16.msra.mxu0 %v5045
        %5115 = vmatpush.bf16.msra.mxu0 %v5044
        %5116 = vmatpush.bf16.msra.mxu0 %v5043
        %5117 = vmatpush.bf16.msra.mxu0 %v5042
        %5118 = vmatpush.bf16.msra.mxu0 %v5041
        %5119 = vmatpush.bf16.msra.mxu0 %v5040
        %5120 = vmatpush.bf16.msra.mxu0 %v5039
        %5121 = vmatpush.bf16.msra.mxu0 %v5038
        %5122 = vmatmul.bf16.gmra.mxu0 %v4824
        %v5123 = vpop.f32.mrf.mxu0
        %v5124 = vadd.f32 %v5110, %v5123
        %v5125 = vpop.f32.mrf.mxu0
        %v5126 = vadd.f32 %v5112, %v5125
        %5127 = vdwg.mxu0
        %5128 = vmatpush.bf16.msra.mxu0 %v5053
        %5129 = vmatpush.bf16.msra.mxu0 %v5052
        %5130 = vmatpush.bf16.msra.mxu0 %v5051
        %5131 = vmatpush.bf16.msra.mxu0 %v5050
        %5132 = vmatpush.bf16.msra.mxu0 %v5049
        %5133 = vmatpush.bf16.msra.mxu0 %v5048
        %5134 = vmatpush.bf16.msra.mxu0 %v5047
        %5135 = vmatpush.bf16.msra.mxu0 %v5046
        %5136 = vmatmul.bf16.gmra.mxu0 %v4825
        %v5137 = vpop.f32.mrf.mxu0
        %v5138 = vadd.f32 %v5124, %v5137
        %v5139 = vpop.f32.mrf.mxu0
        %v5140 = vadd.f32 %v5126, %v5139
        %5141 = vdwg.mxu0
        %v5142 = vmax.f32 %v5138, 0.0
        %v5143 = vmax.f32 %v5140, 0.0
        %v5144 = vld [vmem:[%s5] sm:$0xff]
        %v5145 = vld [vmem:[%s5 + $0x8] sm:$0xff]
        %v5146 = vld [vmem:[%s5 + $0x10] sm:$0xff]
        %v5147 = vld [vmem:[%s5 + $0x18] sm:$0xff]
        %v5148 = vld [vmem:[#allocation10] sm:$0x1]
        %v5150 = vperm.slane %v5148, 0
        %vm5152 = vcmask 261120
        %v5154 = vsel %vm5152, %v5142, 0
        %v5157 = vsel %vm5152, %v5143, 0
        %5159 = vmatpush.msra.mxu0 0.0
        %5160 = vmatpush.msra.mxu0 0.0
        %5161 = vmatpush.msra.mxu0 0.0
        %5162 = vmatpush.msra.mxu0 0.0
        %5163 = vmatpush.msra.mxu0 0.0
        %5164 = vmatpush.msra.mxu0 0.0
        %5165 = vmatpush.msra.mxu0 0.0
        %5166 = vmatpush.msra.mxu0 0.0
        %5167 = vmatpush.msra.mxu0 0.0
        %5168 = vmatpush.msra.mxu0 0.0
        %5169 = vmatpush.msra.mxu0 0.0
        %5170 = vmatpush.msra.mxu0 0.0
        %5171 = vmatpush.msra.mxu0 %v5147
        %5172 = vmatpush.msra.mxu0 %v5146
        %5173 = vmatpush.msra.mxu0 %v5145
        %5174 = vmatpush.msra.mxu0 %v5144
        %5175 = vmatmul.f32.gmra.mxu0 %v5154
        %v5176 = vpop.f32.mrf.mxu0
        %v5177 = vadd.f32 %v5150, %v5176
        %5178 = vmatmul.f32.gmra.mxu0 %v5157
        %v5179 = vpop.f32.mrf.mxu0
        %v5180 = vadd.f32 %v5150, %v5179
        %5181 = vdwg.mxu0
        %v5182 = vmax.f32 %v5177, 0.0
        %v5183 = vmax.f32 %v5180, 0.0
        %v5184 = vmul.f32 %v5182, 0.5
        %v5185 = vmul.f32 %v5183, 0.5
        %v5186 = vand.u32 2147483647, %v5184
        %vm5187 = vcmp.le.f32.partialorder %v5186, 0.7853982
        %vm5188 = vcmp.lt.s32.totalorder %v5184, 0
        %v5189 = vand.u32 %v5184, 2139095040
        %v5190 = vshrl.u32 %v5189, 23
        %v5191 = vsub.s32 %v5190, 127
        %v5192 = vand.u32 2147483647, %v5184
        %v5193 = vand.u32 %v5192, 8388607
        %v5194 = vor.u32 %v5193, 8388608
        %v5195 = vsub.s32 0, %v5194
        %v5196 = vadd.s32 %v5191, 1
        %vm5197 = vcmp.gt.s32.totalorder %v5196, 0
        %v5198 = vsel %vm5197, %v5196, 0
        %v5199 = vshrl.u32 %v5198, 5
        %v5200 = vand.u32 %v5198, 31
        %v5201 = vsub.s32 32, %v5200
        %v5202 = vshrl.u32 683565275, %v5201
        %v5203 = vshll.u32 683565275, %v5200
        %v5204 = vshrl.u32 2475754826, %v5201
        %v5205 = vor.u32 %v5203, %v5204
        %v5206 = vshll.u32 2475754826, %v5200
        %v5207 = vshrl.u32 2131351028, %v5201
        %v5208 = vor.u32 %v5206, %v5207
        %v5209 = vshll.u32 2131351028, %v5200
        %v5210 = vshrl.u32 2102212464, %v5201
        %v5211 = vor.u32 %v5209, %v5210
        %v5212 = vshll.u32 2102212464, %v5200
        %v5213 = vshrl.u32 920167782, %v5201
        %v5214 = vor.u32 %v5212, %v5213
        %v5215 = vshll.u32 920167782, %v5200
        %v5216 = vshrl.u32 1326507024, %v5201
        %v5217 = vor.u32 %v5215, %v5216
        %vm5218 = vcmp.lt.s32.totalorder %v5199, 1
        %vm5219 = vcmp.lt.s32.totalorder %v5199, 2
        %vm5220 = vcmp.lt.s32.totalorder %v5199, 3
        %vm5221 = vcmp.lt.s32.totalorder %v5199, 4
        %v5222 = vsel %vm5218, %v5202, %v5205
        %v5223 = vsel %vm5221, %v5211, 2102212464
        %v5224 = vsel %vm5220, %v5208, %v5223
        %v5225 = vsel %vm5219, %v5222, %v5224
        %v5226 = vsel %vm5218, %v5205, %v5208
        %v5227 = vsel %vm5221, %v5214, 920167782
        %v5228 = vsel %vm5220, %v5211, %v5227
        %v5229 = vsel %vm5219, %v5226, %v5228
        %v5230 = vsel %vm5218, %v5208, %v5211
        %v5231 = vsel %vm5221, %v5217, 1326507024
        %v5232 = vsel %vm5220, %v5214, %v5231
        %v5233 = vsel %vm5219, %v5230, %v5232
        %v5234 = vshll.u32 %v5194, 8
        %v5235 = vand.u32 %v5234, 65535
        %v5236 = vshrl.u32 %v5234, 16
        %v5237 = vand.u32 %v5233, 65535
        %v5238 = vshrl.u32 %v5233, 16
        %v5239 = vmul.u32 %v5235, %v5237
        %v5240 = vmul.u32 %v5235, %v5238
        %v5241 = vmul.u32 %v5236, %v5237
        %v5242 = vmul.u32 %v5236, %v5238
        %v5243 = vshll.u32 %v5240, 16
        %v5244 = vshrl.u32 %v5240, 16
        %v5245 = vshll.u32 %v5241, 16
        %v5246 = vshrl.u32 %v5241, 16
        %vm5247 = vc.u32 %v5239, %v5243
        %v5248 = vsel %vm5247, 1, 0
        %v5249 = vadd.s32 %v5239, %v5243
        %v5250 = vadd.s32 %v5242, %v5248
        %vm5251 = vc.u32 %v5249, %v5245
        %v5252 = vsel %vm5251, 1, 0
        %v5253 = vadd.s32 %v5249, %v5245
        %v5254 = vadd.s32 %v5250, %v5252
        %v5255 = vadd.s32 %v5254, %v5244
        %v5256 = vadd.s32 %v5255, %v5246
        %v5257 = vand.u32 %v5234, 65535
        %v5258 = vshrl.u32 %v5234, 16
        %v5259 = vand.u32 %v5229, 65535
        %v5260 = vshrl.u32 %v5229, 16
        %v5261 = vmul.u32 %v5257, %v5259
        %v5262 = vmul.u32 %v5257, %v5260
        %v5263 = vmul.u32 %v5258, %v5259
        %v5264 = vmul.u32 %v5258, %v5260
        %v5265 = vshll.u32 %v5262, 16
        %v5266 = vshrl.u32 %v5262, 16
        %v5267 = vshll.u32 %v5263, 16
        %v5268 = vshrl.u32 %v5263, 16
        %vm5269 = vc.u32 %v5261, %v5265
        %v5270 = vsel %vm5269, 1, 0
        %v5271 = vadd.s32 %v5261, %v5265
        %v5272 = vadd.s32 %v5264, %v5270
        %vm5273 = vc.u32 %v5271, %v5267
        %v5274 = vsel %vm5273, 1, 0
        %v5275 = vadd.s32 %v5271, %v5267
        %v5276 = vadd.s32 %v5272, %v5274
        %v5277 = vadd.s32 %v5276, %v5266
        %v5278 = vadd.s32 %v5277, %v5268
        %v5279 = vmul.u32 %v5234, %v5225
        %v5280 = vadd.s32 %v5256, %v5275
        %vm5281 = vc.u32 %v5256, %v5275
        %v5282 = vadd.s32 %v5278, 1
        %v5283 = vsel %vm5281, %v5282, %v5278
        %v5284 = vadd.s32 %v5279, %v5283
        %v5285 = vadd.s32 %v5284, 536870912
        %v5286 = vshrl.u32 %v5285, 30
        %v5287 = vshll.u32 %v5286, 30
        %v5288 = vsub.s32 %v5284, %v5287
        %vm5289 = vcmp.lt.s32.totalorder %v5288, 0
        %v5290 = vsub.s32 0, %v5288
        %v5291 = vsel %vm5289, %v5290, %v5288
        %v5292 = vclz %v5291
        %v5293 = vsub.s32 %v5292, 2
        %vm5294 = vcmp.gt.s32.totalorder 0, %v5293
        %v5295 = vsel %vm5294, 0, %v5293
        %v5296 = vsub.s32 32, %v5295
        %v5297 = vshll.u32 %v5288, %v5295
        %v5298 = vshrl.u32 %v5280, %v5296
        %v5299 = vor.u32 %v5297, %v5298
        %v5300 = vsub.s32 4294967266, %v5295
        %v5301 = vadd.s32 %v5300, 127
        %v5302 = vshll.u32 %v5301, 23
        %v5303 = vor.u32 4788187, %v5302
        %v5304 = vand.u32 2147483647, %v5303
        %v5306 = vcvt.s32.f32 %v5299
        %v5307 = vmul.f32 %v5306, %v5304
        %v5308 = vxor.u32 %v5307, 2147483648
        %v5309 = vsel %vm5188, %v5308, %v5307
        %v5310 = vsub.s32 4, %v5286
        %v5311 = vsel %vm5188, %v5310, %v5286
        %v5312 = vsel %vm5187, %v5184, %v5309
        %v5313 = vsel %vm5187, 0, %v5311
        %v5314 = vmul.f32 %v5312, %v5312
        %v5315 = vmul.f32 %v5314, -0.001358992
        %v5316 = vadd.f32 %v5315, 0.041655596
        %v5317 = vmul.f32 %v5314, %v5316
        %v5318 = vadd.f32 %v5317, -0.4999988
        %v5319 = vmul.f32 %v5314, %v5318
        %v5320 = vadd.f32 1.0, %v5319
        %v5321 = vmul.f32 %v5312, %v5312
        %v5322 = vmul.f32 %v5321, -0.00019511016
        %v5323 = vadd.f32 %v5322, 0.008332121
        %v5324 = vmul.f32 %v5321, %v5323
        %v5325 = vadd.f32 %v5324, -0.16666654
        %v5326 = vmul.f32 %v5321, %v5325
        %v5327 = vadd.f32 %v5326, 1.0
        %v5328 = vmul.f32 %v5327, %v5312
        %vm5329 = vweird.f32 %v5184
        %v5330 = vand.u32 %v5313, 3
        %vm5331 = vcmp.lt.s32.totalorder %v5330, 2
        %vm5332 = vcmp.eq.s32.totalorder %v5330, 0
        %v5333 = vxor.u32 %v5328, 2147483648
        %v5334 = vsel %vm5332, %v5320, %v5333
        %vm5335 = vcmp.eq.s32.totalorder %v5330, 2
        %v5336 = vxor.u32 %v5320, 2147483648
        %v5337 = vsel %vm5335, %v5336, %v5328
        %v5338 = vsel %vm5331, %v5334, %v5337
        %v5339 = vsel %vm5329, nan, %v5338
        %v5340 = vand.u32 2147483647, %v5185
        %vm5341 = vcmp.le.f32.partialorder %v5340, 0.7853982
        %vm5342 = vcmp.lt.s32.totalorder %v5185, 0
        %v5343 = vand.u32 %v5185, 2139095040
        %v5344 = vshrl.u32 %v5343, 23
        %v5345 = vsub.s32 %v5344, 127
        %v5346 = vand.u32 2147483647, %v5185
        %v5347 = vand.u32 %v5346, 8388607
        %v5348 = vor.u32 %v5347, 8388608
        %v5349 = vsub.s32 0, %v5348
        %v5350 = vadd.s32 %v5345, 1
        %vm5351 = vcmp.gt.s32.totalorder %v5350, 0
        %v5352 = vsel %vm5351, %v5350, 0
        %v5353 = vshrl.u32 %v5352, 5
        %v5354 = vand.u32 %v5352, 31
        %v5355 = vsub.s32 32, %v5354
        %v5356 = vshrl.u32 683565275, %v5355
        %v5357 = vshll.u32 683565275, %v5354
        %v5358 = vshrl.u32 2475754826, %v5355
        %v5359 = vor.u32 %v5357, %v5358
        %v5360 = vshll.u32 2475754826, %v5354
        %v5361 = vshrl.u32 2131351028, %v5355
        %v5362 = vor.u32 %v5360, %v5361
        %v5363 = vshll.u32 2131351028, %v5354
        %v5364 = vshrl.u32 2102212464, %v5355
        %v5365 = vor.u32 %v5363, %v5364
        %v5366 = vshll.u32 2102212464, %v5354
        %v5367 = vshrl.u32 920167782, %v5355
        %v5368 = vor.u32 %v5366, %v5367
        %v5369 = vshll.u32 920167782, %v5354
        %v5370 = vshrl.u32 1326507024, %v5355
        %v5371 = vor.u32 %v5369, %v5370
        %vm5372 = vcmp.lt.s32.totalorder %v5353, 1
        %vm5373 = vcmp.lt.s32.totalorder %v5353, 2
        %vm5374 = vcmp.lt.s32.totalorder %v5353, 3
        %vm5375 = vcmp.lt.s32.totalorder %v5353, 4
        %v5376 = vsel %vm5372, %v5356, %v5359
        %v5377 = vsel %vm5375, %v5365, 2102212464
        %v5378 = vsel %vm5374, %v5362, %v5377
        %v5379 = vsel %vm5373, %v5376, %v5378
        %v5380 = vsel %vm5372, %v5359, %v5362
        %v5381 = vsel %vm5375, %v5368, 920167782
        %v5382 = vsel %vm5374, %v5365, %v5381
        %v5383 = vsel %vm5373, %v5380, %v5382
        %v5384 = vsel %vm5372, %v5362, %v5365
        %v5385 = vsel %vm5375, %v5371, 1326507024
        %v5386 = vsel %vm5374, %v5368, %v5385
        %v5387 = vsel %vm5373, %v5384, %v5386
        %v5388 = vshll.u32 %v5348, 8
        %v5389 = vand.u32 %v5388, 65535
        %v5390 = vshrl.u32 %v5388, 16
        %v5391 = vand.u32 %v5387, 65535
        %v5392 = vshrl.u32 %v5387, 16
        %v5393 = vmul.u32 %v5389, %v5391
        %v5394 = vmul.u32 %v5389, %v5392
        %v5395 = vmul.u32 %v5390, %v5391
        %v5396 = vmul.u32 %v5390, %v5392
        %v5397 = vshll.u32 %v5394, 16
        %v5398 = vshrl.u32 %v5394, 16
        %v5399 = vshll.u32 %v5395, 16
        %v5400 = vshrl.u32 %v5395, 16
        %vm5401 = vc.u32 %v5393, %v5397
        %v5402 = vsel %vm5401, 1, 0
        %v5403 = vadd.s32 %v5393, %v5397
        %v5404 = vadd.s32 %v5396, %v5402
        %vm5405 = vc.u32 %v5403, %v5399
        %v5406 = vsel %vm5405, 1, 0
        %v5407 = vadd.s32 %v5403, %v5399
        %v5408 = vadd.s32 %v5404, %v5406
        %v5409 = vadd.s32 %v5408, %v5398
        %v5410 = vadd.s32 %v5409, %v5400
        %v5411 = vand.u32 %v5388, 65535
        %v5412 = vshrl.u32 %v5388, 16
        %v5413 = vand.u32 %v5383, 65535
        %v5414 = vshrl.u32 %v5383, 16
        %v5415 = vmul.u32 %v5411, %v5413
        %v5416 = vmul.u32 %v5411, %v5414
        %v5417 = vmul.u32 %v5412, %v5413
        %v5418 = vmul.u32 %v5412, %v5414
        %v5419 = vshll.u32 %v5416, 16
        %v5420 = vshrl.u32 %v5416, 16
        %v5421 = vshll.u32 %v5417, 16
        %v5422 = vshrl.u32 %v5417, 16
        %vm5423 = vc.u32 %v5415, %v5419
        %v5424 = vsel %vm5423, 1, 0
        %v5425 = vadd.s32 %v5415, %v5419
        %v5426 = vadd.s32 %v5418, %v5424
        %vm5427 = vc.u32 %v5425, %v5421
        %v5428 = vsel %vm5427, 1, 0
        %v5429 = vadd.s32 %v5425, %v5421
        %v5430 = vadd.s32 %v5426, %v5428
        %v5431 = vadd.s32 %v5430, %v5420
        %v5432 = vadd.s32 %v5431, %v5422
        %v5433 = vmul.u32 %v5388, %v5379
        %v5434 = vadd.s32 %v5410, %v5429
        %vm5435 = vc.u32 %v5410, %v5429
        %v5436 = vadd.s32 %v5432, 1
        %v5437 = vsel %vm5435, %v5436, %v5432
        %v5438 = vadd.s32 %v5433, %v5437
        %v5439 = vadd.s32 %v5438, 536870912
        %v5440 = vshrl.u32 %v5439, 30
        %v5441 = vshll.u32 %v5440, 30
        %v5442 = vsub.s32 %v5438, %v5441
        %vm5443 = vcmp.lt.s32.totalorder %v5442, 0
        %v5444 = vsub.s32 0, %v5442
        %v5445 = vsel %vm5443, %v5444, %v5442
        %v5446 = vclz %v5445
        %v5447 = vsub.s32 %v5446, 2
        %vm5448 = vcmp.gt.s32.totalorder 0, %v5447
        %v5449 = vsel %vm5448, 0, %v5447
        %v5450 = vsub.s32 32, %v5449
        %v5451 = vshll.u32 %v5442, %v5449
        %v5452 = vshrl.u32 %v5434, %v5450
        %v5453 = vor.u32 %v5451, %v5452
        %v5454 = vsub.s32 4294967266, %v5449
        %v5455 = vadd.s32 %v5454, 127
        %v5456 = vshll.u32 %v5455, 23
        %v5457 = vor.u32 4788187, %v5456
        %v5458 = vand.u32 2147483647, %v5457
        %v5460 = vcvt.s32.f32 %v5453
        %v5461 = vmul.f32 %v5460, %v5458
        %v5462 = vxor.u32 %v5461, 2147483648
        %v5463 = vsel %vm5342, %v5462, %v5461
        %v5464 = vsub.s32 4, %v5440
        %v5465 = vsel %vm5342, %v5464, %v5440
        %v5466 = vsel %vm5341, %v5185, %v5463
        %v5467 = vsel %vm5341, 0, %v5465
        %v5468 = vmul.f32 %v5466, %v5466
        %v5469 = vmul.f32 %v5468, -0.001358992
        %v5470 = vadd.f32 %v5469, 0.041655596
        %v5471 = vmul.f32 %v5468, %v5470
        %v5472 = vadd.f32 %v5471, -0.4999988
        %v5473 = vmul.f32 %v5468, %v5472
        %v5474 = vadd.f32 1.0, %v5473
        %v5475 = vmul.f32 %v5466, %v5466
        %v5476 = vmul.f32 %v5475, -0.00019511016
        %v5477 = vadd.f32 %v5476, 0.008332121
        %v5478 = vmul.f32 %v5475, %v5477
        %v5479 = vadd.f32 %v5478, -0.16666654
        %v5480 = vmul.f32 %v5475, %v5479
        %v5481 = vadd.f32 %v5480, 1.0
        %v5482 = vmul.f32 %v5481, %v5466
        %vm5483 = vweird.f32 %v5185
        %v5484 = vand.u32 %v5467, 3
        %vm5485 = vcmp.lt.s32.totalorder %v5484, 2
        %vm5486 = vcmp.eq.s32.totalorder %v5484, 0
        %v5487 = vxor.u32 %v5482, 2147483648
        %v5488 = vsel %vm5486, %v5474, %v5487
        %vm5489 = vcmp.eq.s32.totalorder %v5484, 2
        %v5490 = vxor.u32 %v5474, 2147483648
        %v5491 = vsel %vm5489, %v5490, %v5482
        %v5492 = vsel %vm5485, %v5488, %v5491
        %v5493 = vsel %vm5483, nan, %v5492
        %v5494 = vand.u32 2147483647, %v5184
        %vm5495 = vcmp.le.f32.partialorder %v5494, 0.7853982
        %vm5496 = vcmp.lt.s32.totalorder %v5184, 0
        %v5497 = vand.u32 %v5184, 2139095040
        %v5498 = vshrl.u32 %v5497, 23
        %v5499 = vsub.s32 %v5498, 127
        %v5500 = vand.u32 2147483647, %v5184
        %v5501 = vand.u32 %v5500, 8388607
        %v5502 = vor.u32 %v5501, 8388608
        %v5503 = vsub.s32 0, %v5502
        %v5504 = vadd.s32 %v5499, 1
        %vm5505 = vcmp.gt.s32.totalorder %v5504, 0
        %v5506 = vsel %vm5505, %v5504, 0
        %v5507 = vshrl.u32 %v5506, 5
        %v5508 = vand.u32 %v5506, 31
        %v5509 = vsub.s32 32, %v5508
        %v5510 = vshrl.u32 683565275, %v5509
        %v5511 = vshll.u32 683565275, %v5508
        %v5512 = vshrl.u32 2475754826, %v5509
        %v5513 = vor.u32 %v5511, %v5512
        %v5514 = vshll.u32 2475754826, %v5508
        %v5515 = vshrl.u32 2131351028, %v5509
        %v5516 = vor.u32 %v5514, %v5515
        %v5517 = vshll.u32 2131351028, %v5508
        %v5518 = vshrl.u32 2102212464, %v5509
        %v5519 = vor.u32 %v5517, %v5518
        %v5520 = vshll.u32 2102212464, %v5508
        %v5521 = vshrl.u32 920167782, %v5509
        %v5522 = vor.u32 %v5520, %v5521
        %v5523 = vshll.u32 920167782, %v5508
        %v5524 = vshrl.u32 1326507024, %v5509
        %v5525 = vor.u32 %v5523, %v5524
        %vm5526 = vcmp.lt.s32.totalorder %v5507, 1
        %vm5527 = vcmp.lt.s32.totalorder %v5507, 2
        %vm5528 = vcmp.lt.s32.totalorder %v5507, 3
        %vm5529 = vcmp.lt.s32.totalorder %v5507, 4
        %v5530 = vsel %vm5526, %v5510, %v5513
        %v5531 = vsel %vm5529, %v5519, 2102212464
        %v5532 = vsel %vm5528, %v5516, %v5531
        %v5533 = vsel %vm5527, %v5530, %v5532
        %v5534 = vsel %vm5526, %v5513, %v5516
        %v5535 = vsel %vm5529, %v5522, 920167782
        %v5536 = vsel %vm5528, %v5519, %v5535
        %v5537 = vsel %vm5527, %v5534, %v5536
        %v5538 = vsel %vm5526, %v5516, %v5519
        %v5539 = vsel %vm5529, %v5525, 1326507024
        %v5540 = vsel %vm5528, %v5522, %v5539
        %v5541 = vsel %vm5527, %v5538, %v5540
        %v5542 = vshll.u32 %v5502, 8
        %v5543 = vand.u32 %v5542, 65535
        %v5544 = vshrl.u32 %v5542, 16
        %v5545 = vand.u32 %v5541, 65535
        %v5546 = vshrl.u32 %v5541, 16
        %v5547 = vmul.u32 %v5543, %v5545
        %v5548 = vmul.u32 %v5543, %v5546
        %v5549 = vmul.u32 %v5544, %v5545
        %v5550 = vmul.u32 %v5544, %v5546
        %v5551 = vshll.u32 %v5548, 16
        %v5552 = vshrl.u32 %v5548, 16
        %v5553 = vshll.u32 %v5549, 16
        %v5554 = vshrl.u32 %v5549, 16
        %vm5555 = vc.u32 %v5547, %v5551
        %v5556 = vsel %vm5555, 1, 0
        %v5557 = vadd.s32 %v5547, %v5551
        %v5558 = vadd.s32 %v5550, %v5556
        %vm5559 = vc.u32 %v5557, %v5553
        %v5560 = vsel %vm5559, 1, 0
        %v5561 = vadd.s32 %v5557, %v5553
        %v5562 = vadd.s32 %v5558, %v5560
        %v5563 = vadd.s32 %v5562, %v5552
        %v5564 = vadd.s32 %v5563, %v5554
        %v5565 = vand.u32 %v5542, 65535
        %v5566 = vshrl.u32 %v5542, 16
        %v5567 = vand.u32 %v5537, 65535
        %v5568 = vshrl.u32 %v5537, 16
        %v5569 = vmul.u32 %v5565, %v5567
        %v5570 = vmul.u32 %v5565, %v5568
        %v5571 = vmul.u32 %v5566, %v5567
        %v5572 = vmul.u32 %v5566, %v5568
        %v5573 = vshll.u32 %v5570, 16
        %v5574 = vshrl.u32 %v5570, 16
        %v5575 = vshll.u32 %v5571, 16
        %v5576 = vshrl.u32 %v5571, 16
        %vm5577 = vc.u32 %v5569, %v5573
        %v5578 = vsel %vm5577, 1, 0
        %v5579 = vadd.s32 %v5569, %v5573
        %v5580 = vadd.s32 %v5572, %v5578
        %vm5581 = vc.u32 %v5579, %v5575
        %v5582 = vsel %vm5581, 1, 0
        %v5583 = vadd.s32 %v5579, %v5575
        %v5584 = vadd.s32 %v5580, %v5582
        %v5585 = vadd.s32 %v5584, %v5574
        %v5586 = vadd.s32 %v5585, %v5576
        %v5587 = vmul.u32 %v5542, %v5533
        %v5588 = vadd.s32 %v5564, %v5583
        %vm5589 = vc.u32 %v5564, %v5583
        %v5590 = vadd.s32 %v5586, 1
        %v5591 = vsel %vm5589, %v5590, %v5586
        %v5592 = vadd.s32 %v5587, %v5591
        %v5593 = vadd.s32 %v5592, 536870912
        %v5594 = vshrl.u32 %v5593, 30
        %v5595 = vshll.u32 %v5594, 30
        %v5596 = vsub.s32 %v5592, %v5595
        %vm5597 = vcmp.lt.s32.totalorder %v5596, 0
        %v5598 = vsub.s32 0, %v5596
        %v5599 = vsel %vm5597, %v5598, %v5596
        %v5600 = vclz %v5599
        %v5601 = vsub.s32 %v5600, 2
        %vm5602 = vcmp.gt.s32.totalorder 0, %v5601
        %v5603 = vsel %vm5602, 0, %v5601
        %v5604 = vsub.s32 32, %v5603
        %v5605 = vshll.u32 %v5596, %v5603
        %v5606 = vshrl.u32 %v5588, %v5604
        %v5607 = vor.u32 %v5605, %v5606
        %v5608 = vsub.s32 4294967266, %v5603
        %v5609 = vadd.s32 %v5608, 127
        %v5610 = vshll.u32 %v5609, 23
        %v5611 = vor.u32 4788187, %v5610
        %v5612 = vand.u32 2147483647, %v5611
        %v5614 = vcvt.s32.f32 %v5607
        %v5615 = vmul.f32 %v5614, %v5612
        %v5616 = vxor.u32 %v5615, 2147483648
        %v5617 = vsel %vm5496, %v5616, %v5615
        %v5618 = vsub.s32 4, %v5594
        %v5619 = vsel %vm5496, %v5618, %v5594
        %v5620 = vsel %vm5495, %v5184, %v5617
        %v5621 = vsel %vm5495, 0, %v5619
        %v5622 = vmul.f32 %v5620, %v5620
        %v5623 = vmul.f32 %v5622, -0.001358992
        %v5624 = vadd.f32 %v5623, 0.041655596
        %v5625 = vmul.f32 %v5622, %v5624
        %v5626 = vadd.f32 %v5625, -0.4999988
        %v5627 = vmul.f32 %v5622, %v5626
        %v5628 = vadd.f32 1.0, %v5627
        %v5629 = vmul.f32 %v5620, %v5620
        %v5630 = vmul.f32 %v5629, -0.00019511016
        %v5631 = vadd.f32 %v5630, 0.008332121
        %v5632 = vmul.f32 %v5629, %v5631
        %v5633 = vadd.f32 %v5632, -0.16666654
        %v5634 = vmul.f32 %v5629, %v5633
        %v5635 = vadd.f32 %v5634, 1.0
        %v5636 = vmul.f32 %v5635, %v5620
        %vm5637 = vweird.f32 %v5184
        %v5638 = vadd.s32 %v5621, 3
        %v5639 = vand.u32 %v5638, 3
        %vm5640 = vcmp.lt.s32.totalorder %v5639, 2
        %vm5641 = vcmp.eq.s32.totalorder %v5639, 0
        %v5642 = vxor.u32 %v5636, 2147483648
        %v5643 = vsel %vm5641, %v5628, %v5642
        %vm5644 = vcmp.eq.s32.totalorder %v5639, 2
        %v5645 = vxor.u32 %v5628, 2147483648
        %v5646 = vsel %vm5644, %v5645, %v5636
        %v5647 = vsel %vm5640, %v5643, %v5646
        %v5648 = vsel %vm5637, nan, %v5647
        %v5649 = vand.u32 2147483647, %v5185
        %vm5650 = vcmp.le.f32.partialorder %v5649, 0.7853982
        %vm5651 = vcmp.lt.s32.totalorder %v5185, 0
        %v5652 = vand.u32 %v5185, 2139095040
        %v5653 = vshrl.u32 %v5652, 23
        %v5654 = vsub.s32 %v5653, 127
        %v5655 = vand.u32 2147483647, %v5185
        %v5656 = vand.u32 %v5655, 8388607
        %v5657 = vor.u32 %v5656, 8388608
        %v5658 = vsub.s32 0, %v5657
        %v5659 = vadd.s32 %v5654, 1
        %vm5660 = vcmp.gt.s32.totalorder %v5659, 0
        %v5661 = vsel %vm5660, %v5659, 0
        %v5662 = vshrl.u32 %v5661, 5
        %v5663 = vand.u32 %v5661, 31
        %v5664 = vsub.s32 32, %v5663
        %v5665 = vshrl.u32 683565275, %v5664
        %v5666 = vshll.u32 683565275, %v5663
        %v5667 = vshrl.u32 2475754826, %v5664
        %v5668 = vor.u32 %v5666, %v5667
        %v5669 = vshll.u32 2475754826, %v5663
        %v5670 = vshrl.u32 2131351028, %v5664
        %v5671 = vor.u32 %v5669, %v5670
        %v5672 = vshll.u32 2131351028, %v5663
        %v5673 = vshrl.u32 2102212464, %v5664
        %v5674 = vor.u32 %v5672, %v5673
        %v5675 = vshll.u32 2102212464, %v5663
        %v5676 = vshrl.u32 920167782, %v5664
        %v5677 = vor.u32 %v5675, %v5676
        %v5678 = vshll.u32 920167782, %v5663
        %v5679 = vshrl.u32 1326507024, %v5664
        %v5680 = vor.u32 %v5678, %v5679
        %vm5681 = vcmp.lt.s32.totalorder %v5662, 1
        %vm5682 = vcmp.lt.s32.totalorder %v5662, 2
        %vm5683 = vcmp.lt.s32.totalorder %v5662, 3
        %vm5684 = vcmp.lt.s32.totalorder %v5662, 4
        %v5685 = vsel %vm5681, %v5665, %v5668
        %v5686 = vsel %vm5684, %v5674, 2102212464
        %v5687 = vsel %vm5683, %v5671, %v5686
        %v5688 = vsel %vm5682, %v5685, %v5687
        %v5689 = vsel %vm5681, %v5668, %v5671
        %v5690 = vsel %vm5684, %v5677, 920167782
        %v5691 = vsel %vm5683, %v5674, %v5690
        %v5692 = vsel %vm5682, %v5689, %v5691
        %v5693 = vsel %vm5681, %v5671, %v5674
        %v5694 = vsel %vm5684, %v5680, 1326507024
        %v5695 = vsel %vm5683, %v5677, %v5694
        %v5696 = vsel %vm5682, %v5693, %v5695
        %v5697 = vshll.u32 %v5657, 8
        %v5698 = vand.u32 %v5697, 65535
        %v5699 = vshrl.u32 %v5697, 16
        %v5700 = vand.u32 %v5696, 65535
        %v5701 = vshrl.u32 %v5696, 16
        %v5702 = vmul.u32 %v5698, %v5700
        %v5703 = vmul.u32 %v5698, %v5701
        %v5704 = vmul.u32 %v5699, %v5700
        %v5705 = vmul.u32 %v5699, %v5701
        %v5706 = vshll.u32 %v5703, 16
        %v5707 = vshrl.u32 %v5703, 16
        %v5708 = vshll.u32 %v5704, 16
        %v5709 = vshrl.u32 %v5704, 16
        %vm5710 = vc.u32 %v5702, %v5706
        %v5711 = vsel %vm5710, 1, 0
        %v5712 = vadd.s32 %v5702, %v5706
        %v5713 = vadd.s32 %v5705, %v5711
        %vm5714 = vc.u32 %v5712, %v5708
        %v5715 = vsel %vm5714, 1, 0
        %v5716 = vadd.s32 %v5712, %v5708
        %v5717 = vadd.s32 %v5713, %v5715
        %v5718 = vadd.s32 %v5717, %v5707
        %v5719 = vadd.s32 %v5718, %v5709
        %v5720 = vand.u32 %v5697, 65535
        %v5721 = vshrl.u32 %v5697, 16
        %v5722 = vand.u32 %v5692, 65535
        %v5723 = vshrl.u32 %v5692, 16
        %v5724 = vmul.u32 %v5720, %v5722
        %v5725 = vmul.u32 %v5720, %v5723
        %v5726 = vmul.u32 %v5721, %v5722
        %v5727 = vmul.u32 %v5721, %v5723
        %v5728 = vshll.u32 %v5725, 16
        %v5729 = vshrl.u32 %v5725, 16
        %v5730 = vshll.u32 %v5726, 16
        %v5731 = vshrl.u32 %v5726, 16
        %vm5732 = vc.u32 %v5724, %v5728
        %v5733 = vsel %vm5732, 1, 0
        %v5734 = vadd.s32 %v5724, %v5728
        %v5735 = vadd.s32 %v5727, %v5733
        %vm5736 = vc.u32 %v5734, %v5730
        %v5737 = vsel %vm5736, 1, 0
        %v5738 = vadd.s32 %v5734, %v5730
        %v5739 = vadd.s32 %v5735, %v5737
        %v5740 = vadd.s32 %v5739, %v5729
        %v5741 = vadd.s32 %v5740, %v5731
        %v5742 = vmul.u32 %v5697, %v5688
        %v5743 = vadd.s32 %v5719, %v5738
        %vm5744 = vc.u32 %v5719, %v5738
        %v5745 = vadd.s32 %v5741, 1
        %v5746 = vsel %vm5744, %v5745, %v5741
        %v5747 = vadd.s32 %v5742, %v5746
        %v5748 = vadd.s32 %v5747, 536870912
        %v5749 = vshrl.u32 %v5748, 30
        %v5750 = vshll.u32 %v5749, 30
        %v5751 = vsub.s32 %v5747, %v5750
        %vm5752 = vcmp.lt.s32.totalorder %v5751, 0
        %v5753 = vsub.s32 0, %v5751
        %v5754 = vsel %vm5752, %v5753, %v5751
        %v5755 = vclz %v5754
        %v5756 = vsub.s32 %v5755, 2
        %vm5757 = vcmp.gt.s32.totalorder 0, %v5756
        %v5758 = vsel %vm5757, 0, %v5756
        %v5759 = vsub.s32 32, %v5758
        %v5760 = vshll.u32 %v5751, %v5758
        %v5761 = vshrl.u32 %v5743, %v5759
        %v5762 = vor.u32 %v5760, %v5761
        %v5763 = vsub.s32 4294967266, %v5758
        %v5764 = vadd.s32 %v5763, 127
        %v5765 = vshll.u32 %v5764, 23
        %v5766 = vor.u32 4788187, %v5765
        %v5767 = vand.u32 2147483647, %v5766
        %v5769 = vcvt.s32.f32 %v5762
        %v5770 = vmul.f32 %v5769, %v5767
        %v5771 = vxor.u32 %v5770, 2147483648
        %v5772 = vsel %vm5651, %v5771, %v5770
        %v5773 = vsub.s32 4, %v5749
        %v5774 = vsel %vm5651, %v5773, %v5749
        %v5775 = vsel %vm5650, %v5185, %v5772
        %v5776 = vsel %vm5650, 0, %v5774
        %v5777 = vmul.f32 %v5775, %v5775
        %v5778 = vmul.f32 %v5777, -0.001358992
        %v5779 = vadd.f32 %v5778, 0.041655596
        %v5780 = vmul.f32 %v5777, %v5779
        %v5781 = vadd.f32 %v5780, -0.4999988
        %v5782 = vmul.f32 %v5777, %v5781
        %v5783 = vadd.f32 1.0, %v5782
        %v5784 = vmul.f32 %v5775, %v5775
        %v5785 = vmul.f32 %v5784, -0.00019511016
        %v5786 = vadd.f32 %v5785, 0.008332121
        %v5787 = vmul.f32 %v5784, %v5786
        %v5788 = vadd.f32 %v5787, -0.16666654
        %v5789 = vmul.f32 %v5784, %v5788
        %v5790 = vadd.f32 %v5789, 1.0
        %v5791 = vmul.f32 %v5790, %v5775
        %vm5792 = vweird.f32 %v5185
        %v5793 = vadd.s32 %v5776, 3
        %v5794 = vand.u32 %v5793, 3
        %vm5795 = vcmp.lt.s32.totalorder %v5794, 2
        %vm5796 = vcmp.eq.s32.totalorder %v5794, 0
        %v5797 = vxor.u32 %v5791, 2147483648
        %v5798 = vsel %vm5796, %v5783, %v5797
        %vm5799 = vcmp.eq.s32.totalorder %v5794, 2
        %v5800 = vxor.u32 %v5783, 2147483648
        %v5801 = vsel %vm5799, %v5800, %v5791
        %v5802 = vsel %vm5795, %v5798, %v5801
        %v5803 = vsel %vm5792, nan, %v5802
        %v5804 = vld [vmem:[#allocation11] sm:$0x1]
        %5806 = vset.pattern.permute.xlu0 0
        %5807 = vperm.xlu0 %5806, %v5339
        %v5808 = vpop.permute.xlu0 %5807
        %5811 = vset.pattern.permute.xlu0 0
        %5812 = vperm.xlu0 %5811, %v5493
        %v5813 = vpop.permute.xlu0 %5812
        %v5815 = vperm.slane %v5804, 0
        %v5816 = vmul.f32 %v5808, %v5815
        %v5817 = vmul.f32 %v5813, %v5815
        %v5818 = vld [vmem:[#allocation13] sm:$0x1]
        %5820 = vset.pattern.permute.xlu0 0
        %5821 = vperm.xlu0 %5820, %v5648
        %v5822 = vpop.permute.xlu0 %5821
        %5825 = vset.pattern.permute.xlu0 0
        %5826 = vperm.xlu0 %5825, %v5803
        %v5827 = vpop.permute.xlu0 %5826
        %v5829 = vperm.slane %v5818, 0
        %v5830 = vmul.f32 %v5822, %v5829
        %v5831 = vmul.f32 %v5827, %v5829
        %v5832 = vadd.f32 %v5816, %v5830
        %v5833 = vadd.f32 %v5817, %v5831
        %v5834 = vld [vmem:[#allocation11 + $0x1] sm:$0x1]
        %5835 = vset.pattern.permute.xlu0 1
        %5836 = vperm.xlu0 %5835, %v5339
        %v5837 = vpop.permute.xlu0 %5836
        %5839 = vset.pattern.permute.xlu0 1
        %5840 = vperm.xlu0 %5839, %v5493
        %v5841 = vpop.permute.xlu0 %5840
        %v5843 = vperm.slane %v5834, 0
        %v5844 = vmul.f32 %v5837, %v5843
        %v5845 = vmul.f32 %v5841, %v5843
        %v5846 = vld [vmem:[#allocation13 + $0x1] sm:$0x1]
        %5847 = vset.pattern.permute.xlu0 1
        %5848 = vperm.xlu0 %5847, %v5648
        %v5849 = vpop.permute.xlu0 %5848
        %5851 = vset.pattern.permute.xlu0 1
        %5852 = vperm.xlu0 %5851, %v5803
        %v5853 = vpop.permute.xlu0 %5852
        %v5855 = vperm.slane %v5846, 0
        %v5856 = vmul.f32 %v5849, %v5855
        %v5857 = vmul.f32 %v5853, %v5855
        %v5858 = vadd.f32 %v5844, %v5856
        %v5859 = vadd.f32 %v5845, %v5857
        %v5860 = vmul.f32 %v5832, %v5858
        %v5861 = vmul.f32 %v5833, %v5859
        %v5862 = vld [vmem:[#allocation11 + $0x2] sm:$0x1]
        %5863 = vset.pattern.permute.xlu0 2
        %5864 = vperm.xlu0 %5863, %v5339
        %v5865 = vpop.permute.xlu0 %5864
        %5867 = vset.pattern.permute.xlu0 2
        %5868 = vperm.xlu0 %5867, %v5493
        %v5869 = vpop.permute.xlu0 %5868
        %v5871 = vperm.slane %v5862, 0
        %v5872 = vmul.f32 %v5865, %v5871
        %v5873 = vmul.f32 %v5869, %v5871
        %v5874 = vld [vmem:[#allocation13 + $0x2] sm:$0x1]
        %5875 = vset.pattern.permute.xlu0 2
        %5876 = vperm.xlu0 %5875, %v5648
        %v5877 = vpop.permute.xlu0 %5876
        %5879 = vset.pattern.permute.xlu0 2
        %5880 = vperm.xlu0 %5879, %v5803
        %v5881 = vpop.permute.xlu0 %5880
        %v5883 = vperm.slane %v5874, 0
        %v5884 = vmul.f32 %v5877, %v5883
        %v5885 = vmul.f32 %v5881, %v5883
        %v5886 = vadd.f32 %v5872, %v5884
        %v5887 = vadd.f32 %v5873, %v5885
        %v5888 = vmul.f32 %v5860, %v5886
        %v5889 = vmul.f32 %v5861, %v5887
        %v5890 = vld [vmem:[#allocation11 + $0x3] sm:$0x1]
        %5891 = vset.pattern.permute.xlu0 3
        %5892 = vperm.xlu0 %5891, %v5339
        %v5893 = vpop.permute.xlu0 %5892
        %5895 = vset.pattern.permute.xlu0 3
        %5896 = vperm.xlu0 %5895, %v5493
        %v5897 = vpop.permute.xlu0 %5896
        %v5899 = vperm.slane %v5890, 0
        %v5900 = vmul.f32 %v5893, %v5899
        %v5901 = vmul.f32 %v5897, %v5899
        %v5902 = vld [vmem:[#allocation13 + $0x3] sm:$0x1]
        %5903 = vset.pattern.permute.xlu0 3
        %5904 = vperm.xlu0 %5903, %v5648
        %v5905 = vpop.permute.xlu0 %5904
        %5907 = vset.pattern.permute.xlu0 3
        %5908 = vperm.xlu0 %5907, %v5803
        %v5909 = vpop.permute.xlu0 %5908
        %v5911 = vperm.slane %v5902, 0
        %v5912 = vmul.f32 %v5905, %v5911
        %v5913 = vmul.f32 %v5909, %v5911
        %v5914 = vadd.f32 %v5900, %v5912
        %v5915 = vadd.f32 %v5901, %v5913
        %v5916 = vmul.f32 %v5888, %v5914
        %v5917 = vmul.f32 %v5889, %v5915
        %v5918 = vld [vmem:[#allocation14] sm:$0xff]
        %v5919 = vld [vmem:[#allocation14 + $0x8] sm:$0xff]
        %vm5920 = vcmask 130048
        %v5922 = vsel %vm5920, %v5916, 0
        %v5925 = vsel %vm5920, %v5917, 0
        %5927 = vmatpush.msra.mxu0 0.0
        %5928 = vmatpush.msra.mxu0 0.0
        %5929 = vmatpush.msra.mxu0 0.0
        %5930 = vmatpush.msra.mxu0 0.0
        %5931 = vmatpush.msra.mxu0 0.0
        %5932 = vmatpush.msra.mxu0 0.0
        %5933 = vmatpush.msra.mxu0 0.0
        %5934 = vmatpush.msra.mxu0 0.0
        %5935 = vmatpush.msra.mxu0 0.0
        %5936 = vmatpush.msra.mxu0 0.0
        %5937 = vmatpush.msra.mxu0 0.0
        %5938 = vmatpush.msra.mxu0 0.0
        %5939 = vmatpush.msra.mxu0 0.0
        %5940 = vmatpush.msra.mxu0 0.0
        %5941 = vmatpush.msra.mxu0 %v5919
        %5942 = vmatpush.msra.mxu0 %v5918
        %5943 = vmatmul.f32.gmra.mxu0 %v5922
        %v5944 = vpop.f32.mrf.mxu0
        %v5945 = vadd.f32 0.0, %v5944
        %5946 = vmatmul.f32.gmra.mxu0 %v5925
        %v5947 = vpop.f32.mrf.mxu0
        %v5948 = vadd.f32 0.0, %v5947
        %5949 = vdwg.mxu0
        %v5950 = vmul.f32 %v5945, %v5945
        %v5951 = vmul.f32 %v5948, %v5948
        %5954 = vrot.lane.b32.xlu0 %v5950, 112
        %v5955 = vpop.permute.xlu0 %5954
        %5956 = vrot.lane.b32.xlu0 %v5951, 112
        %v5957 = vpop.permute.xlu0 %5956
        %v5960 = vadd.f32 %v5950, %v5955
        %v5961 = vadd.f32 %v5951, %v5957
        %v5962 = vld [vmem:[%s10] sm:$0xff]
        %v5963 = vld [vmem:[%s10 + $0x8] sm:$0xff]
        %v5965 = vsel %vm5920, %v5960, 0
        %v5968 = vsel %vm5920, %v5961, 0
        %5970 = vmatpush.msra.mxu0 0.0
        %5971 = vmatpush.msra.mxu0 0.0
        %5972 = vmatpush.msra.mxu0 0.0
        %5973 = vmatpush.msra.mxu0 0.0
        %5974 = vmatpush.msra.mxu0 0.0
        %5975 = vmatpush.msra.mxu0 0.0
        %5976 = vmatpush.msra.mxu0 0.0
        %5977 = vmatpush.msra.mxu0 0.0
        %5978 = vmatpush.msra.mxu0 0.0
        %5979 = vmatpush.msra.mxu0 0.0
        %5980 = vmatpush.msra.mxu0 0.0
        %5981 = vmatpush.msra.mxu0 0.0
        %5982 = vmatpush.msra.mxu0 0.0
        %5983 = vmatpush.msra.mxu0 0.0
        %5984 = vmatpush.msra.mxu0 %v5963
        %5985 = vmatpush.msra.mxu0 %v5962
        %5986 = vmatmul.f32.gmra.mxu0 %v5965
        %v5987 = vpop.f32.mrf.mxu0
        %v5988 = vadd.f32 0.0, %v5987
        %5989 = vmatmul.f32.gmra.mxu0 %v5968
        %v5990 = vpop.f32.mrf.mxu0
        %v5991 = vadd.f32 0.0, %v5990
        %5992 = vdwg.mxu0
        %v5993 = vmul.f32 %v5988, %v5988
        %v5994 = vmul.f32 %v5991, %v5991
        %vm5995 = vcmask 31744
        %v5996 = vsel %vm5995, %v5993, 0.0
        %5997 = vadd.xlane.f32.xlu0 %v5996
        %v5998 = vpop.xlane.xlu0 %5997
        %v5999 = vsel %vm5995, %v5994, 0.0
        %6000 = vadd.xlane.f32.xlu0 %v5999
        %v6001 = vpop.xlane.xlu0 %6000
        %v6002 = vrsqrt.pop %v5998
        %v6003 = vmul.f32 %v6002, %v5998
        %v6004 = vmul.f32 %v6003, %v6002
        %v6005 = vmul.f32 0.5, %v6004
        %v6006 = vsub.f32 1.5, %v6005
        %v6007 = vmul.f32 %v6002, %v6006
        %v6008 = vmul.f32 %v5998, %v6007
        %vm6009 = vcmp.eq.f32.partialorder %v5998, inf
        %v6010 = vsel %vm6009, %v5998, %v6008
        %vm6011 = vcmp.eq.f32.partialorder %v5998, 0.0
        %v6012 = vand.u32 %v5998, 2147483648
        %v6013 = vsel %vm6011, %v6012, %v6010
        %v6014 = vrsqrt.pop %v6001
        %v6015 = vmul.f32 %v6014, %v6001
        %v6016 = vmul.f32 %v6015, %v6014
        %v6017 = vmul.f32 0.5, %v6016
        %v6018 = vsub.f32 1.5, %v6017
        %v6019 = vmul.f32 %v6014, %v6018
        %v6020 = vmul.f32 %v6001, %v6019
        %vm6021 = vcmp.eq.f32.partialorder %v6001, inf
        %v6022 = vsel %vm6021, %v6001, %v6020
        %vm6023 = vcmp.eq.f32.partialorder %v6001, 0.0
        %v6024 = vand.u32 %v6001, 2147483648
        %v6025 = vsel %vm6023, %v6024, %v6022
        %v6026 = vmax.f32 %v6013, 1e-12
        %v6027 = vmax.f32 %v6025, 1e-12
        %v6028 = vrcp.pop %v6026
        %v6029 = vmul.f32 %v6026, %v6028
        %v6030 = vsub.f32 1.0, %v6029
        %v6031 = vmul.f32 %v6028, %v6030
        %v6032 = vadd.f32 %v6028, %v6031
        %vm6033 = vweird.f32 %v6026
        %vm6034 = vweird.f32 %v6028
        %vm6035 = vmor %vm6033, %vm6034
        %v6036 = vsel %vm6035, %v6028, %v6032
        %v6037 = vand.u32 2147483647, %v6026
        %vm6038 = vcmp.eq.f32.partialorder %v6037, 8.507059e+37
        %v6039 = vand.u32 %v6026, 2147483648
        %v6040 = vor.u32 1.1754944e-38, %v6039
        %v6041 = vsel %vm6038, %v6040, %v6036
        %v6042 = vmul.f32 %v5988, %v6041
        %v6043 = vrcp.pop %v6027
        %v6044 = vmul.f32 %v6027, %v6043
        %v6045 = vsub.f32 1.0, %v6044
        %v6046 = vmul.f32 %v6043, %v6045
        %v6047 = vadd.f32 %v6043, %v6046
        %vm6048 = vweird.f32 %v6027
        %vm6049 = vweird.f32 %v6043
        %vm6050 = vmor %vm6048, %vm6049
        %v6051 = vsel %vm6050, %v6043, %v6047
        %v6052 = vand.u32 2147483647, %v6027
        %vm6053 = vcmp.eq.f32.partialorder %v6052, 8.507059e+37
        %v6054 = vand.u32 %v6027, 2147483648
        %v6055 = vor.u32 1.1754944e-38, %v6054
        %v6056 = vsel %vm6053, %v6055, %v6051
        %v6057 = vmul.f32 %v5991, %v6056
        %v6058 = vld [vmem:[#allocation16] sm:$0xf]
        %v6060 = vsel %vm5995, %v6042, 0
        %v6063 = vsel %vm5995, %v6057, 0
        %vm6065 = vcmask 1043456
        %v6067 = vsel %vm6065, %v6058, 0
        %6069 = vmatpush.msra.mxu0 0.0
        %6070 = vmatpush.msra.mxu0 0.0
        %6071 = vmatpush.msra.mxu0 0.0
        %6072 = vmatpush.msra.mxu0 0.0
        %6073 = vmatpush.msra.mxu0 0.0
        %6074 = vmatpush.msra.mxu0 0.0
        %6075 = vmatpush.msra.mxu0 0.0
        %6076 = vmatpush.msra.mxu0 0.0
        %6077 = vmatpush.msra.mxu0 0.0
        %6078 = vmatpush.msra.mxu0 0.0
        %6079 = vmatpush.msra.mxu0 0.0
        %6080 = vmatpush.msra.mxu0 0.0
        %6081 = vmatpush.msra.mxu0 0.0
        %6082 = vmatpush.msra.mxu0 0.0
        %6083 = vmatpush.msra.mxu0 0.0
        %6084 = vmatpush.msra.mxu0 %v6067
        %6085 = vmatmul.f32.gmra.mxu0 %v6060
        %v6086 = vpop.f32.mrf.mxu0
        %v6087 = vadd.f32 0.0, %v6086
        %6088 = vmatmul.f32.gmra.mxu0 %v6063
        %v6089 = vpop.f32.mrf.mxu0
        %v6090 = vadd.f32 0.0, %v6089
        %6091 = vdwg.mxu0
        %v6092 = vmul.f32 %v6087, %v6087
        %v6093 = vmul.f32 %v6090, %v6090
        %6096 = vrot.lane.b32.xlu0 %v6092, 124
        %v6097 = vpop.permute.xlu0 %6096
        %6098 = vrot.lane.b32.xlu0 %v6093, 124
        %v6099 = vpop.permute.xlu0 %6098
        %v6102 = vadd.f32 %v6092, %v6097
        %v6103 = vadd.f32 %v6093, %v6099
        %v6104 = vld [vmem:[%s12] sm:$0xf]
        %v6106 = vsel %vm5995, %v6102, 0
        %v6109 = vsel %vm5995, %v6103, 0
        %v6112 = vsel %vm6065, %v6104, 0
        %6114 = vmatpush.msra.mxu0 0.0
        %6115 = vmatpush.msra.mxu0 0.0
        %6116 = vmatpush.msra.mxu0 0.0
        %6117 = vmatpush.msra.mxu0 0.0
        %6118 = vmatpush.msra.mxu0 0.0
        %6119 = vmatpush.msra.mxu0 0.0
        %6120 = vmatpush.msra.mxu0 0.0
        %6121 = vmatpush.msra.mxu0 0.0
        %6122 = vmatpush.msra.mxu0 0.0
        %6123 = vmatpush.msra.mxu0 0.0
        %6124 = vmatpush.msra.mxu0 0.0
        %6125 = vmatpush.msra.mxu0 0.0
        %6126 = vmatpush.msra.mxu0 0.0
        %6127 = vmatpush.msra.mxu0 0.0
        %6128 = vmatpush.msra.mxu0 0.0
        %6129 = vmatpush.msra.mxu0 %v6112
        %6130 = vmatmul.f32.gmra.mxu0 %v6106
        %v6131 = vpop.f32.mrf.mxu0
        %v6132 = vadd.f32 0.0, %v6131
        %6133 = vmatmul.f32.gmra.mxu0 %v6109
        %v6134 = vpop.f32.mrf.mxu0
        %v6135 = vadd.f32 0.0, %v6134
        %6136 = vdwg.mxu0
        %v6137 = vld [vmem:[#allocation17] sm:$0x3]
        %v6138 = vld [vmem:[#allocation19] sm:$0x1]
        %v6140 = vperm.slane %v6138, 0
        %vm6142 = vcmask 15360
        %v6144 = vsel %vm6142, %v6132, 0
        %v6147 = vsel %vm6142, %v6135, 0
        %vm6149 = vcmask 1041408
        %v6151 = vsel %vm6149, %v6137, 0
        %6153 = vmatpush.msra.mxu0 0.0
        %6154 = vmatpush.msra.mxu0 0.0
        %6155 = vmatpush.msra.mxu0 0.0
        %6156 = vmatpush.msra.mxu0 0.0
        %6157 = vmatpush.msra.mxu0 0.0
        %6158 = vmatpush.msra.mxu0 0.0
        %6159 = vmatpush.msra.mxu0 0.0
        %6160 = vmatpush.msra.mxu0 0.0
        %6161 = vmatpush.msra.mxu0 0.0
        %6162 = vmatpush.msra.mxu0 0.0
        %6163 = vmatpush.msra.mxu0 0.0
        %6164 = vmatpush.msra.mxu0 0.0
        %6165 = vmatpush.msra.mxu0 0.0
        %6166 = vmatpush.msra.mxu0 0.0
        %6167 = vmatpush.msra.mxu0 0.0
        %6168 = vmatpush.msra.mxu0 %v6151
        %6169 = vmatmul.f32.gmra.mxu0 %v6144
        %v6170 = vpop.f32.mrf.mxu0
        %v6171 = vadd.f32 %v6140, %v6170
        %6172 = vmatmul.f32.gmra.mxu0 %v6147
        %v6173 = vpop.f32.mrf.mxu0
        %v6174 = vadd.f32 %v6140, %v6173
        %6175 = vdwg.mxu0
        %v6176 = vmax.f32 %v6171, 0.0
        %v6177 = vmax.f32 %v6174, 0.0
        %v6178 = vld [vmem:[#allocation20] sm:$0x1]
        %v6180 = vperm.slane %v6178, 0
        %v6182 = vmul.f32 %v6176, %v6180
        %v6183 = vmul.f32 %v6177, %v6180
        %v6184 = vsel %vm5920, %v6182, 0.0
        %6185 = vadd.xlane.f32.xlu0 %v6184
        %v6186 = vpop.xlane.xlu0 %6185
        %v6187 = vsel %vm5920, %v6183, 0.0
        %6188 = vadd.xlane.f32.xlu0 %v6187
        %v6189 = vpop.xlane.xlu0 %6188
        %v6190 = vld [vmem:[#allocation2] sm:$0x1]
        %v6192 = vperm.slane %v6190, 0
        %v6194 = vadd.f32 %v6186, %v6192
        %v6195 = vadd.f32 %v6189, %v6192
        %v6196 = vsub.f32 0.0, %v6194
        %v6197 = vsub.f32 0.0, %v6195
        %v6198 = vmul.f32 %v6196, 1.442695
        %v6199 = vpow.pop %v6198
        %v6200 = vmul.f32 %v6197, 1.442695
        %v6201 = vpow.pop %v6200
        %v6202 = vadd.f32 %v6199, 1.0
        %v6203 = vadd.f32 %v6201, 1.0
        %v6204 = vrcp.pop %v6202
        %v6205 = vmul.f32 %v6202, %v6204
        %v6206 = vsub.f32 1.0, %v6205
        %v6207 = vmul.f32 %v6204, %v6206
        %v6208 = vadd.f32 %v6204, %v6207
        %vm6209 = vweird.f32 %v6202
        %vm6210 = vweird.f32 %v6204
        %vm6211 = vmor %vm6209, %vm6210
        %v6212 = vsel %vm6211, %v6204, %v6208
        %v6213 = vand.u32 2147483647, %v6202
        %vm6214 = vcmp.eq.f32.partialorder %v6213, 8.507059e+37
        %v6215 = vand.u32 %v6202, 2147483648
        %v6216 = vor.u32 1.1754944e-38, %v6215
        %v6217 = vsel %vm6214, %v6216, %v6212
        %v6218 = vmul.f32 1.0, %v6217
        %v6219 = vrcp.pop %v6203
        %v6220 = vmul.f32 %v6203, %v6219
        %v6221 = vsub.f32 1.0, %v6220
        %v6222 = vmul.f32 %v6219, %v6221
        %v6223 = vadd.f32 %v6219, %v6222
        %vm6224 = vweird.f32 %v6203
        %vm6225 = vweird.f32 %v6219
        %vm6226 = vmor %vm6224, %vm6225
        %v6227 = vsel %vm6226, %v6219, %v6223
        %v6228 = vand.u32 2147483647, %v6203
        %vm6229 = vcmp.eq.f32.partialorder %v6228, 8.507059e+37
        %v6230 = vand.u32 %v6203, 2147483648
        %v6231 = vor.u32 1.1754944e-38, %v6230
        %v6232 = vsel %vm6229, %v6231, %v6227
        %v6233 = vmul.f32 1.0, %v6232
        %v6234 = vsub.f32 0.0, %v6218
        %v6235 = vsub.f32 0.0, %v6233
        %v6236 = vmul.f32 %v6234, 1.442695
        %v6237 = vpow.pop %v6236
        %v6238 = vmul.f32 %v6235, 1.442695
        %v6239 = vpow.pop %v6238
        %v6240 = vadd.f32 %v6237, 1.0
        %v6241 = vadd.f32 %v6239, 1.0
        %v6242 = vrcp.pop %v6240
        %v6243 = vmul.f32 %v6240, %v6242
        %v6244 = vsub.f32 1.0, %v6243
        %v6245 = vmul.f32 %v6242, %v6244
        %v6246 = vadd.f32 %v6242, %v6245
        %vm6247 = vweird.f32 %v6240
        %vm6248 = vweird.f32 %v6242
        %vm6249 = vmor %vm6247, %vm6248
        %v6250 = vsel %vm6249, %v6242, %v6246
        %v6251 = vand.u32 2147483647, %v6240
        %vm6252 = vcmp.eq.f32.partialorder %v6251, 8.507059e+37
        %v6253 = vand.u32 %v6240, 2147483648
        %v6254 = vor.u32 1.1754944e-38, %v6253
        %v6255 = vsel %vm6252, %v6254, %v6250
        %v6256 = vmul.f32 1.0, %v6255
        %v6257 = vrcp.pop %v6241
        %v6258 = vmul.f32 %v6241, %v6257
        %v6259 = vsub.f32 1.0, %v6258
        %v6260 = vmul.f32 %v6257, %v6259
        %v6261 = vadd.f32 %v6257, %v6260
        %vm6262 = vweird.f32 %v6241
        %vm6263 = vweird.f32 %v6257
        %vm6264 = vmor %vm6262, %vm6263
        %v6265 = vsel %vm6264, %v6257, %v6261
        %v6266 = vand.u32 2147483647, %v6241
        %vm6267 = vcmp.eq.f32.partialorder %v6266, 8.507059e+37
        %v6268 = vand.u32 %v6241, 2147483648
        %v6269 = vor.u32 1.1754944e-38, %v6268
        %v6270 = vsel %vm6267, %v6269, %v6265
        %v6271 = vmul.f32 1.0, %v6270
        %vm6272 = vcmask 7168
        %6273 = vst.msk [vmem:[%s738] sm:$0xff] %vm6272, %v6256
        %6274 = vst.msk [vmem:[%s738 + $0x8] sm:$0xff] %vm6272, %v6271
        %s6275 = smul.u32 2, %s39
        %p6276 = scmp.lt.s32.totalorder %s6275, 3
        %s6277 = scalar_select %p6276, %s6275, 3
        %s6278 = smul.addr %s6277, 8
        %s6279 = scalar_lea.vmem %s17, %s6278
        // Predicated region
        $region137: #{tpu_custom_call.1} parent=87 // pred_check
          %p6280 = pneg %p419
        $region138: #{tpu_custom_call.1} parent=87 // pred_check_branch
          %6282 = sbr.rel (%p6280) target = $region140
        $region139: #{tpu_custom_call.1} parent=87 // pred_region
          %s6283 = smul.u32 2, %s39
        $region140: #{tpu_custom_call.1} parent=87 // pred_fallthru
          _
      $region88: #{tpu_custom_call.1} parent=5 // pred_fallthru
        _
      %p6284 = scmp.le.s32.totalorder 2, %s34
      // Predicated region
      $region141: #{tpu_custom_call.1} parent=5 // pred_check
        %p6285 = pneg %p6284
      $region142: #{tpu_custom_call.1} parent=5 // pred_check_branch
        %6287 = sbr.rel (%p6285) target = $region144
      $region143: #{tpu_custom_call.1} parent=5 // pred_region
        %s6288 = ssub.s32 %s34, 2
        // Predicated region
        $region145: #{tpu_custom_call.1} parent=143 // pred_check
          %p6289 = pneg %p425
        $region146: #{tpu_custom_call.1} parent=143 // pred_check_branch
          %6291 = sbr.rel (%p6289) target = $region148
        $region147: #{tpu_custom_call.1} parent=143 // pred_region
          %s6292 = smul.u32 2, %s40
          %p6293 = scmp.lt.s32.totalorder %s6292, 3
          %s6294 = scalar_select %p6293, %s6292, 3
          %s6295 = smul.addr %s6294, 8
          %s6296 = scalar_lea.vmem %s17, %s6295
        $region148: #{tpu_custom_call.1} parent=143 // pred_fallthru
          _
      $region144: #{tpu_custom_call.1} parent=5 // pred_fallthru
        _
    $region6: #{tpu_custom_call.1} parent=1 // loop_footer
      %s38 = sadd.s32 1, %s34
    $region7: #{tpu_custom_call.1} parent=1 // loop_footer_branch
      %33 = sbr.rel target = $region3
    $region8: #{tpu_custom_call.1} parent=1 // loop_exit
      _
    %6297 = vsyncpa [#allocation4], 1
    %s6298 = scalar_lea.sflag [#allocation4], 1
    %6299 = vsyncpa %s6298, 1
    %6300 = vsyncpa [#allocation6], 1
    %6301 = vsyncpa [#allocation9], 1
    %6302 = vsyncpa [#allocation12], 1
    %6303 = vsyncpa [#allocation15], 1
    %6304 = vsyncpa [#allocation18], 1
    %6305 = vsyncpa [#allocation21], 1

</llo_original>
